<compile_context>
chip_gen: v7x
topology: tpu7x:2x2x1
jax: 0.10.0
libtpu: 0.0.40
codegen_flags: <defaults>
</compile_context>

<pallas_src>
import functools
import math

import jax
import jax.numpy as jnp
from jax.experimental import pallas as pl
from jax.experimental.pallas import tpu as pltpu

SEQ_VOC = "ABCDEFGHIKLMNOPQRSTUVWXYZ"   # 26 residue types
VOCAB = len(SEQ_VOC)
VOCAB_PAD = 128                          # pad contraction dim to one lane vreg


def _round_up(x, m):
    return (x + m - 1) // m * m


def _protein_embedding_kernel(idx_ref, emb_ref, pe_ref, out_ref, *, precision):
    """One grid step over tile_l sequence positions (all B batch columns).

    idx_ref : (tile_l, B)      int32   residue ids (contiguous HBM slab)
    emb_ref : (VOCAB_PAD, D)   f32     zero-padded table, VMEM resident
    pe_ref  : (tile_l, D)      f32     positional-encoding rows for this tile
    out_ref : (tile_l, B * D)  f32/bf16 lane-dense output slab
    """
    tile_l, b = idx_ref.shape
    vpad, d = emb_ref.shape

    idx = idx_ref[...]                                            # (tile_l, B)
    emb_tbl = emb_ref[...]                                        # (VPAD, D)
    pe = pe_ref[...]                                              # (tile_l, D)
    lane_iota = jax.lax.broadcasted_iota(jnp.int32, (tile_l, vpad), 1)

    # One MXU lookup per batch column; each result lands in a 128-lane-aligned
    # D-wide slice of the output slab (unmasked stores). Padded table rows are
    # zero, so out-of-vocab ids yield zero rows (nn.Embedding would error).
    for bb in range(b):                                           # static unroll
        onehot = (idx[:, bb:bb + 1] == lane_iota).astype(jnp.float32)
        chunk = jnp.dot(onehot, emb_tbl,
                        preferred_element_type=jnp.float32,
                        precision=precision)                      # (tile_l, D)
        # Dropout (eval mode) == identity.
        out_ref[:, bb * d:(bb + 1) * d] = (chunk + pe).astype(out_ref.dtype)


def _chip_budget():
    """Per-generation (target_out_tile_bytes, vmem_limit_bytes, multi_core)."""
    try:
        vmem_cap = int(pltpu.get_tpu_info().vmem_capacity_bytes)
    except Exception:
        vmem_cap = None
    if vmem_cap is not None and vmem_cap <= (64 << 20):
        # v7x-class: 64 MiB physical VMEM, 2 TensorCores, ~3x faster HBM per
        # step -> smaller tiles, several pipelined grid steps per core.
        return (3 << 20), (40 << 20), True
    if vmem_cap is None:
        # Unknown part: conservative settings that fit every generation.
        return (4 << 20), (48 << 20), False
    # v5e / v6e class: 128 MiB physical VMEM, single TensorCore. Big tiles to
    # amortize per-step overhead; raise scoped VMEM above the 16/32 MiB
    # defaults explicitly.
    return (8 << 20), (96 << 20), False


def protein_embedding(idx, emb_table, pe_full, *,
                      out_dtype=jnp.float32,
                      mxu_precision=jax.lax.Precision.HIGHEST):
    """idx: (L, B) int32; emb_table: (V, D) f32; pe_full: (max_len, D) f32.

    Returns (L, B, D) = emb_table[idx] + pe_full[:L, None, :]  (eval-mode
    dropout = identity). out_dtype=bf16 is an opt-in bandwidth lever.
    """
    L, B = idx.shape
    V, D = emb_table.shape
    assert V <= VOCAB_PAD

    # Zero-pad the vocab (contraction) dim to 128: one-hot fills one lane vreg
    # and the lookup maps to full MXU passes. Extra cost: (128-V)*D*4 bytes.
    emb_pad = jnp.zeros((VOCAB_PAD, D), emb_table.dtype).at[:V].set(emb_table)

    idx = idx.astype(jnp.int32)
    pe = pe_full[:L]                                              # (L, D)

    target_bytes, vmem_limit, multi_core = _chip_budget()

    # ---- tile selection -----------------------------------------------------
    # Output tile per step is (tile_l, B*D); aim at ~target_bytes of output,
    # keep tile_l a multiple of 8 (sublane-aligned) unless it covers all of L.
    bytes_per_l = B * D * jnp.dtype(out_dtype).itemsize
    tile_l = max(8, (max(1, target_bytes // bytes_per_l) // 8) * 8)
    if multi_core:
        # v7x: give the two TensorCores several pipelined steps each when the
        # sequence is long enough (a single step cannot overlap DMA/compute).
        tile_l = min(tile_l, max(8, _round_up(pl.cdiv(L, 8), 8)))
    if tile_l >= L:
        tile_l = L

    grid = (pl.cdiv(L, tile_l),)

    out_flat = pl.pallas_call(
        functools.partial(_protein_embedding_kernel, precision=mxu_precision),
        out_shape=jax.ShapeDtypeStruct((L, B * D), out_dtype),
        grid=grid,
        in_specs=[
            pl.BlockSpec((tile_l, B), lambda i: (i, 0)),          # residue ids
            pl.BlockSpec(memory_space=pltpu.MemorySpace.VMEM),    # resident table
            pl.BlockSpec((tile_l, D), lambda i: (i, 0)),          # pe rows
        ],
        out_specs=pl.BlockSpec((tile_l, B * D), lambda i: (i, 0)),  # lane-dense
        compiler_params=pltpu.CompilerParams(
            dimension_semantics=("parallel",),
            vmem_limit_bytes=vmem_limit),
    )(idx, emb_pad, pe)

    return out_flat.reshape(L, B, D)


def make_positional_encoding(max_len, d_model):
    """Exact port of the PyTorch buffer construction (d_model assumed even)."""
    position = jnp.arange(0, max_len, dtype=jnp.float32)[:, None]        # (max_len, 1)
    div_term = jnp.exp(
        jnp.arange(0, d_model, 2, dtype=jnp.float32) * (-math.log(10000.0) / d_model)
    )                                                                     # (d_model/2,)
    pe = jnp.zeros((max_len, d_model), dtype=jnp.float32)
    pe = pe.at[:, 0::2].set(jnp.sin(position * div_term))
    pe = pe.at[:, 1::2].set(jnp.cos(position * div_term))
    return pe                                                             # (max_len, D)


if __name__ == "__main__":
    # Small shapes consistent with the module: seq-first (L, B), d_model = 128.
    L, B, D, MAX_LEN = 16, 8, 128, 64

    key = jax.random.PRNGKey(0)
    k_emb, k_idx = jax.random.split(key)

    # nn.Embedding default init: N(0, 1).
    emb_table = jax.random.normal(k_emb, (VOCAB, D), dtype=jnp.float32)
    pe_full = make_positional_encoding(MAX_LEN, D)

    # Categorical protein sequence, seq-first (L, B).
    idx = jax.random.randint(k_idx, (L, B), 0, VOCAB, dtype=jnp.int32)

    out = protein_embedding(idx, emb_table, pe_full)
    out = jax.block_until_ready(out)

    # Pure-JAX reference of the PyTorch forward (eval mode dropout = identity).
    ref = jnp.take(emb_table, idx, axis=0) + pe_full[:L][:, None, :]
    assert out.shape == (L, B, D)
    assert jnp.allclose(out, ref, atol=1e-5, rtol=1e-5)

    print("KERNEL_OK")
</pallas_src>

<mosaic_0001>
module attributes {stable_mosaic.version = 11 : i64} {
  func.func @_protein_embedding_kernel(%arg0: i32, %arg1: memref<16x8xi32, #tpu.memory_space<vmem>>, %arg2: memref<128x128xf32, #tpu.memory_space<vmem>>, %arg3: memref<16x128xf32, #tpu.memory_space<vmem>>, %arg4: memref<16x1024xf32, #tpu.memory_space<vmem>>) attributes {dimension_semantics = [#tpu.dimension_semantics<parallel>], iteration_bounds = array<i64: 1>, scalar_prefetch = 0 : i64, scratch_operands = 0 : i64, tpu.core_type = #tpu.core_type<tc>, window_params = [{transform_indices = @transform_0, window_bounds = array<i64: 16, 8>}, {pipeline_mode = #tpu.pipeline_mode<synchronous>, transform_indices = @transform_1, window_bounds = array<i64: 128, 128>}, {transform_indices = @transform_2, window_bounds = array<i64: 16, 128>}, {transform_indices = @transform_3, window_bounds = array<i64: 16, 1024>}]} {
    %c0 = arith.constant 0 : index
    %c0_0 = arith.constant 0 : index
    %0 = vector.load %arg1[%c0, %c0_0] : memref<16x8xi32, #tpu.memory_space<vmem>>, vector<16x8xi32>
    %c0_1 = arith.constant 0 : index
    %c0_2 = arith.constant 0 : index
    %1 = vector.load %arg2[%c0_1, %c0_2] : memref<128x128xf32, #tpu.memory_space<vmem>>, vector<128x128xf32>
    %c0_3 = arith.constant 0 : index
    %c0_4 = arith.constant 0 : index
    %2 = vector.load %arg3[%c0_3, %c0_4] : memref<16x128xf32, #tpu.memory_space<vmem>>, vector<16x128xf32>
    %3 = tpu.iota {dimensions = array<i32: 1>} : vector<16x128xi32>
    %4 = vector.extract_strided_slice %0 {offsets = [0, 0], sizes = [16, 1], strides = [1, 1]} : vector<16x8xi32> to vector<16x1xi32>
    %5 = vector.broadcast %4 : vector<16x1xi32> to vector<16x128xi32>
    %6 = arith.cmpi eq, %5, %3 : vector<16x128xi32>
    %7 = arith.extui %6 : vector<16x128xi1> to vector<16x128xi32>
    %8 = arith.sitofp %7 : vector<16x128xi32> to vector<16x128xf32>
    %cst = arith.constant dense<0.000000e+00> : vector<16x128xf32>
    %9 = tpu.matmul %8, %1, %cst {dimension_numbers = #tpu.dot_dimension_numbers<[1], [0], [0], [1], [0, 0, 1, 1], [], []>, precision = #tpu.contract_precision<fp32>} : vector<16x128xf32>, vector<128x128xf32>, vector<16x128xf32> -> vector<16x128xf32>
    %10 = arith.addf %9, %2 : vector<16x128xf32>
    %c0_5 = arith.constant 0 : index
    %c0_6 = arith.constant 0 : index
    %11 = vector.load %arg4[%c0_5, %c0_6] : memref<16x1024xf32, #tpu.memory_space<vmem>>, vector<16x128xf32>
    tpu.vector_store %arg4[%c0_5, %c0_6], %10 {strides = array<i32>} : memref<16x1024xf32, #tpu.memory_space<vmem>>, vector<16x128xf32>,
    %12 = vector.extract_strided_slice %0 {offsets = [0, 1], sizes = [16, 1], strides = [1, 1]} : vector<16x8xi32> to vector<16x1xi32>
    %13 = vector.broadcast %12 : vector<16x1xi32> to vector<16x128xi32>
    %14 = arith.cmpi eq, %13, %3 : vector<16x128xi32>
    %15 = arith.extui %14 : vector<16x128xi1> to vector<16x128xi32>
    %16 = arith.sitofp %15 : vector<16x128xi32> to vector<16x128xf32>
    %cst_7 = arith.constant dense<0.000000e+00> : vector<16x128xf32>
    %17 = tpu.matmul %16, %1, %cst_7 {dimension_numbers = #tpu.dot_dimension_numbers<[1], [0], [0], [1], [0, 0, 1, 1], [], []>, precision = #tpu.contract_precision<fp32>} : vector<16x128xf32>, vector<128x128xf32>, vector<16x128xf32> -> vector<16x128xf32>
    %18 = arith.addf %17, %2 : vector<16x128xf32>
    %c0_8 = arith.constant 0 : index
    %c128 = arith.constant 128 : index
    %19 = vector.load %arg4[%c0_8, %c128] : memref<16x1024xf32, #tpu.memory_space<vmem>>, vector<16x128xf32>
    tpu.vector_store %arg4[%c0_8, %c128], %18 {strides = array<i32>} : memref<16x1024xf32, #tpu.memory_space<vmem>>, vector<16x128xf32>,
    %20 = vector.extract_strided_slice %0 {offsets = [0, 2], sizes = [16, 1], strides = [1, 1]} : vector<16x8xi32> to vector<16x1xi32>
    %21 = vector.broadcast %20 : vector<16x1xi32> to vector<16x128xi32>
    %22 = arith.cmpi eq, %21, %3 : vector<16x128xi32>
    %23 = arith.extui %22 : vector<16x128xi1> to vector<16x128xi32>
    %24 = arith.sitofp %23 : vector<16x128xi32> to vector<16x128xf32>
    %cst_9 = arith.constant dense<0.000000e+00> : vector<16x128xf32>
    %25 = tpu.matmul %24, %1, %cst_9 {dimension_numbers = #tpu.dot_dimension_numbers<[1], [0], [0], [1], [0, 0, 1, 1], [], []>, precision = #tpu.contract_precision<fp32>} : vector<16x128xf32>, vector<128x128xf32>, vector<16x128xf32> -> vector<16x128xf32>
    %26 = arith.addf %25, %2 : vector<16x128xf32>
    %c0_10 = arith.constant 0 : index
    %c256 = arith.constant 256 : index
    %27 = vector.load %arg4[%c0_10, %c256] : memref<16x1024xf32, #tpu.memory_space<vmem>>, vector<16x128xf32>
    tpu.vector_store %arg4[%c0_10, %c256], %26 {strides = array<i32>} : memref<16x1024xf32, #tpu.memory_space<vmem>>, vector<16x128xf32>,
    %28 = vector.extract_strided_slice %0 {offsets = [0, 3], sizes = [16, 1], strides = [1, 1]} : vector<16x8xi32> to vector<16x1xi32>
    %29 = vector.broadcast %28 : vector<16x1xi32> to vector<16x128xi32>
    %30 = arith.cmpi eq, %29, %3 : vector<16x128xi32>
    %31 = arith.extui %30 : vector<16x128xi1> to vector<16x128xi32>
    %32 = arith.sitofp %31 : vector<16x128xi32> to vector<16x128xf32>
    %cst_11 = arith.constant dense<0.000000e+00> : vector<16x128xf32>
    %33 = tpu.matmul %32, %1, %cst_11 {dimension_numbers = #tpu.dot_dimension_numbers<[1], [0], [0], [1], [0, 0, 1, 1], [], []>, precision = #tpu.contract_precision<fp32>} : vector<16x128xf32>, vector<128x128xf32>, vector<16x128xf32> -> vector<16x128xf32>
    %34 = arith.addf %33, %2 : vector<16x128xf32>
    %c0_12 = arith.constant 0 : index
    %c384 = arith.constant 384 : index
    %35 = vector.load %arg4[%c0_12, %c384] : memref<16x1024xf32, #tpu.memory_space<vmem>>, vector<16x128xf32>
    tpu.vector_store %arg4[%c0_12, %c384], %34 {strides = array<i32>} : memref<16x1024xf32, #tpu.memory_space<vmem>>, vector<16x128xf32>,
    %36 = vector.extract_strided_slice %0 {offsets = [0, 4], sizes = [16, 1], strides = [1, 1]} : vector<16x8xi32> to vector<16x1xi32>
    %37 = vector.broadcast %36 : vector<16x1xi32> to vector<16x128xi32>
    %38 = arith.cmpi eq, %37, %3 : vector<16x128xi32>
    %39 = arith.extui %38 : vector<16x128xi1> to vector<16x128xi32>
    %40 = arith.sitofp %39 : vector<16x128xi32> to vector<16x128xf32>
    %cst_13 = arith.constant dense<0.000000e+00> : vector<16x128xf32>
    %41 = tpu.matmul %40, %1, %cst_13 {dimension_numbers = #tpu.dot_dimension_numbers<[1], [0], [0], [1], [0, 0, 1, 1], [], []>, precision = #tpu.contract_precision<fp32>} : vector<16x128xf32>, vector<128x128xf32>, vector<16x128xf32> -> vector<16x128xf32>
    %42 = arith.addf %41, %2 : vector<16x128xf32>
    %c0_14 = arith.constant 0 : index
    %c512 = arith.constant 512 : index
    %43 = vector.load %arg4[%c0_14, %c512] : memref<16x1024xf32, #tpu.memory_space<vmem>>, vector<16x128xf32>
    tpu.vector_store %arg4[%c0_14, %c512], %42 {strides = array<i32>} : memref<16x1024xf32, #tpu.memory_space<vmem>>, vector<16x128xf32>,
    %44 = vector.extract_strided_slice %0 {offsets = [0, 5], sizes = [16, 1], strides = [1, 1]} : vector<16x8xi32> to vector<16x1xi32>
    %45 = vector.broadcast %44 : vector<16x1xi32> to vector<16x128xi32>
    %46 = arith.cmpi eq, %45, %3 : vector<16x128xi32>
    %47 = arith.extui %46 : vector<16x128xi1> to vector<16x128xi32>
    %48 = arith.sitofp %47 : vector<16x128xi32> to vector<16x128xf32>
    %cst_15 = arith.constant dense<0.000000e+00> : vector<16x128xf32>
    %49 = tpu.matmul %48, %1, %cst_15 {dimension_numbers = #tpu.dot_dimension_numbers<[1], [0], [0], [1], [0, 0, 1, 1], [], []>, precision = #tpu.contract_precision<fp32>} : vector<16x128xf32>, vector<128x128xf32>, vector<16x128xf32> -> vector<16x128xf32>
    %50 = arith.addf %49, %2 : vector<16x128xf32>
    %c0_16 = arith.constant 0 : index
    %c640 = arith.constant 640 : index
    %51 = vector.load %arg4[%c0_16, %c640] : memref<16x1024xf32, #tpu.memory_space<vmem>>, vector<16x128xf32>
    tpu.vector_store %arg4[%c0_16, %c640], %50 {strides = array<i32>} : memref<16x1024xf32, #tpu.memory_space<vmem>>, vector<16x128xf32>,
    %52 = vector.extract_strided_slice %0 {offsets = [0, 6], sizes = [16, 1], strides = [1, 1]} : vector<16x8xi32> to vector<16x1xi32>
    %53 = vector.broadcast %52 : vector<16x1xi32> to vector<16x128xi32>
    %54 = arith.cmpi eq, %53, %3 : vector<16x128xi32>
    %55 = arith.extui %54 : vector<16x128xi1> to vector<16x128xi32>
    %56 = arith.sitofp %55 : vector<16x128xi32> to vector<16x128xf32>
    %cst_17 = arith.constant dense<0.000000e+00> : vector<16x128xf32>
    %57 = tpu.matmul %56, %1, %cst_17 {dimension_numbers = #tpu.dot_dimension_numbers<[1], [0], [0], [1], [0, 0, 1, 1], [], []>, precision = #tpu.contract_precision<fp32>} : vector<16x128xf32>, vector<128x128xf32>, vector<16x128xf32> -> vector<16x128xf32>
    %58 = arith.addf %57, %2 : vector<16x128xf32>
    %c0_18 = arith.constant 0 : index
    %c768 = arith.constant 768 : index
    %59 = vector.load %arg4[%c0_18, %c768] : memref<16x1024xf32, #tpu.memory_space<vmem>>, vector<16x128xf32>
    tpu.vector_store %arg4[%c0_18, %c768], %58 {strides = array<i32>} : memref<16x1024xf32, #tpu.memory_space<vmem>>, vector<16x128xf32>,
    %60 = vector.extract_strided_slice %0 {offsets = [0, 7], sizes = [16, 1], strides = [1, 1]} : vector<16x8xi32> to vector<16x1xi32>
    %61 = vector.broadcast %60 : vector<16x1xi32> to vector<16x128xi32>
    %62 = arith.cmpi eq, %61, %3 : vector<16x128xi32>
    %63 = arith.extui %62 : vector<16x128xi1> to vector<16x128xi32>
    %64 = arith.sitofp %63 : vector<16x128xi32> to vector<16x128xf32>
    %cst_19 = arith.constant dense<0.000000e+00> : vector<16x128xf32>
    %65 = tpu.matmul %64, %1, %cst_19 {dimension_numbers = #tpu.dot_dimension_numbers<[1], [0], [0], [1], [0, 0, 1, 1], [], []>, precision = #tpu.contract_precision<fp32>} : vector<16x128xf32>, vector<128x128xf32>, vector<16x128xf32> -> vector<16x128xf32>
    %66 = arith.addf %65, %2 : vector<16x128xf32>
    %c0_20 = arith.constant 0 : index
    %c896 = arith.constant 896 : index
    %67 = vector.load %arg4[%c0_20, %c896] : memref<16x1024xf32, #tpu.memory_space<vmem>>, vector<16x128xf32>
    tpu.vector_store %arg4[%c0_20, %c896], %66 {strides = array<i32>} : memref<16x1024xf32, #tpu.memory_space<vmem>>, vector<16x128xf32>,
    return
  }
  func.func @transform_0(%arg0: i32) -> (i32, i32) {
    %c0_i32 = arith.constant 0 : i32
    %c0_i32_0 = arith.constant 0 : i32
    return %arg0, %c0_i32 : i32, i32
  }
  func.func @transform_1(%arg0: i32) -> (i32, i32) {
    %c0_i32 = arith.constant 0 : i32
    %c0_i32_0 = arith.constant 0 : i32
    %c0_i32_1 = arith.constant 0 : i32
    return %c0_i32, %c0_i32_0 : i32, i32
  }
  func.func @transform_2(%arg0: i32) -> (i32, i32) {
    %c0_i32 = arith.constant 0 : i32
    %c0_i32_0 = arith.constant 0 : i32
    return %arg0, %c0_i32 : i32, i32
  }
  func.func @transform_3(%arg0: i32) -> (i32, i32) {
    %c0_i32 = arith.constant 0 : i32
    %c0_i32_0 = arith.constant 0 : i32
    return %arg0, %c0_i32 : i32, i32
  }
}

</mosaic_0001>

<llo_original>
// kernel: tpu_custom_call.1
$region0: #{tpu_custom_call.1}
  #allocation0 [shape = 'u32[]', space=smem, size = 0x4, offset = 0x4, fixed_abs, tag = 'smem constant byte address 0x4 - core index']
  #allocation1 [shape = 'u32[144,128]{1,0:T(1,128)}', space=vmem, size = 0x12000, scoped, tag = 'internal scratch']
  %s0 = inlined_call_operand.vmem [shape: s32[16,8], index: 0, kind: input, shape index: {}]
  %s1 = inlined_call_operand.hbm [shape: f32[128,128], index: 1, kind: input, shape index: {}]
  %s2 = inlined_call_operand.vmem [shape: f32[16,128], index: 2, kind: input, shape index: {}]
  %s3 = inlined_call_operand.hbm [shape: f32[16,1024], index: 3, kind: output, shape index: {}]
  %s4 = sld [smem:[#allocation0]]
  $region26: #{tpu_custom_call.1} parent=0
    _
  %s6 = ssub.s32 1, %s4
  %s7 = scalar_select 0, %s6, %s4
  $region1: #{tpu_custom_call.1} parent=0
    #allocation2 [shape = 'u8[65536]{0}', space=vmem, size = 0x10000, scoped, tag = 'input window, operand 1, single buffered']
    #allocation3 [shape = 's32[1]{0}', space=sflag, size = 0x4, scoped, tag = 'scoped memory for tpu_custom_call.1']
    #allocation4 [shape = 's32[1]{0}', space=sflag, size = 0x4, scoped, tag = 'scoped memory for tpu_custom_call.1']
    #allocation5 [shape = 'u8[65536]{0}', space=vmem, size = 0x10000, scoped, tag = 'output window, operand 0, single buffered']
    %8 = vsyncpa [#allocation3], 0
    %9 = vsyncpa [#allocation4], 0
    // Predicated region
    $region2: #{tpu_custom_call.1} parent=1 // pred_check
      _
    $region3: #{tpu_custom_call.1} parent=1 // pred_check_branch
      %11 = sbr.rel (0) target = $region5
    $region4: #{tpu_custom_call.1} parent=1 // pred_region
      _
    $region5: #{tpu_custom_call.1} parent=1 // pred_fallthru
      _
    // Predicated region
    $region6: #{tpu_custom_call.1} parent=1 // pred_check
      _
    $region7: #{tpu_custom_call.1} parent=1 // pred_check_branch
      %13 = sbr.rel (0) target = $region9
    $region8: #{tpu_custom_call.1} parent=1 // pred_region
      %s15 = ssub.s32 2048, 2048
      %16 = vsyncadd [#allocation3], %s15
      %s17 = sshll.u32 [#allocation2], 4
      %s18 = int_to_ptr.vmem [resolvable:$true] %s17
      %23 = dma.hbm_to_vmem [thread:$0]  %s1, 2048, %s18, [#allocation3], 128, 128, 8
    $region9: #{tpu_custom_call.1} parent=1 // pred_fallthru
      _
    // Predicated region
    $region10: #{tpu_custom_call.1} parent=1 // pred_check
      _
    $region11: #{tpu_custom_call.1} parent=1 // pred_check_branch
      %25 = sbr.rel (0) target = $region13
    $region12: #{tpu_custom_call.1} parent=1 // pred_region
      _
    $region13: #{tpu_custom_call.1} parent=1 // pred_fallthru
      _
    // Predicated region
    $region14: #{tpu_custom_call.1} parent=1 // pred_check
      _
    $region15: #{tpu_custom_call.1} parent=1 // pred_check_branch
      %27 = sbr.rel (0) target = $region17
    $region16: #{tpu_custom_call.1} parent=1 // pred_region
      %28 = dma.done [#allocation3], 2048
    $region17: #{tpu_custom_call.1} parent=1 // pred_fallthru
      _
    %v29 = vld [vmem:[%s0] sm:$0xff]
    %v30 = vld [vmem:[%s0 + $0x8] sm:$0xff]
    %v31 = vld [vmem:[#allocation2] sm:$0xff]
    %v32 = vld [vmem:[#allocation2 + $0x8] sm:$0xff]
    %v33 = vld [vmem:[#allocation2 + $0x10] sm:$0xff]
    %v34 = vld [vmem:[#allocation2 + $0x18] sm:$0xff]
    %v35 = vld [vmem:[#allocation2 + $0x20] sm:$0xff]
    %v36 = vld [vmem:[#allocation2 + $0x28] sm:$0xff]
    %v37 = vld [vmem:[#allocation2 + $0x30] sm:$0xff]
    %v38 = vld [vmem:[#allocation2 + $0x38] sm:$0xff]
    %v39 = vld [vmem:[#allocation2 + $0x40] sm:$0xff]
    %v40 = vld [vmem:[#allocation2 + $0x48] sm:$0xff]
    %v41 = vld [vmem:[#allocation2 + $0x50] sm:$0xff]
    %v42 = vld [vmem:[#allocation2 + $0x58] sm:$0xff]
    %v43 = vld [vmem:[#allocation2 + $0x60] sm:$0xff]
    %v44 = vld [vmem:[#allocation2 + $0x68] sm:$0xff]
    %v45 = vld [vmem:[#allocation2 + $0x70] sm:$0xff]
    %v46 = vld [vmem:[#allocation2 + $0x78] sm:$0xff]
    %v47 = vld [vmem:[%s2] sm:$0xff]
    %v48 = vld [vmem:[%s2 + $0x8] sm:$0xff]
    %v49 = vlaneseq
    %v50 = vand.u32 %v49, 127
    %51 = vset.pattern.permute.xlu0 0
    %52 = vperm.xlu0 %51, %v29
    %v53 = vpop.permute.xlu0 %52
    %54 = vset.pattern.permute.xlu0 0
    %55 = vperm.xlu0 %54, %v30
    %v56 = vpop.permute.xlu0 %55
    %vm57 = vcmp.eq.s32.totalorder %v53, %v50
    %vm58 = vcmp.eq.s32.totalorder %v56, %v50
    %v59 = vsel %vm57, 1, 0
    %v60 = vsel %vm58, 1, 0
    %v61 = vcvt.s32.f32 %v59
    %v62 = vcvt.s32.f32 %v60
    %63 = vmatprep.subr.mxu0 0.0
    %v64 = vand.u32 %v31, 4294901760
    %65 = vmatpush1.msra.mxu0 %v64
    %66 = vmatprep.subr.mxu0 0.0
    %v67 = vand.u32 %v32, 4294901760
    %68 = vmatpush1.msra.mxu0 %v67
    %69 = vmatprep.subr.mxu0 0.0
    %v70 = vand.u32 %v33, 4294901760
    %71 = vmatpush1.msra.mxu0 %v70
    %72 = vmatprep.subr.mxu0 0.0
    %v73 = vand.u32 %v34, 4294901760
    %74 = vmatpush1.msra.mxu0 %v73
    %75 = vmatprep.subr.mxu0 0.0
    %v76 = vand.u32 %v35, 4294901760
    %77 = vmatpush1.msra.mxu0 %v76
    %78 = vmatprep.subr.mxu0 0.0
    %v79 = vand.u32 %v36, 4294901760
    %80 = vmatpush1.msra.mxu0 %v79
    %81 = vmatprep.subr.mxu0 0.0
    %v82 = vand.u32 %v37, 4294901760
    %83 = vmatpush1.msra.mxu0 %v82
    %84 = vmatprep.subr.mxu0 0.0
    %v85 = vand.u32 %v38, 4294901760
    %86 = vmatpush1.msra.mxu0 %v85
    %87 = vmatprep.subr.mxu0 0.0
    %v88 = vand.u32 %v39, 4294901760
    %89 = vmatpush1.msra.mxu0 %v88
    %90 = vmatprep.subr.mxu0 0.0
    %v91 = vand.u32 %v40, 4294901760
    %92 = vmatpush1.msra.mxu0 %v91
    %93 = vmatprep.subr.mxu0 0.0
    %v94 = vand.u32 %v41, 4294901760
    %95 = vmatpush1.msra.mxu0 %v94
    %96 = vmatprep.subr.mxu0 0.0
    %v97 = vand.u32 %v42, 4294901760
    %98 = vmatpush1.msra.mxu0 %v97
    %99 = vmatprep.subr.mxu0 0.0
    %v100 = vand.u32 %v43, 4294901760
    %101 = vmatpush1.msra.mxu0 %v100
    %102 = vmatprep.subr.mxu0 0.0
    %v103 = vand.u32 %v44, 4294901760
    %104 = vmatpush1.msra.mxu0 %v103
    %105 = vmatprep.subr.mxu0 0.0
    %v106 = vand.u32 %v45, 4294901760
    %107 = vmatpush1.msra.mxu0 %v106
    %108 = vmatprep.subr.mxu0 0.0
    %v109 = vand.u32 %v46, 4294901760
    %110 = vmatpush1.msra.mxu0 %v109
    %111 = vmatprep.subr.mxu0 0.0
    %112 = vmatpush1.msra.mxu0 0.0
    %113 = vmatprep.subr.mxu0 0.0
    %114 = vmatpush1.msra.mxu0 0.0
    %115 = vmatprep.subr.mxu0 0.0
    %116 = vmatpush1.msra.mxu0 0.0
    %117 = vmatprep.subr.mxu0 0.0
    %118 = vmatpush1.msra.mxu0 0.0
    %119 = vmatprep.subr.mxu0 0.0
    %120 = vmatpush1.msra.mxu0 0.0
    %121 = vmatprep.subr.mxu0 0.0
    %122 = vmatpush1.msra.mxu0 0.0
    %123 = vmatprep.subr.mxu0 0.0
    %124 = vmatpush1.msra.mxu0 0.0
    %125 = vmatprep.subr.mxu0 0.0
    %126 = vmatpush1.msra.mxu0 0.0
    %127 = vmatprep.subr.mxu0 0.0
    %128 = vmatpush1.msra.mxu0 0.0
    %129 = vmatprep.subr.mxu0 0.0
    %130 = vmatpush1.msra.mxu0 0.0
    %131 = vmatprep.subr.mxu0 0.0
    %132 = vmatpush1.msra.mxu0 0.0
    %133 = vmatprep.subr.mxu0 0.0
    %134 = vmatpush1.msra.mxu0 0.0
    %135 = vmatprep.subr.mxu0 0.0
    %136 = vmatpush1.msra.mxu0 0.0
    %137 = vmatprep.subr.mxu0 0.0
    %138 = vmatpush1.msra.mxu0 0.0
    %139 = vmatprep.subr.mxu0 0.0
    %140 = vmatpush1.msra.mxu0 0.0
    %141 = vmatprep.subr.mxu0 0.0
    %142 = vmatpush1.msra.mxu0 0.0
    %143 = vmatprep.mubr.f32.mxu0 0.0
    %v144 = vand.u32 %v61, 4294901760
    %v145 = vsub.f32 %v61, %v144
    %v146 = vand.u32 %v145, 4294901760
    %v147 = vsub.f32 %v145, %v146
    %v148 = vand.u32 %v147, 4294901760
    %149 = vmatmul.mubr.f32.gmra.mrb[0].mxu0 %v148
    %v150 = vpop.f32.mrb[0].mxu0
    %v151 = vadd.f32 %v47, %v150
    %v152 = vpop.f32.mrb[0].mxu0
    %153 = vmatprep.mubr.f32.mxu0 0.0
    %v154 = vand.u32 %v62, 4294901760
    %v155 = vsub.f32 %v62, %v154
    %v156 = vand.u32 %v155, 4294901760
    %v157 = vsub.f32 %v155, %v156
    %v158 = vand.u32 %v157, 4294901760
    %159 = vmatmul.mubr.f32.gmra.mrb[0].mxu0 %v158
    %v160 = vpop.f32.mrb[0].mxu0
    %v161 = vadd.f32 %v48, %v160
    %v162 = vpop.f32.mrb[0].mxu0
    %163 = vdwg.mxu0
    %164 = vmatprep.subr.mxu0 0.0
    %v165 = vand.u32 %v31, 4294901760
    %v166 = vsub.f32 %v31, %v165
    %v167 = vand.u32 %v166, 4294901760
    %v168 = vsub.f32 %v166, %v167
    %v169 = vand.u32 %v168, 4294901760
    %170 = vmatpush1.msra.mxu0 %v169
    %171 = vmatprep.subr.mxu0 0.0
    %v172 = vand.u32 %v32, 4294901760
    %v173 = vsub.f32 %v32, %v172
    %v174 = vand.u32 %v173, 4294901760
    %v175 = vsub.f32 %v173, %v174
    %v176 = vand.u32 %v175, 4294901760
    %177 = vmatpush1.msra.mxu0 %v176
    %178 = vmatprep.subr.mxu0 0.0
    %v179 = vand.u32 %v33, 4294901760
    %v180 = vsub.f32 %v33, %v179
    %v181 = vand.u32 %v180, 4294901760
    %v182 = vsub.f32 %v180, %v181
    %v183 = vand.u32 %v182, 4294901760
    %184 = vmatpush1.msra.mxu0 %v183
    %185 = vmatprep.subr.mxu0 0.0
    %v186 = vand.u32 %v34, 4294901760
    %v187 = vsub.f32 %v34, %v186
    %v188 = vand.u32 %v187, 4294901760
    %v189 = vsub.f32 %v187, %v188
    %v190 = vand.u32 %v189, 4294901760
    %191 = vmatpush1.msra.mxu0 %v190
    %192 = vmatprep.subr.mxu0 0.0
    %v193 = vand.u32 %v35, 4294901760
    %v194 = vsub.f32 %v35, %v193
    %v195 = vand.u32 %v194, 4294901760
    %v196 = vsub.f32 %v194, %v195
    %v197 = vand.u32 %v196, 4294901760
    %198 = vmatpush1.msra.mxu0 %v197
    %199 = vmatprep.subr.mxu0 0.0
    %v200 = vand.u32 %v36, 4294901760
    %v201 = vsub.f32 %v36, %v200
    %v202 = vand.u32 %v201, 4294901760
    %v203 = vsub.f32 %v201, %v202
    %v204 = vand.u32 %v203, 4294901760
    %205 = vmatpush1.msra.mxu0 %v204
    %206 = vmatprep.subr.mxu0 0.0
    %v207 = vand.u32 %v37, 4294901760
    %v208 = vsub.f32 %v37, %v207
    %v209 = vand.u32 %v208, 4294901760
    %v210 = vsub.f32 %v208, %v209
    %v211 = vand.u32 %v210, 4294901760
    %212 = vmatpush1.msra.mxu0 %v211
    %213 = vmatprep.subr.mxu0 0.0
    %v214 = vand.u32 %v38, 4294901760
    %v215 = vsub.f32 %v38, %v214
    %v216 = vand.u32 %v215, 4294901760
    %v217 = vsub.f32 %v215, %v216
    %v218 = vand.u32 %v217, 4294901760
    %219 = vmatpush1.msra.mxu0 %v218
    %220 = vmatprep.subr.mxu0 0.0
    %v221 = vand.u32 %v39, 4294901760
    %v222 = vsub.f32 %v39, %v221
    %v223 = vand.u32 %v222, 4294901760
    %v224 = vsub.f32 %v222, %v223
    %v225 = vand.u32 %v224, 4294901760
    %226 = vmatpush1.msra.mxu0 %v225
    %227 = vmatprep.subr.mxu0 0.0
    %v228 = vand.u32 %v40, 4294901760
    %v229 = vsub.f32 %v40, %v228
    %v230 = vand.u32 %v229, 4294901760
    %v231 = vsub.f32 %v229, %v230
    %v232 = vand.u32 %v231, 4294901760
    %233 = vmatpush1.msra.mxu0 %v232
    %234 = vmatprep.subr.mxu0 0.0
    %v235 = vand.u32 %v41, 4294901760
    %v236 = vsub.f32 %v41, %v235
    %v237 = vand.u32 %v236, 4294901760
    %v238 = vsub.f32 %v236, %v237
    %v239 = vand.u32 %v238, 4294901760
    %240 = vmatpush1.msra.mxu0 %v239
    %241 = vmatprep.subr.mxu0 0.0
    %v242 = vand.u32 %v42, 4294901760
    %v243 = vsub.f32 %v42, %v242
    %v244 = vand.u32 %v243, 4294901760
    %v245 = vsub.f32 %v243, %v244
    %v246 = vand.u32 %v245, 4294901760
    %247 = vmatpush1.msra.mxu0 %v246
    %248 = vmatprep.subr.mxu0 0.0
    %v249 = vand.u32 %v43, 4294901760
    %v250 = vsub.f32 %v43, %v249
    %v251 = vand.u32 %v250, 4294901760
    %v252 = vsub.f32 %v250, %v251
    %v253 = vand.u32 %v252, 4294901760
    %254 = vmatpush1.msra.mxu0 %v253
    %255 = vmatprep.subr.mxu0 0.0
    %v256 = vand.u32 %v44, 4294901760
    %v257 = vsub.f32 %v44, %v256
    %v258 = vand.u32 %v257, 4294901760
    %v259 = vsub.f32 %v257, %v258
    %v260 = vand.u32 %v259, 4294901760
    %261 = vmatpush1.msra.mxu0 %v260
    %262 = vmatprep.subr.mxu0 0.0
    %v263 = vand.u32 %v45, 4294901760
    %v264 = vsub.f32 %v45, %v263
    %v265 = vand.u32 %v264, 4294901760
    %v266 = vsub.f32 %v264, %v265
    %v267 = vand.u32 %v266, 4294901760
    %268 = vmatpush1.msra.mxu0 %v267
    %269 = vmatprep.subr.mxu0 0.0
    %v270 = vand.u32 %v46, 4294901760
    %v271 = vsub.f32 %v46, %v270
    %v272 = vand.u32 %v271, 4294901760
    %v273 = vsub.f32 %v271, %v272
    %v274 = vand.u32 %v273, 4294901760
    %275 = vmatpush1.msra.mxu0 %v274
    %276 = vmatprep.subr.mxu0 0.0
    %277 = vmatpush1.msra.mxu0 0.0
    %278 = vmatprep.subr.mxu0 0.0
    %279 = vmatpush1.msra.mxu0 0.0
    %280 = vmatprep.subr.mxu0 0.0
    %281 = vmatpush1.msra.mxu0 0.0
    %282 = vmatprep.subr.mxu0 0.0
    %283 = vmatpush1.msra.mxu0 0.0
    %284 = vmatprep.subr.mxu0 0.0
    %285 = vmatpush1.msra.mxu0 0.0
    %286 = vmatprep.subr.mxu0 0.0
    %287 = vmatpush1.msra.mxu0 0.0
    %288 = vmatprep.subr.mxu0 0.0
    %289 = vmatpush1.msra.mxu0 0.0
    %290 = vmatprep.subr.mxu0 0.0
    %291 = vmatpush1.msra.mxu0 0.0
    %292 = vmatprep.subr.mxu0 0.0
    %293 = vmatpush1.msra.mxu0 0.0
    %294 = vmatprep.subr.mxu0 0.0
    %295 = vmatpush1.msra.mxu0 0.0
    %296 = vmatprep.subr.mxu0 0.0
    %297 = vmatpush1.msra.mxu0 0.0
    %298 = vmatprep.subr.mxu0 0.0
    %299 = vmatpush1.msra.mxu0 0.0
    %300 = vmatprep.subr.mxu0 0.0
    %301 = vmatpush1.msra.mxu0 0.0
    %302 = vmatprep.subr.mxu0 0.0
    %303 = vmatpush1.msra.mxu0 0.0
    %304 = vmatprep.subr.mxu0 0.0
    %305 = vmatpush1.msra.mxu0 0.0
    %306 = vmatprep.subr.mxu0 0.0
    %307 = vmatpush1.msra.mxu0 0.0
    %308 = vmatprep.mubr.f32.mxu0 0.0
    %v309 = vand.u32 %v61, 4294901760
    %310 = vmatmul.mubr.f32.gmra.mrb[0].mxu0 %v309
    %v311 = vpop.f32.mrb[0].mxu0
    %v312 = vadd.f32 %v151, %v311
    %v313 = vpop.f32.mrb[0].mxu0
    %314 = vmatprep.mubr.f32.mxu0 0.0
    %v315 = vand.u32 %v62, 4294901760
    %316 = vmatmul.mubr.f32.gmra.mrb[0].mxu0 %v315
    %v317 = vpop.f32.mrb[0].mxu0
    %v318 = vadd.f32 %v161, %v317
    %v319 = vpop.f32.mrb[0].mxu0
    %320 = vdwg.mxu0
    %321 = vmatprep.subr.mxu0 0.0
    %v322 = vand.u32 %v31, 4294901760
    %v323 = vsub.f32 %v31, %v322
    %324 = vmatpush1.msra.mxu0 %v323
    %325 = vmatprep.subr.mxu0 0.0
    %v326 = vand.u32 %v32, 4294901760
    %v327 = vsub.f32 %v32, %v326
    %328 = vmatpush1.msra.mxu0 %v327
    %329 = vmatprep.subr.mxu0 0.0
    %v330 = vand.u32 %v33, 4294901760
    %v331 = vsub.f32 %v33, %v330
    %332 = vmatpush1.msra.mxu0 %v331
    %333 = vmatprep.subr.mxu0 0.0
    %v334 = vand.u32 %v34, 4294901760
    %v335 = vsub.f32 %v34, %v334
    %336 = vmatpush1.msra.mxu0 %v335
    %337 = vmatprep.subr.mxu0 0.0
    %v338 = vand.u32 %v35, 4294901760
    %v339 = vsub.f32 %v35, %v338
    %340 = vmatpush1.msra.mxu0 %v339
    %341 = vmatprep.subr.mxu0 0.0
    %v342 = vand.u32 %v36, 4294901760
    %v343 = vsub.f32 %v36, %v342
    %344 = vmatpush1.msra.mxu0 %v343
    %345 = vmatprep.subr.mxu0 0.0
    %v346 = vand.u32 %v37, 4294901760
    %v347 = vsub.f32 %v37, %v346
    %348 = vmatpush1.msra.mxu0 %v347
    %349 = vmatprep.subr.mxu0 0.0
    %v350 = vand.u32 %v38, 4294901760
    %v351 = vsub.f32 %v38, %v350
    %352 = vmatpush1.msra.mxu0 %v351
    %353 = vmatprep.subr.mxu0 0.0
    %v354 = vand.u32 %v39, 4294901760
    %v355 = vsub.f32 %v39, %v354
    %356 = vmatpush1.msra.mxu0 %v355
    %357 = vmatprep.subr.mxu0 0.0
    %v358 = vand.u32 %v40, 4294901760
    %v359 = vsub.f32 %v40, %v358
    %360 = vmatpush1.msra.mxu0 %v359
    %361 = vmatprep.subr.mxu0 0.0
    %v362 = vand.u32 %v41, 4294901760
    %v363 = vsub.f32 %v41, %v362
    %364 = vmatpush1.msra.mxu0 %v363
    %365 = vmatprep.subr.mxu0 0.0
    %v366 = vand.u32 %v42, 4294901760
    %v367 = vsub.f32 %v42, %v366
    %368 = vmatpush1.msra.mxu0 %v367
    %369 = vmatprep.subr.mxu0 0.0
    %v370 = vand.u32 %v43, 4294901760
    %v371 = vsub.f32 %v43, %v370
    %372 = vmatpush1.msra.mxu0 %v371
    %373 = vmatprep.subr.mxu0 0.0
    %v374 = vand.u32 %v44, 4294901760
    %v375 = vsub.f32 %v44, %v374
    %376 = vmatpush1.msra.mxu0 %v375
    %377 = vmatprep.subr.mxu0 0.0
    %v378 = vand.u32 %v45, 4294901760
    %v379 = vsub.f32 %v45, %v378
    %380 = vmatpush1.msra.mxu0 %v379
    %381 = vmatprep.subr.mxu0 0.0
    %v382 = vand.u32 %v46, 4294901760
    %v383 = vsub.f32 %v46, %v382
    %384 = vmatpush1.msra.mxu0 %v383
    %385 = vmatprep.subr.mxu0 0.0
    %386 = vmatpush1.msra.mxu0 0.0
    %387 = vmatprep.subr.mxu0 0.0
    %388 = vmatpush1.msra.mxu0 0.0
    %389 = vmatprep.subr.mxu0 0.0
    %390 = vmatpush1.msra.mxu0 0.0
    %391 = vmatprep.subr.mxu0 0.0
    %392 = vmatpush1.msra.mxu0 0.0
    %393 = vmatprep.subr.mxu0 0.0
    %394 = vmatpush1.msra.mxu0 0.0
    %395 = vmatprep.subr.mxu0 0.0
    %396 = vmatpush1.msra.mxu0 0.0
    %397 = vmatprep.subr.mxu0 0.0
    %398 = vmatpush1.msra.mxu0 0.0
    %399 = vmatprep.subr.mxu0 0.0
    %400 = vmatpush1.msra.mxu0 0.0
    %401 = vmatprep.subr.mxu0 0.0
    %402 = vmatpush1.msra.mxu0 0.0
    %403 = vmatprep.subr.mxu0 0.0
    %404 = vmatpush1.msra.mxu0 0.0
    %405 = vmatprep.subr.mxu0 0.0
    %406 = vmatpush1.msra.mxu0 0.0
    %407 = vmatprep.subr.mxu0 0.0
    %408 = vmatpush1.msra.mxu0 0.0
    %409 = vmatprep.subr.mxu0 0.0
    %410 = vmatpush1.msra.mxu0 0.0
    %411 = vmatprep.subr.mxu0 0.0
    %412 = vmatpush1.msra.mxu0 0.0
    %413 = vmatprep.subr.mxu0 0.0
    %414 = vmatpush1.msra.mxu0 0.0
    %415 = vmatprep.subr.mxu0 0.0
    %416 = vmatpush1.msra.mxu0 0.0
    %417 = vmatprep.mubr.f32.mxu0 0.0
    %v418 = vand.u32 %v61, 4294901760
    %v419 = vsub.f32 %v61, %v418
    %420 = vmatmul.mubr.f32.gmra.mrb[0].mxu0 %v419
    %v421 = vpop.f32.mrb[0].mxu0
    %v422 = vadd.f32 %v312, %v421
    %v423 = vpop.f32.mrb[0].mxu0
    %424 = vmatprep.mubr.f32.mxu0 0.0
    %v425 = vand.u32 %v62, 4294901760
    %v426 = vsub.f32 %v62, %v425
    %427 = vmatmul.mubr.f32.gmra.mrb[0].mxu0 %v426
    %v428 = vpop.f32.mrb[0].mxu0
    %v429 = vadd.f32 %v318, %v428
    %v430 = vpop.f32.mrb[0].mxu0
    %431 = vdwg.mxu0
    %432 = vmatprep.subr.mxu0 0.0
    %v433 = vand.u32 %v31, 4294901760
    %434 = vmatpush1.msra.mxu0 %v433
    %435 = vmatprep.subr.mxu0 0.0
    %v436 = vand.u32 %v32, 4294901760
    %437 = vmatpush1.msra.mxu0 %v436
    %438 = vmatprep.subr.mxu0 0.0
    %v439 = vand.u32 %v33, 4294901760
    %440 = vmatpush1.msra.mxu0 %v439
    %441 = vmatprep.subr.mxu0 0.0
    %v442 = vand.u32 %v34, 4294901760
    %443 = vmatpush1.msra.mxu0 %v442
    %444 = vmatprep.subr.mxu0 0.0
    %v445 = vand.u32 %v35, 4294901760
    %446 = vmatpush1.msra.mxu0 %v445
    %447 = vmatprep.subr.mxu0 0.0
    %v448 = vand.u32 %v36, 4294901760
    %449 = vmatpush1.msra.mxu0 %v448
    %450 = vmatprep.subr.mxu0 0.0
    %v451 = vand.u32 %v37, 4294901760
    %452 = vmatpush1.msra.mxu0 %v451
    %453 = vmatprep.subr.mxu0 0.0
    %v454 = vand.u32 %v38, 4294901760
    %455 = vmatpush1.msra.mxu0 %v454
    %456 = vmatprep.subr.mxu0 0.0
    %v457 = vand.u32 %v39, 4294901760
    %458 = vmatpush1.msra.mxu0 %v457
    %459 = vmatprep.subr.mxu0 0.0
    %v460 = vand.u32 %v40, 4294901760
    %461 = vmatpush1.msra.mxu0 %v460
    %462 = vmatprep.subr.mxu0 0.0
    %v463 = vand.u32 %v41, 4294901760
    %464 = vmatpush1.msra.mxu0 %v463
    %465 = vmatprep.subr.mxu0 0.0
    %v466 = vand.u32 %v42, 4294901760
    %467 = vmatpush1.msra.mxu0 %v466
    %468 = vmatprep.subr.mxu0 0.0
    %v469 = vand.u32 %v43, 4294901760
    %470 = vmatpush1.msra.mxu0 %v469
    %471 = vmatprep.subr.mxu0 0.0
    %v472 = vand.u32 %v44, 4294901760
    %473 = vmatpush1.msra.mxu0 %v472
    %474 = vmatprep.subr.mxu0 0.0
    %v475 = vand.u32 %v45, 4294901760
    %476 = vmatpush1.msra.mxu0 %v475
    %477 = vmatprep.subr.mxu0 0.0
    %v478 = vand.u32 %v46, 4294901760
    %479 = vmatpush1.msra.mxu0 %v478
    %480 = vmatprep.subr.mxu0 0.0
    %481 = vmatpush1.msra.mxu0 0.0
    %482 = vmatprep.subr.mxu0 0.0
    %483 = vmatpush1.msra.mxu0 0.0
    %484 = vmatprep.subr.mxu0 0.0
    %485 = vmatpush1.msra.mxu0 0.0
    %486 = vmatprep.subr.mxu0 0.0
    %487 = vmatpush1.msra.mxu0 0.0
    %488 = vmatprep.subr.mxu0 0.0
    %489 = vmatpush1.msra.mxu0 0.0
    %490 = vmatprep.subr.mxu0 0.0
    %491 = vmatpush1.msra.mxu0 0.0
    %492 = vmatprep.subr.mxu0 0.0
    %493 = vmatpush1.msra.mxu0 0.0
    %494 = vmatprep.subr.mxu0 0.0
    %495 = vmatpush1.msra.mxu0 0.0
    %496 = vmatprep.subr.mxu0 0.0
    %497 = vmatpush1.msra.mxu0 0.0
    %498 = vmatprep.subr.mxu0 0.0
    %499 = vmatpush1.msra.mxu0 0.0
    %500 = vmatprep.subr.mxu0 0.0
    %501 = vmatpush1.msra.mxu0 0.0
    %502 = vmatprep.subr.mxu0 0.0
    %503 = vmatpush1.msra.mxu0 0.0
    %504 = vmatprep.subr.mxu0 0.0
    %505 = vmatpush1.msra.mxu0 0.0
    %506 = vmatprep.subr.mxu0 0.0
    %507 = vmatpush1.msra.mxu0 0.0
    %508 = vmatprep.subr.mxu0 0.0
    %509 = vmatpush1.msra.mxu0 0.0
    %510 = vmatprep.subr.mxu0 0.0
    %511 = vmatpush1.msra.mxu0 0.0
    %512 = vmatprep.mubr.f32.mxu0 0.0
    %v513 = vand.u32 %v61, 4294901760
    %v514 = vsub.f32 %v61, %v513
    %v515 = vand.u32 %v514, 4294901760
    %516 = vmatmul.mubr.f32.gmra.mrb[0].mxu0 %v515
    %v517 = vpop.f32.mrb[0].mxu0
    %v518 = vadd.f32 %v422, %v517
    %v519 = vpop.f32.mrb[0].mxu0
    %520 = vmatprep.mubr.f32.mxu0 0.0
    %v521 = vand.u32 %v62, 4294901760
    %v522 = vsub.f32 %v62, %v521
    %v523 = vand.u32 %v522, 4294901760
    %524 = vmatmul.mubr.f32.gmra.mrb[0].mxu0 %v523
    %v525 = vpop.f32.mrb[0].mxu0
    %v526 = vadd.f32 %v429, %v525
    %v527 = vpop.f32.mrb[0].mxu0
    %528 = vdwg.mxu0
    %529 = vmatprep.subr.mxu0 0.0
    %v530 = vand.u32 %v31, 4294901760
    %v531 = vsub.f32 %v31, %v530
    %v532 = vand.u32 %v531, 4294901760
    %533 = vmatpush1.msra.mxu0 %v532
    %534 = vmatprep.subr.mxu0 0.0
    %v535 = vand.u32 %v32, 4294901760
    %v536 = vsub.f32 %v32, %v535
    %v537 = vand.u32 %v536, 4294901760
    %538 = vmatpush1.msra.mxu0 %v537
    %539 = vmatprep.subr.mxu0 0.0
    %v540 = vand.u32 %v33, 4294901760
    %v541 = vsub.f32 %v33, %v540
    %v542 = vand.u32 %v541, 4294901760
    %543 = vmatpush1.msra.mxu0 %v542
    %544 = vmatprep.subr.mxu0 0.0
    %v545 = vand.u32 %v34, 4294901760
    %v546 = vsub.f32 %v34, %v545
    %v547 = vand.u32 %v546, 4294901760
    %548 = vmatpush1.msra.mxu0 %v547
    %549 = vmatprep.subr.mxu0 0.0
    %v550 = vand.u32 %v35, 4294901760
    %v551 = vsub.f32 %v35, %v550
    %v552 = vand.u32 %v551, 4294901760
    %553 = vmatpush1.msra.mxu0 %v552
    %554 = vmatprep.subr.mxu0 0.0
    %v555 = vand.u32 %v36, 4294901760
    %v556 = vsub.f32 %v36, %v555
    %v557 = vand.u32 %v556, 4294901760
    %558 = vmatpush1.msra.mxu0 %v557
    %559 = vmatprep.subr.mxu0 0.0
    %v560 = vand.u32 %v37, 4294901760
    %v561 = vsub.f32 %v37, %v560
    %v562 = vand.u32 %v561, 4294901760
    %563 = vmatpush1.msra.mxu0 %v562
    %564 = vmatprep.subr.mxu0 0.0
    %v565 = vand.u32 %v38, 4294901760
    %v566 = vsub.f32 %v38, %v565
    %v567 = vand.u32 %v566, 4294901760
    %568 = vmatpush1.msra.mxu0 %v567
    %569 = vmatprep.subr.mxu0 0.0
    %v570 = vand.u32 %v39, 4294901760
    %v571 = vsub.f32 %v39, %v570
    %v572 = vand.u32 %v571, 4294901760
    %573 = vmatpush1.msra.mxu0 %v572
    %574 = vmatprep.subr.mxu0 0.0
    %v575 = vand.u32 %v40, 4294901760
    %v576 = vsub.f32 %v40, %v575
    %v577 = vand.u32 %v576, 4294901760
    %578 = vmatpush1.msra.mxu0 %v577
    %579 = vmatprep.subr.mxu0 0.0
    %v580 = vand.u32 %v41, 4294901760
    %v581 = vsub.f32 %v41, %v580
    %v582 = vand.u32 %v581, 4294901760
    %583 = vmatpush1.msra.mxu0 %v582
    %584 = vmatprep.subr.mxu0 0.0
    %v585 = vand.u32 %v42, 4294901760
    %v586 = vsub.f32 %v42, %v585
    %v587 = vand.u32 %v586, 4294901760
    %588 = vmatpush1.msra.mxu0 %v587
    %589 = vmatprep.subr.mxu0 0.0
    %v590 = vand.u32 %v43, 4294901760
    %v591 = vsub.f32 %v43, %v590
    %v592 = vand.u32 %v591, 4294901760
    %593 = vmatpush1.msra.mxu0 %v592
    %594 = vmatprep.subr.mxu0 0.0
    %v595 = vand.u32 %v44, 4294901760
    %v596 = vsub.f32 %v44, %v595
    %v597 = vand.u32 %v596, 4294901760
    %598 = vmatpush1.msra.mxu0 %v597
    %599 = vmatprep.subr.mxu0 0.0
    %v600 = vand.u32 %v45, 4294901760
    %v601 = vsub.f32 %v45, %v600
    %v602 = vand.u32 %v601, 4294901760
    %603 = vmatpush1.msra.mxu0 %v602
    %604 = vmatprep.subr.mxu0 0.0
    %v605 = vand.u32 %v46, 4294901760
    %v606 = vsub.f32 %v46, %v605
    %v607 = vand.u32 %v606, 4294901760
    %608 = vmatpush1.msra.mxu0 %v607
    %609 = vmatprep.subr.mxu0 0.0
    %610 = vmatpush1.msra.mxu0 0.0
    %611 = vmatprep.subr.mxu0 0.0
    %612 = vmatpush1.msra.mxu0 0.0
    %613 = vmatprep.subr.mxu0 0.0
    %614 = vmatpush1.msra.mxu0 0.0
    %615 = vmatprep.subr.mxu0 0.0
    %616 = vmatpush1.msra.mxu0 0.0
    %617 = vmatprep.subr.mxu0 0.0
    %618 = vmatpush1.msra.mxu0 0.0
    %619 = vmatprep.subr.mxu0 0.0
    %620 = vmatpush1.msra.mxu0 0.0
    %621 = vmatprep.subr.mxu0 0.0
    %622 = vmatpush1.msra.mxu0 0.0
    %623 = vmatprep.subr.mxu0 0.0
    %624 = vmatpush1.msra.mxu0 0.0
    %625 = vmatprep.subr.mxu0 0.0
    %626 = vmatpush1.msra.mxu0 0.0
    %627 = vmatprep.subr.mxu0 0.0
    %628 = vmatpush1.msra.mxu0 0.0
    %629 = vmatprep.subr.mxu0 0.0
    %630 = vmatpush1.msra.mxu0 0.0
    %631 = vmatprep.subr.mxu0 0.0
    %632 = vmatpush1.msra.mxu0 0.0
    %633 = vmatprep.subr.mxu0 0.0
    %634 = vmatpush1.msra.mxu0 0.0
    %635 = vmatprep.subr.mxu0 0.0
    %636 = vmatpush1.msra.mxu0 0.0
    %637 = vmatprep.subr.mxu0 0.0
    %638 = vmatpush1.msra.mxu0 0.0
    %639 = vmatprep.subr.mxu0 0.0
    %640 = vmatpush1.msra.mxu0 0.0
    %641 = vmatprep.mubr.f32.mxu0 0.0
    %v642 = vand.u32 %v61, 4294901760
    %643 = vmatmul.mubr.f32.gmra.mrb[0].mxu0 %v642
    %v644 = vpop.f32.mrb[0].mxu0
    %v645 = vadd.f32 %v518, %v644
    %v646 = vpop.f32.mrb[0].mxu0
    %647 = vmatprep.mubr.f32.mxu0 0.0
    %v648 = vand.u32 %v62, 4294901760
    %649 = vmatmul.mubr.f32.gmra.mrb[0].mxu0 %v648
    %v650 = vpop.f32.mrb[0].mxu0
    %v651 = vadd.f32 %v526, %v650
    %v652 = vpop.f32.mrb[0].mxu0
    %653 = vdwg.mxu0
    %654 = vmatprep.subr.mxu0 0.0
    %v655 = vand.u32 %v31, 4294901760
    %656 = vmatpush1.msra.mxu0 %v655
    %657 = vmatprep.subr.mxu0 0.0
    %v658 = vand.u32 %v32, 4294901760
    %659 = vmatpush1.msra.mxu0 %v658
    %660 = vmatprep.subr.mxu0 0.0
    %v661 = vand.u32 %v33, 4294901760
    %662 = vmatpush1.msra.mxu0 %v661
    %663 = vmatprep.subr.mxu0 0.0
    %v664 = vand.u32 %v34, 4294901760
    %665 = vmatpush1.msra.mxu0 %v664
    %666 = vmatprep.subr.mxu0 0.0
    %v667 = vand.u32 %v35, 4294901760
    %668 = vmatpush1.msra.mxu0 %v667
    %669 = vmatprep.subr.mxu0 0.0
    %v670 = vand.u32 %v36, 4294901760
    %671 = vmatpush1.msra.mxu0 %v670
    %672 = vmatprep.subr.mxu0 0.0
    %v673 = vand.u32 %v37, 4294901760
    %674 = vmatpush1.msra.mxu0 %v673
    %675 = vmatprep.subr.mxu0 0.0
    %v676 = vand.u32 %v38, 4294901760
    %677 = vmatpush1.msra.mxu0 %v676
    %678 = vmatprep.subr.mxu0 0.0
    %v679 = vand.u32 %v39, 4294901760
    %680 = vmatpush1.msra.mxu0 %v679
    %681 = vmatprep.subr.mxu0 0.0
    %v682 = vand.u32 %v40, 4294901760
    %683 = vmatpush1.msra.mxu0 %v682
    %684 = vmatprep.subr.mxu0 0.0
    %v685 = vand.u32 %v41, 4294901760
    %686 = vmatpush1.msra.mxu0 %v685
    %687 = vmatprep.subr.mxu0 0.0
    %v688 = vand.u32 %v42, 4294901760
    %689 = vmatpush1.msra.mxu0 %v688
    %690 = vmatprep.subr.mxu0 0.0
    %v691 = vand.u32 %v43, 4294901760
    %692 = vmatpush1.msra.mxu0 %v691
    %693 = vmatprep.subr.mxu0 0.0
    %v694 = vand.u32 %v44, 4294901760
    %695 = vmatpush1.msra.mxu0 %v694
    %696 = vmatprep.subr.mxu0 0.0
    %v697 = vand.u32 %v45, 4294901760
    %698 = vmatpush1.msra.mxu0 %v697
    %699 = vmatprep.subr.mxu0 0.0
    %v700 = vand.u32 %v46, 4294901760
    %701 = vmatpush1.msra.mxu0 %v700
    %702 = vmatprep.subr.mxu0 0.0
    %703 = vmatpush1.msra.mxu0 0.0
    %704 = vmatprep.subr.mxu0 0.0
    %705 = vmatpush1.msra.mxu0 0.0
    %706 = vmatprep.subr.mxu0 0.0
    %707 = vmatpush1.msra.mxu0 0.0
    %708 = vmatprep.subr.mxu0 0.0
    %709 = vmatpush1.msra.mxu0 0.0
    %710 = vmatprep.subr.mxu0 0.0
    %711 = vmatpush1.msra.mxu0 0.0
    %712 = vmatprep.subr.mxu0 0.0
    %713 = vmatpush1.msra.mxu0 0.0
    %714 = vmatprep.subr.mxu0 0.0
    %715 = vmatpush1.msra.mxu0 0.0
    %716 = vmatprep.subr.mxu0 0.0
    %717 = vmatpush1.msra.mxu0 0.0
    %718 = vmatprep.subr.mxu0 0.0
    %719 = vmatpush1.msra.mxu0 0.0
    %720 = vmatprep.subr.mxu0 0.0
    %721 = vmatpush1.msra.mxu0 0.0
    %722 = vmatprep.subr.mxu0 0.0
    %723 = vmatpush1.msra.mxu0 0.0
    %724 = vmatprep.subr.mxu0 0.0
    %725 = vmatpush1.msra.mxu0 0.0
    %726 = vmatprep.subr.mxu0 0.0
    %727 = vmatpush1.msra.mxu0 0.0
    %728 = vmatprep.subr.mxu0 0.0
    %729 = vmatpush1.msra.mxu0 0.0
    %730 = vmatprep.subr.mxu0 0.0
    %731 = vmatpush1.msra.mxu0 0.0
    %732 = vmatprep.subr.mxu0 0.0
    %733 = vmatpush1.msra.mxu0 0.0
    %734 = vmatprep.mubr.f32.mxu0 0.0
    %v735 = vand.u32 %v61, 4294901760
    %736 = vmatmul.mubr.f32.gmra.mrb[0].mxu0 %v735
    %v737 = vpop.f32.mrb[0].mxu0
    %v738 = vadd.f32 %v645, %v737
    %v739 = vpop.f32.mrb[0].mxu0
    %740 = vmatprep.mubr.f32.mxu0 0.0
    %v741 = vand.u32 %v62, 4294901760
    %742 = vmatmul.mubr.f32.gmra.mrb[0].mxu0 %v741
    %v743 = vpop.f32.mrb[0].mxu0
    %v744 = vadd.f32 %v651, %v743
    %v745 = vpop.f32.mrb[0].mxu0
    %746 = vdwg.mxu0
    %747 = vst [vmem:[#allocation5] sm:$0xff] %v738
    %748 = vst [vmem:[#allocation5 + $0x40] sm:$0xff] %v744
    %749 = vset.pattern.permute.xlu0 1
    %750 = vperm.xlu0 %749, %v29
    %v751 = vpop.permute.xlu0 %750
    %752 = vset.pattern.permute.xlu0 1
    %753 = vperm.xlu0 %752, %v30
    %v754 = vpop.permute.xlu0 %753
    %vm755 = vcmp.eq.s32.totalorder %v751, %v50
    %vm756 = vcmp.eq.s32.totalorder %v754, %v50
    %v757 = vsel %vm755, 1, 0
    %v758 = vsel %vm756, 1, 0
    %v759 = vcvt.s32.f32 %v757
    %v760 = vcvt.s32.f32 %v758
    %761 = vmatprep.subr.mxu0 0.0
    %v762 = vand.u32 %v31, 4294901760
    %763 = vmatpush1.msra.mxu0 %v762
    %764 = vmatprep.subr.mxu0 0.0
    %v765 = vand.u32 %v32, 4294901760
    %766 = vmatpush1.msra.mxu0 %v765
    %767 = vmatprep.subr.mxu0 0.0
    %v768 = vand.u32 %v33, 4294901760
    %769 = vmatpush1.msra.mxu0 %v768
    %770 = vmatprep.subr.mxu0 0.0
    %v771 = vand.u32 %v34, 4294901760
    %772 = vmatpush1.msra.mxu0 %v771
    %773 = vmatprep.subr.mxu0 0.0
    %v774 = vand.u32 %v35, 4294901760
    %775 = vmatpush1.msra.mxu0 %v774
    %776 = vmatprep.subr.mxu0 0.0
    %v777 = vand.u32 %v36, 4294901760
    %778 = vmatpush1.msra.mxu0 %v777
    %779 = vmatprep.subr.mxu0 0.0
    %v780 = vand.u32 %v37, 4294901760
    %781 = vmatpush1.msra.mxu0 %v780
    %782 = vmatprep.subr.mxu0 0.0
    %v783 = vand.u32 %v38, 4294901760
    %784 = vmatpush1.msra.mxu0 %v783
    %785 = vmatprep.subr.mxu0 0.0
    %v786 = vand.u32 %v39, 4294901760
    %787 = vmatpush1.msra.mxu0 %v786
    %788 = vmatprep.subr.mxu0 0.0
    %v789 = vand.u32 %v40, 4294901760
    %790 = vmatpush1.msra.mxu0 %v789
    %791 = vmatprep.subr.mxu0 0.0
    %v792 = vand.u32 %v41, 4294901760
    %793 = vmatpush1.msra.mxu0 %v792
    %794 = vmatprep.subr.mxu0 0.0
    %v795 = vand.u32 %v42, 4294901760
    %796 = vmatpush1.msra.mxu0 %v795
    %797 = vmatprep.subr.mxu0 0.0
    %v798 = vand.u32 %v43, 4294901760
    %799 = vmatpush1.msra.mxu0 %v798
    %800 = vmatprep.subr.mxu0 0.0
    %v801 = vand.u32 %v44, 4294901760
    %802 = vmatpush1.msra.mxu0 %v801
    %803 = vmatprep.subr.mxu0 0.0
    %v804 = vand.u32 %v45, 4294901760
    %805 = vmatpush1.msra.mxu0 %v804
    %806 = vmatprep.subr.mxu0 0.0
    %v807 = vand.u32 %v46, 4294901760
    %808 = vmatpush1.msra.mxu0 %v807
    %809 = vmatprep.subr.mxu0 0.0
    %810 = vmatpush1.msra.mxu0 0.0
    %811 = vmatprep.subr.mxu0 0.0
    %812 = vmatpush1.msra.mxu0 0.0
    %813 = vmatprep.subr.mxu0 0.0
    %814 = vmatpush1.msra.mxu0 0.0
    %815 = vmatprep.subr.mxu0 0.0
    %816 = vmatpush1.msra.mxu0 0.0
    %817 = vmatprep.subr.mxu0 0.0
    %818 = vmatpush1.msra.mxu0 0.0
    %819 = vmatprep.subr.mxu0 0.0
    %820 = vmatpush1.msra.mxu0 0.0
    %821 = vmatprep.subr.mxu0 0.0
    %822 = vmatpush1.msra.mxu0 0.0
    %823 = vmatprep.subr.mxu0 0.0
    %824 = vmatpush1.msra.mxu0 0.0
    %825 = vmatprep.subr.mxu0 0.0
    %826 = vmatpush1.msra.mxu0 0.0
    %827 = vmatprep.subr.mxu0 0.0
    %828 = vmatpush1.msra.mxu0 0.0
    %829 = vmatprep.subr.mxu0 0.0
    %830 = vmatpush1.msra.mxu0 0.0
    %831 = vmatprep.subr.mxu0 0.0
    %832 = vmatpush1.msra.mxu0 0.0
    %833 = vmatprep.subr.mxu0 0.0
    %834 = vmatpush1.msra.mxu0 0.0
    %835 = vmatprep.subr.mxu0 0.0
    %836 = vmatpush1.msra.mxu0 0.0
    %837 = vmatprep.subr.mxu0 0.0
    %838 = vmatpush1.msra.mxu0 0.0
    %839 = vmatprep.subr.mxu0 0.0
    %840 = vmatpush1.msra.mxu0 0.0
    %841 = vmatprep.mubr.f32.mxu0 0.0
    %v842 = vand.u32 %v759, 4294901760
    %v843 = vsub.f32 %v759, %v842
    %v844 = vand.u32 %v843, 4294901760
    %v845 = vsub.f32 %v843, %v844
    %v846 = vand.u32 %v845, 4294901760
    %847 = vmatmul.mubr.f32.gmra.mrb[0].mxu0 %v846
    %v848 = vpop.f32.mrb[0].mxu0
    %v849 = vadd.f32 %v47, %v848
    %v850 = vpop.f32.mrb[0].mxu0
    %851 = vmatprep.mubr.f32.mxu0 0.0
    %v852 = vand.u32 %v760, 4294901760
    %v853 = vsub.f32 %v760, %v852
    %v854 = vand.u32 %v853, 4294901760
    %v855 = vsub.f32 %v853, %v854
    %v856 = vand.u32 %v855, 4294901760
    %857 = vmatmul.mubr.f32.gmra.mrb[0].mxu0 %v856
    %v858 = vpop.f32.mrb[0].mxu0
    %v859 = vadd.f32 %v48, %v858
    %v860 = vpop.f32.mrb[0].mxu0
    %861 = vdwg.mxu0
    %862 = vmatprep.subr.mxu0 0.0
    %v863 = vand.u32 %v31, 4294901760
    %v864 = vsub.f32 %v31, %v863
    %v865 = vand.u32 %v864, 4294901760
    %v866 = vsub.f32 %v864, %v865
    %v867 = vand.u32 %v866, 4294901760
    %868 = vmatpush1.msra.mxu0 %v867
    %869 = vmatprep.subr.mxu0 0.0
    %v870 = vand.u32 %v32, 4294901760
    %v871 = vsub.f32 %v32, %v870
    %v872 = vand.u32 %v871, 4294901760
    %v873 = vsub.f32 %v871, %v872
    %v874 = vand.u32 %v873, 4294901760
    %875 = vmatpush1.msra.mxu0 %v874
    %876 = vmatprep.subr.mxu0 0.0
    %v877 = vand.u32 %v33, 4294901760
    %v878 = vsub.f32 %v33, %v877
    %v879 = vand.u32 %v878, 4294901760
    %v880 = vsub.f32 %v878, %v879
    %v881 = vand.u32 %v880, 4294901760
    %882 = vmatpush1.msra.mxu0 %v881
    %883 = vmatprep.subr.mxu0 0.0
    %v884 = vand.u32 %v34, 4294901760
    %v885 = vsub.f32 %v34, %v884
    %v886 = vand.u32 %v885, 4294901760
    %v887 = vsub.f32 %v885, %v886
    %v888 = vand.u32 %v887, 4294901760
    %889 = vmatpush1.msra.mxu0 %v888
    %890 = vmatprep.subr.mxu0 0.0
    %v891 = vand.u32 %v35, 4294901760
    %v892 = vsub.f32 %v35, %v891
    %v893 = vand.u32 %v892, 4294901760
    %v894 = vsub.f32 %v892, %v893
    %v895 = vand.u32 %v894, 4294901760
    %896 = vmatpush1.msra.mxu0 %v895
    %897 = vmatprep.subr.mxu0 0.0
    %v898 = vand.u32 %v36, 4294901760
    %v899 = vsub.f32 %v36, %v898
    %v900 = vand.u32 %v899, 4294901760
    %v901 = vsub.f32 %v899, %v900
    %v902 = vand.u32 %v901, 4294901760
    %903 = vmatpush1.msra.mxu0 %v902
    %904 = vmatprep.subr.mxu0 0.0
    %v905 = vand.u32 %v37, 4294901760
    %v906 = vsub.f32 %v37, %v905
    %v907 = vand.u32 %v906, 4294901760
    %v908 = vsub.f32 %v906, %v907
    %v909 = vand.u32 %v908, 4294901760
    %910 = vmatpush1.msra.mxu0 %v909
    %911 = vmatprep.subr.mxu0 0.0
    %v912 = vand.u32 %v38, 4294901760
    %v913 = vsub.f32 %v38, %v912
    %v914 = vand.u32 %v913, 4294901760
    %v915 = vsub.f32 %v913, %v914
    %v916 = vand.u32 %v915, 4294901760
    %917 = vmatpush1.msra.mxu0 %v916
    %918 = vmatprep.subr.mxu0 0.0
    %v919 = vand.u32 %v39, 4294901760
    %v920 = vsub.f32 %v39, %v919
    %v921 = vand.u32 %v920, 4294901760
    %v922 = vsub.f32 %v920, %v921
    %v923 = vand.u32 %v922, 4294901760
    %924 = vmatpush1.msra.mxu0 %v923
    %925 = vmatprep.subr.mxu0 0.0
    %v926 = vand.u32 %v40, 4294901760
    %v927 = vsub.f32 %v40, %v926
    %v928 = vand.u32 %v927, 4294901760
    %v929 = vsub.f32 %v927, %v928
    %v930 = vand.u32 %v929, 4294901760
    %931 = vmatpush1.msra.mxu0 %v930
    %932 = vmatprep.subr.mxu0 0.0
    %v933 = vand.u32 %v41, 4294901760
    %v934 = vsub.f32 %v41, %v933
    %v935 = vand.u32 %v934, 4294901760
    %v936 = vsub.f32 %v934, %v935
    %v937 = vand.u32 %v936, 4294901760
    %938 = vmatpush1.msra.mxu0 %v937
    %939 = vmatprep.subr.mxu0 0.0
    %v940 = vand.u32 %v42, 4294901760
    %v941 = vsub.f32 %v42, %v940
    %v942 = vand.u32 %v941, 4294901760
    %v943 = vsub.f32 %v941, %v942
    %v944 = vand.u32 %v943, 4294901760
    %945 = vmatpush1.msra.mxu0 %v944
    %946 = vmatprep.subr.mxu0 0.0
    %v947 = vand.u32 %v43, 4294901760
    %v948 = vsub.f32 %v43, %v947
    %v949 = vand.u32 %v948, 4294901760
    %v950 = vsub.f32 %v948, %v949
    %v951 = vand.u32 %v950, 4294901760
    %952 = vmatpush1.msra.mxu0 %v951
    %953 = vmatprep.subr.mxu0 0.0
    %v954 = vand.u32 %v44, 4294901760
    %v955 = vsub.f32 %v44, %v954
    %v956 = vand.u32 %v955, 4294901760
    %v957 = vsub.f32 %v955, %v956
    %v958 = vand.u32 %v957, 4294901760
    %959 = vmatpush1.msra.mxu0 %v958
    %960 = vmatprep.subr.mxu0 0.0
    %v961 = vand.u32 %v45, 4294901760
    %v962 = vsub.f32 %v45, %v961
    %v963 = vand.u32 %v962, 4294901760
    %v964 = vsub.f32 %v962, %v963
    %v965 = vand.u32 %v964, 4294901760
    %966 = vmatpush1.msra.mxu0 %v965
    %967 = vmatprep.subr.mxu0 0.0
    %v968 = vand.u32 %v46, 4294901760
    %v969 = vsub.f32 %v46, %v968
    %v970 = vand.u32 %v969, 4294901760
    %v971 = vsub.f32 %v969, %v970
    %v972 = vand.u32 %v971, 4294901760
    %973 = vmatpush1.msra.mxu0 %v972
    %974 = vmatprep.subr.mxu0 0.0
    %975 = vmatpush1.msra.mxu0 0.0
    %976 = vmatprep.subr.mxu0 0.0
    %977 = vmatpush1.msra.mxu0 0.0
    %978 = vmatprep.subr.mxu0 0.0
    %979 = vmatpush1.msra.mxu0 0.0
    %980 = vmatprep.subr.mxu0 0.0
    %981 = vmatpush1.msra.mxu0 0.0
    %982 = vmatprep.subr.mxu0 0.0
    %983 = vmatpush1.msra.mxu0 0.0
    %984 = vmatprep.subr.mxu0 0.0
    %985 = vmatpush1.msra.mxu0 0.0
    %986 = vmatprep.subr.mxu0 0.0
    %987 = vmatpush1.msra.mxu0 0.0
    %988 = vmatprep.subr.mxu0 0.0
    %989 = vmatpush1.msra.mxu0 0.0
    %990 = vmatprep.subr.mxu0 0.0
    %991 = vmatpush1.msra.mxu0 0.0
    %992 = vmatprep.subr.mxu0 0.0
    %993 = vmatpush1.msra.mxu0 0.0
    %994 = vmatprep.subr.mxu0 0.0
    %995 = vmatpush1.msra.mxu0 0.0
    %996 = vmatprep.subr.mxu0 0.0
    %997 = vmatpush1.msra.mxu0 0.0
    %998 = vmatprep.subr.mxu0 0.0
    %999 = vmatpush1.msra.mxu0 0.0
    %1000 = vmatprep.subr.mxu0 0.0
    %1001 = vmatpush1.msra.mxu0 0.0
    %1002 = vmatprep.subr.mxu0 0.0
    %1003 = vmatpush1.msra.mxu0 0.0
    %1004 = vmatprep.subr.mxu0 0.0
    %1005 = vmatpush1.msra.mxu0 0.0
    %1006 = vmatprep.mubr.f32.mxu0 0.0
    %v1007 = vand.u32 %v759, 4294901760
    %1008 = vmatmul.mubr.f32.gmra.mrb[0].mxu0 %v1007
    %v1009 = vpop.f32.mrb[0].mxu0
    %v1010 = vadd.f32 %v849, %v1009
    %v1011 = vpop.f32.mrb[0].mxu0
    %1012 = vmatprep.mubr.f32.mxu0 0.0
    %v1013 = vand.u32 %v760, 4294901760
    %1014 = vmatmul.mubr.f32.gmra.mrb[0].mxu0 %v1013
    %v1015 = vpop.f32.mrb[0].mxu0
    %v1016 = vadd.f32 %v859, %v1015
    %v1017 = vpop.f32.mrb[0].mxu0
    %1018 = vdwg.mxu0
    %1019 = vmatprep.subr.mxu0 0.0
    %v1020 = vand.u32 %v31, 4294901760
    %v1021 = vsub.f32 %v31, %v1020
    %1022 = vmatpush1.msra.mxu0 %v1021
    %1023 = vmatprep.subr.mxu0 0.0
    %v1024 = vand.u32 %v32, 4294901760
    %v1025 = vsub.f32 %v32, %v1024
    %1026 = vmatpush1.msra.mxu0 %v1025
    %1027 = vmatprep.subr.mxu0 0.0
    %v1028 = vand.u32 %v33, 4294901760
    %v1029 = vsub.f32 %v33, %v1028
    %1030 = vmatpush1.msra.mxu0 %v1029
    %1031 = vmatprep.subr.mxu0 0.0
    %v1032 = vand.u32 %v34, 4294901760
    %v1033 = vsub.f32 %v34, %v1032
    %1034 = vmatpush1.msra.mxu0 %v1033
    %1035 = vmatprep.subr.mxu0 0.0
    %v1036 = vand.u32 %v35, 4294901760
    %v1037 = vsub.f32 %v35, %v1036
    %1038 = vmatpush1.msra.mxu0 %v1037
    %1039 = vmatprep.subr.mxu0 0.0
    %v1040 = vand.u32 %v36, 4294901760
    %v1041 = vsub.f32 %v36, %v1040
    %1042 = vmatpush1.msra.mxu0 %v1041
    %1043 = vmatprep.subr.mxu0 0.0
    %v1044 = vand.u32 %v37, 4294901760
    %v1045 = vsub.f32 %v37, %v1044
    %1046 = vmatpush1.msra.mxu0 %v1045
    %1047 = vmatprep.subr.mxu0 0.0
    %v1048 = vand.u32 %v38, 4294901760
    %v1049 = vsub.f32 %v38, %v1048
    %1050 = vmatpush1.msra.mxu0 %v1049
    %1051 = vmatprep.subr.mxu0 0.0
    %v1052 = vand.u32 %v39, 4294901760
    %v1053 = vsub.f32 %v39, %v1052
    %1054 = vmatpush1.msra.mxu0 %v1053
    %1055 = vmatprep.subr.mxu0 0.0
    %v1056 = vand.u32 %v40, 4294901760
    %v1057 = vsub.f32 %v40, %v1056
    %1058 = vmatpush1.msra.mxu0 %v1057
    %1059 = vmatprep.subr.mxu0 0.0
    %v1060 = vand.u32 %v41, 4294901760
    %v1061 = vsub.f32 %v41, %v1060
    %1062 = vmatpush1.msra.mxu0 %v1061
    %1063 = vmatprep.subr.mxu0 0.0
    %v1064 = vand.u32 %v42, 4294901760
    %v1065 = vsub.f32 %v42, %v1064
    %1066 = vmatpush1.msra.mxu0 %v1065
    %1067 = vmatprep.subr.mxu0 0.0
    %v1068 = vand.u32 %v43, 4294901760
    %v1069 = vsub.f32 %v43, %v1068
    %1070 = vmatpush1.msra.mxu0 %v1069
    %1071 = vmatprep.subr.mxu0 0.0
    %v1072 = vand.u32 %v44, 4294901760
    %v1073 = vsub.f32 %v44, %v1072
    %1074 = vmatpush1.msra.mxu0 %v1073
    %1075 = vmatprep.subr.mxu0 0.0
    %v1076 = vand.u32 %v45, 4294901760
    %v1077 = vsub.f32 %v45, %v1076
    %1078 = vmatpush1.msra.mxu0 %v1077
    %1079 = vmatprep.subr.mxu0 0.0
    %v1080 = vand.u32 %v46, 4294901760
    %v1081 = vsub.f32 %v46, %v1080
    %1082 = vmatpush1.msra.mxu0 %v1081
    %1083 = vmatprep.subr.mxu0 0.0
    %1084 = vmatpush1.msra.mxu0 0.0
    %1085 = vmatprep.subr.mxu0 0.0
    %1086 = vmatpush1.msra.mxu0 0.0
    %1087 = vmatprep.subr.mxu0 0.0
    %1088 = vmatpush1.msra.mxu0 0.0
    %1089 = vmatprep.subr.mxu0 0.0
    %1090 = vmatpush1.msra.mxu0 0.0
    %1091 = vmatprep.subr.mxu0 0.0
    %1092 = vmatpush1.msra.mxu0 0.0
    %1093 = vmatprep.subr.mxu0 0.0
    %1094 = vmatpush1.msra.mxu0 0.0
    %1095 = vmatprep.subr.mxu0 0.0
    %1096 = vmatpush1.msra.mxu0 0.0
    %1097 = vmatprep.subr.mxu0 0.0
    %1098 = vmatpush1.msra.mxu0 0.0
    %1099 = vmatprep.subr.mxu0 0.0
    %1100 = vmatpush1.msra.mxu0 0.0
    %1101 = vmatprep.subr.mxu0 0.0
    %1102 = vmatpush1.msra.mxu0 0.0
    %1103 = vmatprep.subr.mxu0 0.0
    %1104 = vmatpush1.msra.mxu0 0.0
    %1105 = vmatprep.subr.mxu0 0.0
    %1106 = vmatpush1.msra.mxu0 0.0
    %1107 = vmatprep.subr.mxu0 0.0
    %1108 = vmatpush1.msra.mxu0 0.0
    %1109 = vmatprep.subr.mxu0 0.0
    %1110 = vmatpush1.msra.mxu0 0.0
    %1111 = vmatprep.subr.mxu0 0.0
    %1112 = vmatpush1.msra.mxu0 0.0
    %1113 = vmatprep.subr.mxu0 0.0
    %1114 = vmatpush1.msra.mxu0 0.0
    %1115 = vmatprep.mubr.f32.mxu0 0.0
    %v1116 = vand.u32 %v759, 4294901760
    %v1117 = vsub.f32 %v759, %v1116
    %1118 = vmatmul.mubr.f32.gmra.mrb[0].mxu0 %v1117
    %v1119 = vpop.f32.mrb[0].mxu0
    %v1120 = vadd.f32 %v1010, %v1119
    %v1121 = vpop.f32.mrb[0].mxu0
    %1122 = vmatprep.mubr.f32.mxu0 0.0
    %v1123 = vand.u32 %v760, 4294901760
    %v1124 = vsub.f32 %v760, %v1123
    %1125 = vmatmul.mubr.f32.gmra.mrb[0].mxu0 %v1124
    %v1126 = vpop.f32.mrb[0].mxu0
    %v1127 = vadd.f32 %v1016, %v1126
    %v1128 = vpop.f32.mrb[0].mxu0
    %1129 = vdwg.mxu0
    %1130 = vmatprep.subr.mxu0 0.0
    %v1131 = vand.u32 %v31, 4294901760
    %1132 = vmatpush1.msra.mxu0 %v1131
    %1133 = vmatprep.subr.mxu0 0.0
    %v1134 = vand.u32 %v32, 4294901760
    %1135 = vmatpush1.msra.mxu0 %v1134
    %1136 = vmatprep.subr.mxu0 0.0
    %v1137 = vand.u32 %v33, 4294901760
    %1138 = vmatpush1.msra.mxu0 %v1137
    %1139 = vmatprep.subr.mxu0 0.0
    %v1140 = vand.u32 %v34, 4294901760
    %1141 = vmatpush1.msra.mxu0 %v1140
    %1142 = vmatprep.subr.mxu0 0.0
    %v1143 = vand.u32 %v35, 4294901760
    %1144 = vmatpush1.msra.mxu0 %v1143
    %1145 = vmatprep.subr.mxu0 0.0
    %v1146 = vand.u32 %v36, 4294901760
    %1147 = vmatpush1.msra.mxu0 %v1146
    %1148 = vmatprep.subr.mxu0 0.0
    %v1149 = vand.u32 %v37, 4294901760
    %1150 = vmatpush1.msra.mxu0 %v1149
    %1151 = vmatprep.subr.mxu0 0.0
    %v1152 = vand.u32 %v38, 4294901760
    %1153 = vmatpush1.msra.mxu0 %v1152
    %1154 = vmatprep.subr.mxu0 0.0
    %v1155 = vand.u32 %v39, 4294901760
    %1156 = vmatpush1.msra.mxu0 %v1155
    %1157 = vmatprep.subr.mxu0 0.0
    %v1158 = vand.u32 %v40, 4294901760
    %1159 = vmatpush1.msra.mxu0 %v1158
    %1160 = vmatprep.subr.mxu0 0.0
    %v1161 = vand.u32 %v41, 4294901760
    %1162 = vmatpush1.msra.mxu0 %v1161
    %1163 = vmatprep.subr.mxu0 0.0
    %v1164 = vand.u32 %v42, 4294901760
    %1165 = vmatpush1.msra.mxu0 %v1164
    %1166 = vmatprep.subr.mxu0 0.0
    %v1167 = vand.u32 %v43, 4294901760
    %1168 = vmatpush1.msra.mxu0 %v1167
    %1169 = vmatprep.subr.mxu0 0.0
    %v1170 = vand.u32 %v44, 4294901760
    %1171 = vmatpush1.msra.mxu0 %v1170
    %1172 = vmatprep.subr.mxu0 0.0
    %v1173 = vand.u32 %v45, 4294901760
    %1174 = vmatpush1.msra.mxu0 %v1173
    %1175 = vmatprep.subr.mxu0 0.0
    %v1176 = vand.u32 %v46, 4294901760
    %1177 = vmatpush1.msra.mxu0 %v1176
    %1178 = vmatprep.subr.mxu0 0.0
    %1179 = vmatpush1.msra.mxu0 0.0
    %1180 = vmatprep.subr.mxu0 0.0
    %1181 = vmatpush1.msra.mxu0 0.0
    %1182 = vmatprep.subr.mxu0 0.0
    %1183 = vmatpush1.msra.mxu0 0.0
    %1184 = vmatprep.subr.mxu0 0.0
    %1185 = vmatpush1.msra.mxu0 0.0
    %1186 = vmatprep.subr.mxu0 0.0
    %1187 = vmatpush1.msra.mxu0 0.0
    %1188 = vmatprep.subr.mxu0 0.0
    %1189 = vmatpush1.msra.mxu0 0.0
    %1190 = vmatprep.subr.mxu0 0.0
    %1191 = vmatpush1.msra.mxu0 0.0
    %1192 = vmatprep.subr.mxu0 0.0
    %1193 = vmatpush1.msra.mxu0 0.0
    %1194 = vmatprep.subr.mxu0 0.0
    %1195 = vmatpush1.msra.mxu0 0.0
    %1196 = vmatprep.subr.mxu0 0.0
    %1197 = vmatpush1.msra.mxu0 0.0
    %1198 = vmatprep.subr.mxu0 0.0
    %1199 = vmatpush1.msra.mxu0 0.0
    %1200 = vmatprep.subr.mxu0 0.0
    %1201 = vmatpush1.msra.mxu0 0.0
    %1202 = vmatprep.subr.mxu0 0.0
    %1203 = vmatpush1.msra.mxu0 0.0
    %1204 = vmatprep.subr.mxu0 0.0
    %1205 = vmatpush1.msra.mxu0 0.0
    %1206 = vmatprep.subr.mxu0 0.0
    %1207 = vmatpush1.msra.mxu0 0.0
    %1208 = vmatprep.subr.mxu0 0.0
    %1209 = vmatpush1.msra.mxu0 0.0
    %1210 = vmatprep.mubr.f32.mxu0 0.0
    %v1211 = vand.u32 %v759, 4294901760
    %v1212 = vsub.f32 %v759, %v1211
    %v1213 = vand.u32 %v1212, 4294901760
    %1214 = vmatmul.mubr.f32.gmra.mrb[0].mxu0 %v1213
    %v1215 = vpop.f32.mrb[0].mxu0
    %v1216 = vadd.f32 %v1120, %v1215
    %v1217 = vpop.f32.mrb[0].mxu0
    %1218 = vmatprep.mubr.f32.mxu0 0.0
    %v1219 = vand.u32 %v760, 4294901760
    %v1220 = vsub.f32 %v760, %v1219
    %v1221 = vand.u32 %v1220, 4294901760
    %1222 = vmatmul.mubr.f32.gmra.mrb[0].mxu0 %v1221
    %v1223 = vpop.f32.mrb[0].mxu0
    %v1224 = vadd.f32 %v1127, %v1223
    %v1225 = vpop.f32.mrb[0].mxu0
    %1226 = vdwg.mxu0
    %1227 = vmatprep.subr.mxu0 0.0
    %v1228 = vand.u32 %v31, 4294901760
    %v1229 = vsub.f32 %v31, %v1228
    %v1230 = vand.u32 %v1229, 4294901760
    %1231 = vmatpush1.msra.mxu0 %v1230
    %1232 = vmatprep.subr.mxu0 0.0
    %v1233 = vand.u32 %v32, 4294901760
    %v1234 = vsub.f32 %v32, %v1233
    %v1235 = vand.u32 %v1234, 4294901760
    %1236 = vmatpush1.msra.mxu0 %v1235
    %1237 = vmatprep.subr.mxu0 0.0
    %v1238 = vand.u32 %v33, 4294901760
    %v1239 = vsub.f32 %v33, %v1238
    %v1240 = vand.u32 %v1239, 4294901760
    %1241 = vmatpush1.msra.mxu0 %v1240
    %1242 = vmatprep.subr.mxu0 0.0
    %v1243 = vand.u32 %v34, 4294901760
    %v1244 = vsub.f32 %v34, %v1243
    %v1245 = vand.u32 %v1244, 4294901760
    %1246 = vmatpush1.msra.mxu0 %v1245
    %1247 = vmatprep.subr.mxu0 0.0
    %v1248 = vand.u32 %v35, 4294901760
    %v1249 = vsub.f32 %v35, %v1248
    %v1250 = vand.u32 %v1249, 4294901760
    %1251 = vmatpush1.msra.mxu0 %v1250
    %1252 = vmatprep.subr.mxu0 0.0
    %v1253 = vand.u32 %v36, 4294901760
    %v1254 = vsub.f32 %v36, %v1253
    %v1255 = vand.u32 %v1254, 4294901760
    %1256 = vmatpush1.msra.mxu0 %v1255
    %1257 = vmatprep.subr.mxu0 0.0
    %v1258 = vand.u32 %v37, 4294901760
    %v1259 = vsub.f32 %v37, %v1258
    %v1260 = vand.u32 %v1259, 4294901760
    %1261 = vmatpush1.msra.mxu0 %v1260
    %1262 = vmatprep.subr.mxu0 0.0
    %v1263 = vand.u32 %v38, 4294901760
    %v1264 = vsub.f32 %v38, %v1263
    %v1265 = vand.u32 %v1264, 4294901760
    %1266 = vmatpush1.msra.mxu0 %v1265
    %1267 = vmatprep.subr.mxu0 0.0
    %v1268 = vand.u32 %v39, 4294901760
    %v1269 = vsub.f32 %v39, %v1268
    %v1270 = vand.u32 %v1269, 4294901760
    %1271 = vmatpush1.msra.mxu0 %v1270
    %1272 = vmatprep.subr.mxu0 0.0
    %v1273 = vand.u32 %v40, 4294901760
    %v1274 = vsub.f32 %v40, %v1273
    %v1275 = vand.u32 %v1274, 4294901760
    %1276 = vmatpush1.msra.mxu0 %v1275
    %1277 = vmatprep.subr.mxu0 0.0
    %v1278 = vand.u32 %v41, 4294901760
    %v1279 = vsub.f32 %v41, %v1278
    %v1280 = vand.u32 %v1279, 4294901760
    %1281 = vmatpush1.msra.mxu0 %v1280
    %1282 = vmatprep.subr.mxu0 0.0
    %v1283 = vand.u32 %v42, 4294901760
    %v1284 = vsub.f32 %v42, %v1283
    %v1285 = vand.u32 %v1284, 4294901760
    %1286 = vmatpush1.msra.mxu0 %v1285
    %1287 = vmatprep.subr.mxu0 0.0
    %v1288 = vand.u32 %v43, 4294901760
    %v1289 = vsub.f32 %v43, %v1288
    %v1290 = vand.u32 %v1289, 4294901760
    %1291 = vmatpush1.msra.mxu0 %v1290
    %1292 = vmatprep.subr.mxu0 0.0
    %v1293 = vand.u32 %v44, 4294901760
    %v1294 = vsub.f32 %v44, %v1293
    %v1295 = vand.u32 %v1294, 4294901760
    %1296 = vmatpush1.msra.mxu0 %v1295
    %1297 = vmatprep.subr.mxu0 0.0
    %v1298 = vand.u32 %v45, 4294901760
    %v1299 = vsub.f32 %v45, %v1298
    %v1300 = vand.u32 %v1299, 4294901760
    %1301 = vmatpush1.msra.mxu0 %v1300
    %1302 = vmatprep.subr.mxu0 0.0
    %v1303 = vand.u32 %v46, 4294901760
    %v1304 = vsub.f32 %v46, %v1303
    %v1305 = vand.u32 %v1304, 4294901760
    %1306 = vmatpush1.msra.mxu0 %v1305
    %1307 = vmatprep.subr.mxu0 0.0
    %1308 = vmatpush1.msra.mxu0 0.0
    %1309 = vmatprep.subr.mxu0 0.0
    %1310 = vmatpush1.msra.mxu0 0.0
    %1311 = vmatprep.subr.mxu0 0.0
    %1312 = vmatpush1.msra.mxu0 0.0
    %1313 = vmatprep.subr.mxu0 0.0
    %1314 = vmatpush1.msra.mxu0 0.0
    %1315 = vmatprep.subr.mxu0 0.0
    %1316 = vmatpush1.msra.mxu0 0.0
    %1317 = vmatprep.subr.mxu0 0.0
    %1318 = vmatpush1.msra.mxu0 0.0
    %1319 = vmatprep.subr.mxu0 0.0
    %1320 = vmatpush1.msra.mxu0 0.0
    %1321 = vmatprep.subr.mxu0 0.0
    %1322 = vmatpush1.msra.mxu0 0.0
    %1323 = vmatprep.subr.mxu0 0.0
    %1324 = vmatpush1.msra.mxu0 0.0
    %1325 = vmatprep.subr.mxu0 0.0
    %1326 = vmatpush1.msra.mxu0 0.0
    %1327 = vmatprep.subr.mxu0 0.0
    %1328 = vmatpush1.msra.mxu0 0.0
    %1329 = vmatprep.subr.mxu0 0.0
    %1330 = vmatpush1.msra.mxu0 0.0
    %1331 = vmatprep.subr.mxu0 0.0
    %1332 = vmatpush1.msra.mxu0 0.0
    %1333 = vmatprep.subr.mxu0 0.0
    %1334 = vmatpush1.msra.mxu0 0.0
    %1335 = vmatprep.subr.mxu0 0.0
    %1336 = vmatpush1.msra.mxu0 0.0
    %1337 = vmatprep.subr.mxu0 0.0
    %1338 = vmatpush1.msra.mxu0 0.0
    %1339 = vmatprep.mubr.f32.mxu0 0.0
    %v1340 = vand.u32 %v759, 4294901760
    %1341 = vmatmul.mubr.f32.gmra.mrb[0].mxu0 %v1340
    %v1342 = vpop.f32.mrb[0].mxu0
    %v1343 = vadd.f32 %v1216, %v1342
    %v1344 = vpop.f32.mrb[0].mxu0
    %1345 = vmatprep.mubr.f32.mxu0 0.0
    %v1346 = vand.u32 %v760, 4294901760
    %1347 = vmatmul.mubr.f32.gmra.mrb[0].mxu0 %v1346
    %v1348 = vpop.f32.mrb[0].mxu0
    %v1349 = vadd.f32 %v1224, %v1348
    %v1350 = vpop.f32.mrb[0].mxu0
    %1351 = vdwg.mxu0
    %1352 = vmatprep.subr.mxu0 0.0
    %v1353 = vand.u32 %v31, 4294901760
    %1354 = vmatpush1.msra.mxu0 %v1353
    %1355 = vmatprep.subr.mxu0 0.0
    %v1356 = vand.u32 %v32, 4294901760
    %1357 = vmatpush1.msra.mxu0 %v1356
    %1358 = vmatprep.subr.mxu0 0.0
    %v1359 = vand.u32 %v33, 4294901760
    %1360 = vmatpush1.msra.mxu0 %v1359
    %1361 = vmatprep.subr.mxu0 0.0
    %v1362 = vand.u32 %v34, 4294901760
    %1363 = vmatpush1.msra.mxu0 %v1362
    %1364 = vmatprep.subr.mxu0 0.0
    %v1365 = vand.u32 %v35, 4294901760
    %1366 = vmatpush1.msra.mxu0 %v1365
    %1367 = vmatprep.subr.mxu0 0.0
    %v1368 = vand.u32 %v36, 4294901760
    %1369 = vmatpush1.msra.mxu0 %v1368
    %1370 = vmatprep.subr.mxu0 0.0
    %v1371 = vand.u32 %v37, 4294901760
    %1372 = vmatpush1.msra.mxu0 %v1371
    %1373 = vmatprep.subr.mxu0 0.0
    %v1374 = vand.u32 %v38, 4294901760
    %1375 = vmatpush1.msra.mxu0 %v1374
    %1376 = vmatprep.subr.mxu0 0.0
    %v1377 = vand.u32 %v39, 4294901760
    %1378 = vmatpush1.msra.mxu0 %v1377
    %1379 = vmatprep.subr.mxu0 0.0
    %v1380 = vand.u32 %v40, 4294901760
    %1381 = vmatpush1.msra.mxu0 %v1380
    %1382 = vmatprep.subr.mxu0 0.0
    %v1383 = vand.u32 %v41, 4294901760
    %1384 = vmatpush1.msra.mxu0 %v1383
    %1385 = vmatprep.subr.mxu0 0.0
    %v1386 = vand.u32 %v42, 4294901760
    %1387 = vmatpush1.msra.mxu0 %v1386
    %1388 = vmatprep.subr.mxu0 0.0
    %v1389 = vand.u32 %v43, 4294901760
    %1390 = vmatpush1.msra.mxu0 %v1389
    %1391 = vmatprep.subr.mxu0 0.0
    %v1392 = vand.u32 %v44, 4294901760
    %1393 = vmatpush1.msra.mxu0 %v1392
    %1394 = vmatprep.subr.mxu0 0.0
    %v1395 = vand.u32 %v45, 4294901760
    %1396 = vmatpush1.msra.mxu0 %v1395
    %1397 = vmatprep.subr.mxu0 0.0
    %v1398 = vand.u32 %v46, 4294901760
    %1399 = vmatpush1.msra.mxu0 %v1398
    %1400 = vmatprep.subr.mxu0 0.0
    %1401 = vmatpush1.msra.mxu0 0.0
    %1402 = vmatprep.subr.mxu0 0.0
    %1403 = vmatpush1.msra.mxu0 0.0
    %1404 = vmatprep.subr.mxu0 0.0
    %1405 = vmatpush1.msra.mxu0 0.0
    %1406 = vmatprep.subr.mxu0 0.0
    %1407 = vmatpush1.msra.mxu0 0.0
    %1408 = vmatprep.subr.mxu0 0.0
    %1409 = vmatpush1.msra.mxu0 0.0
    %1410 = vmatprep.subr.mxu0 0.0
    %1411 = vmatpush1.msra.mxu0 0.0
    %1412 = vmatprep.subr.mxu0 0.0
    %1413 = vmatpush1.msra.mxu0 0.0
    %1414 = vmatprep.subr.mxu0 0.0
    %1415 = vmatpush1.msra.mxu0 0.0
    %1416 = vmatprep.subr.mxu0 0.0
    %1417 = vmatpush1.msra.mxu0 0.0
    %1418 = vmatprep.subr.mxu0 0.0
    %1419 = vmatpush1.msra.mxu0 0.0
    %1420 = vmatprep.subr.mxu0 0.0
    %1421 = vmatpush1.msra.mxu0 0.0
    %1422 = vmatprep.subr.mxu0 0.0
    %1423 = vmatpush1.msra.mxu0 0.0
    %1424 = vmatprep.subr.mxu0 0.0
    %1425 = vmatpush1.msra.mxu0 0.0
    %1426 = vmatprep.subr.mxu0 0.0
    %1427 = vmatpush1.msra.mxu0 0.0
    %1428 = vmatprep.subr.mxu0 0.0
    %1429 = vmatpush1.msra.mxu0 0.0
    %1430 = vmatprep.subr.mxu0 0.0
    %1431 = vmatpush1.msra.mxu0 0.0
    %1432 = vmatprep.mubr.f32.mxu0 0.0
    %v1433 = vand.u32 %v759, 4294901760
    %1434 = vmatmul.mubr.f32.gmra.mrb[0].mxu0 %v1433
    %v1435 = vpop.f32.mrb[0].mxu0
    %v1436 = vadd.f32 %v1343, %v1435
    %v1437 = vpop.f32.mrb[0].mxu0
    %1438 = vmatprep.mubr.f32.mxu0 0.0
    %v1439 = vand.u32 %v760, 4294901760
    %1440 = vmatmul.mubr.f32.gmra.mrb[0].mxu0 %v1439
    %v1441 = vpop.f32.mrb[0].mxu0
    %v1442 = vadd.f32 %v1349, %v1441
    %v1443 = vpop.f32.mrb[0].mxu0
    %1444 = vdwg.mxu0
    %1445 = vst [vmem:[#allocation5 + $0x8] sm:$0xff] %v1436
    %1446 = vst [vmem:[#allocation5 + $0x48] sm:$0xff] %v1442
    %1447 = vset.pattern.permute.xlu0 2
    %1448 = vperm.xlu0 %1447, %v29
    %v1449 = vpop.permute.xlu0 %1448
    %1450 = vset.pattern.permute.xlu0 2
    %1451 = vperm.xlu0 %1450, %v30
    %v1452 = vpop.permute.xlu0 %1451
    %vm1453 = vcmp.eq.s32.totalorder %v1449, %v50
    %vm1454 = vcmp.eq.s32.totalorder %v1452, %v50
    %v1455 = vsel %vm1453, 1, 0
    %v1456 = vsel %vm1454, 1, 0
    %v1457 = vcvt.s32.f32 %v1455
    %v1458 = vcvt.s32.f32 %v1456
    %1459 = vmatprep.subr.mxu0 0.0
    %v1460 = vand.u32 %v31, 4294901760
    %1461 = vmatpush1.msra.mxu0 %v1460
    %1462 = vmatprep.subr.mxu0 0.0
    %v1463 = vand.u32 %v32, 4294901760
    %1464 = vmatpush1.msra.mxu0 %v1463
    %1465 = vmatprep.subr.mxu0 0.0
    %v1466 = vand.u32 %v33, 4294901760
    %1467 = vmatpush1.msra.mxu0 %v1466
    %1468 = vmatprep.subr.mxu0 0.0
    %v1469 = vand.u32 %v34, 4294901760
    %1470 = vmatpush1.msra.mxu0 %v1469
    %1471 = vmatprep.subr.mxu0 0.0
    %v1472 = vand.u32 %v35, 4294901760
    %1473 = vmatpush1.msra.mxu0 %v1472
    %1474 = vmatprep.subr.mxu0 0.0
    %v1475 = vand.u32 %v36, 4294901760
    %1476 = vmatpush1.msra.mxu0 %v1475
    %1477 = vmatprep.subr.mxu0 0.0
    %v1478 = vand.u32 %v37, 4294901760
    %1479 = vmatpush1.msra.mxu0 %v1478
    %1480 = vmatprep.subr.mxu0 0.0
    %v1481 = vand.u32 %v38, 4294901760
    %1482 = vmatpush1.msra.mxu0 %v1481
    %1483 = vmatprep.subr.mxu0 0.0
    %v1484 = vand.u32 %v39, 4294901760
    %1485 = vmatpush1.msra.mxu0 %v1484
    %1486 = vmatprep.subr.mxu0 0.0
    %v1487 = vand.u32 %v40, 4294901760
    %1488 = vmatpush1.msra.mxu0 %v1487
    %1489 = vmatprep.subr.mxu0 0.0
    %v1490 = vand.u32 %v41, 4294901760
    %1491 = vmatpush1.msra.mxu0 %v1490
    %1492 = vmatprep.subr.mxu0 0.0
    %v1493 = vand.u32 %v42, 4294901760
    %1494 = vmatpush1.msra.mxu0 %v1493
    %1495 = vmatprep.subr.mxu0 0.0
    %v1496 = vand.u32 %v43, 4294901760
    %1497 = vmatpush1.msra.mxu0 %v1496
    %1498 = vmatprep.subr.mxu0 0.0
    %v1499 = vand.u32 %v44, 4294901760
    %1500 = vmatpush1.msra.mxu0 %v1499
    %1501 = vmatprep.subr.mxu0 0.0
    %v1502 = vand.u32 %v45, 4294901760
    %1503 = vmatpush1.msra.mxu0 %v1502
    %1504 = vmatprep.subr.mxu0 0.0
    %v1505 = vand.u32 %v46, 4294901760
    %1506 = vmatpush1.msra.mxu0 %v1505
    %1507 = vmatprep.subr.mxu0 0.0
    %1508 = vmatpush1.msra.mxu0 0.0
    %1509 = vmatprep.subr.mxu0 0.0
    %1510 = vmatpush1.msra.mxu0 0.0
    %1511 = vmatprep.subr.mxu0 0.0
    %1512 = vmatpush1.msra.mxu0 0.0
    %1513 = vmatprep.subr.mxu0 0.0
    %1514 = vmatpush1.msra.mxu0 0.0
    %1515 = vmatprep.subr.mxu0 0.0
    %1516 = vmatpush1.msra.mxu0 0.0
    %1517 = vmatprep.subr.mxu0 0.0
    %1518 = vmatpush1.msra.mxu0 0.0
    %1519 = vmatprep.subr.mxu0 0.0
    %1520 = vmatpush1.msra.mxu0 0.0
    %1521 = vmatprep.subr.mxu0 0.0
    %1522 = vmatpush1.msra.mxu0 0.0
    %1523 = vmatprep.subr.mxu0 0.0
    %1524 = vmatpush1.msra.mxu0 0.0
    %1525 = vmatprep.subr.mxu0 0.0
    %1526 = vmatpush1.msra.mxu0 0.0
    %1527 = vmatprep.subr.mxu0 0.0
    %1528 = vmatpush1.msra.mxu0 0.0
    %1529 = vmatprep.subr.mxu0 0.0
    %1530 = vmatpush1.msra.mxu0 0.0
    %1531 = vmatprep.subr.mxu0 0.0
    %1532 = vmatpush1.msra.mxu0 0.0
    %1533 = vmatprep.subr.mxu0 0.0
    %1534 = vmatpush1.msra.mxu0 0.0
    %1535 = vmatprep.subr.mxu0 0.0
    %1536 = vmatpush1.msra.mxu0 0.0
    %1537 = vmatprep.subr.mxu0 0.0
    %1538 = vmatpush1.msra.mxu0 0.0
    %1539 = vmatprep.mubr.f32.mxu0 0.0
    %v1540 = vand.u32 %v1457, 4294901760
    %v1541 = vsub.f32 %v1457, %v1540
    %v1542 = vand.u32 %v1541, 4294901760
    %v1543 = vsub.f32 %v1541, %v1542
    %v1544 = vand.u32 %v1543, 4294901760
    %1545 = vmatmul.mubr.f32.gmra.mrb[0].mxu0 %v1544
    %v1546 = vpop.f32.mrb[0].mxu0
    %v1547 = vadd.f32 %v47, %v1546
    %v1548 = vpop.f32.mrb[0].mxu0
    %1549 = vmatprep.mubr.f32.mxu0 0.0
    %v1550 = vand.u32 %v1458, 4294901760
    %v1551 = vsub.f32 %v1458, %v1550
    %v1552 = vand.u32 %v1551, 4294901760
    %v1553 = vsub.f32 %v1551, %v1552
    %v1554 = vand.u32 %v1553, 4294901760
    %1555 = vmatmul.mubr.f32.gmra.mrb[0].mxu0 %v1554
    %v1556 = vpop.f32.mrb[0].mxu0
    %v1557 = vadd.f32 %v48, %v1556
    %v1558 = vpop.f32.mrb[0].mxu0
    %1559 = vdwg.mxu0
    %1560 = vmatprep.subr.mxu0 0.0
    %v1561 = vand.u32 %v31, 4294901760
    %v1562 = vsub.f32 %v31, %v1561
    %v1563 = vand.u32 %v1562, 4294901760
    %v1564 = vsub.f32 %v1562, %v1563
    %v1565 = vand.u32 %v1564, 4294901760
    %1566 = vmatpush1.msra.mxu0 %v1565
    %1567 = vmatprep.subr.mxu0 0.0
    %v1568 = vand.u32 %v32, 4294901760
    %v1569 = vsub.f32 %v32, %v1568
    %v1570 = vand.u32 %v1569, 4294901760
    %v1571 = vsub.f32 %v1569, %v1570
    %v1572 = vand.u32 %v1571, 4294901760
    %1573 = vmatpush1.msra.mxu0 %v1572
    %1574 = vmatprep.subr.mxu0 0.0
    %v1575 = vand.u32 %v33, 4294901760
    %v1576 = vsub.f32 %v33, %v1575
    %v1577 = vand.u32 %v1576, 4294901760
    %v1578 = vsub.f32 %v1576, %v1577
    %v1579 = vand.u32 %v1578, 4294901760
    %1580 = vmatpush1.msra.mxu0 %v1579
    %1581 = vmatprep.subr.mxu0 0.0
    %v1582 = vand.u32 %v34, 4294901760
    %v1583 = vsub.f32 %v34, %v1582
    %v1584 = vand.u32 %v1583, 4294901760
    %v1585 = vsub.f32 %v1583, %v1584
    %v1586 = vand.u32 %v1585, 4294901760
    %1587 = vmatpush1.msra.mxu0 %v1586
    %1588 = vmatprep.subr.mxu0 0.0
    %v1589 = vand.u32 %v35, 4294901760
    %v1590 = vsub.f32 %v35, %v1589
    %v1591 = vand.u32 %v1590, 4294901760
    %v1592 = vsub.f32 %v1590, %v1591
    %v1593 = vand.u32 %v1592, 4294901760
    %1594 = vmatpush1.msra.mxu0 %v1593
    %1595 = vmatprep.subr.mxu0 0.0
    %v1596 = vand.u32 %v36, 4294901760
    %v1597 = vsub.f32 %v36, %v1596
    %v1598 = vand.u32 %v1597, 4294901760
    %v1599 = vsub.f32 %v1597, %v1598
    %v1600 = vand.u32 %v1599, 4294901760
    %1601 = vmatpush1.msra.mxu0 %v1600
    %1602 = vmatprep.subr.mxu0 0.0
    %v1603 = vand.u32 %v37, 4294901760
    %v1604 = vsub.f32 %v37, %v1603
    %v1605 = vand.u32 %v1604, 4294901760
    %v1606 = vsub.f32 %v1604, %v1605
    %v1607 = vand.u32 %v1606, 4294901760
    %1608 = vmatpush1.msra.mxu0 %v1607
    %1609 = vmatprep.subr.mxu0 0.0
    %v1610 = vand.u32 %v38, 4294901760
    %v1611 = vsub.f32 %v38, %v1610
    %v1612 = vand.u32 %v1611, 4294901760
    %v1613 = vsub.f32 %v1611, %v1612
    %v1614 = vand.u32 %v1613, 4294901760
    %1615 = vmatpush1.msra.mxu0 %v1614
    %1616 = vmatprep.subr.mxu0 0.0
    %v1617 = vand.u32 %v39, 4294901760
    %v1618 = vsub.f32 %v39, %v1617
    %v1619 = vand.u32 %v1618, 4294901760
    %v1620 = vsub.f32 %v1618, %v1619
    %v1621 = vand.u32 %v1620, 4294901760
    %1622 = vmatpush1.msra.mxu0 %v1621
    %1623 = vmatprep.subr.mxu0 0.0
    %v1624 = vand.u32 %v40, 4294901760
    %v1625 = vsub.f32 %v40, %v1624
    %v1626 = vand.u32 %v1625, 4294901760
    %v1627 = vsub.f32 %v1625, %v1626
    %v1628 = vand.u32 %v1627, 4294901760
    %1629 = vmatpush1.msra.mxu0 %v1628
    %1630 = vmatprep.subr.mxu0 0.0
    %v1631 = vand.u32 %v41, 4294901760
    %v1632 = vsub.f32 %v41, %v1631
    %v1633 = vand.u32 %v1632, 4294901760
    %v1634 = vsub.f32 %v1632, %v1633
    %v1635 = vand.u32 %v1634, 4294901760
    %1636 = vmatpush1.msra.mxu0 %v1635
    %1637 = vmatprep.subr.mxu0 0.0
    %v1638 = vand.u32 %v42, 4294901760
    %v1639 = vsub.f32 %v42, %v1638
    %v1640 = vand.u32 %v1639, 4294901760
    %v1641 = vsub.f32 %v1639, %v1640
    %v1642 = vand.u32 %v1641, 4294901760
    %1643 = vmatpush1.msra.mxu0 %v1642
    %1644 = vmatprep.subr.mxu0 0.0
    %v1645 = vand.u32 %v43, 4294901760
    %v1646 = vsub.f32 %v43, %v1645
    %v1647 = vand.u32 %v1646, 4294901760
    %v1648 = vsub.f32 %v1646, %v1647
    %v1649 = vand.u32 %v1648, 4294901760
    %1650 = vmatpush1.msra.mxu0 %v1649
    %1651 = vmatprep.subr.mxu0 0.0
    %v1652 = vand.u32 %v44, 4294901760
    %v1653 = vsub.f32 %v44, %v1652
    %v1654 = vand.u32 %v1653, 4294901760
    %v1655 = vsub.f32 %v1653, %v1654
    %v1656 = vand.u32 %v1655, 4294901760
    %1657 = vmatpush1.msra.mxu0 %v1656
    %1658 = vmatprep.subr.mxu0 0.0
    %v1659 = vand.u32 %v45, 4294901760
    %v1660 = vsub.f32 %v45, %v1659
    %v1661 = vand.u32 %v1660, 4294901760
    %v1662 = vsub.f32 %v1660, %v1661
    %v1663 = vand.u32 %v1662, 4294901760
    %1664 = vmatpush1.msra.mxu0 %v1663
    %1665 = vmatprep.subr.mxu0 0.0
    %v1666 = vand.u32 %v46, 4294901760
    %v1667 = vsub.f32 %v46, %v1666
    %v1668 = vand.u32 %v1667, 4294901760
    %v1669 = vsub.f32 %v1667, %v1668
    %v1670 = vand.u32 %v1669, 4294901760
    %1671 = vmatpush1.msra.mxu0 %v1670
    %1672 = vmatprep.subr.mxu0 0.0
    %1673 = vmatpush1.msra.mxu0 0.0
    %1674 = vmatprep.subr.mxu0 0.0
    %1675 = vmatpush1.msra.mxu0 0.0
    %1676 = vmatprep.subr.mxu0 0.0
    %1677 = vmatpush1.msra.mxu0 0.0
    %1678 = vmatprep.subr.mxu0 0.0
    %1679 = vmatpush1.msra.mxu0 0.0
    %1680 = vmatprep.subr.mxu0 0.0
    %1681 = vmatpush1.msra.mxu0 0.0
    %1682 = vmatprep.subr.mxu0 0.0
    %1683 = vmatpush1.msra.mxu0 0.0
    %1684 = vmatprep.subr.mxu0 0.0
    %1685 = vmatpush1.msra.mxu0 0.0
    %1686 = vmatprep.subr.mxu0 0.0
    %1687 = vmatpush1.msra.mxu0 0.0
    %1688 = vmatprep.subr.mxu0 0.0
    %1689 = vmatpush1.msra.mxu0 0.0
    %1690 = vmatprep.subr.mxu0 0.0
    %1691 = vmatpush1.msra.mxu0 0.0
    %1692 = vmatprep.subr.mxu0 0.0
    %1693 = vmatpush1.msra.mxu0 0.0
    %1694 = vmatprep.subr.mxu0 0.0
    %1695 = vmatpush1.msra.mxu0 0.0
    %1696 = vmatprep.subr.mxu0 0.0
    %1697 = vmatpush1.msra.mxu0 0.0
    %1698 = vmatprep.subr.mxu0 0.0
    %1699 = vmatpush1.msra.mxu0 0.0
    %1700 = vmatprep.subr.mxu0 0.0
    %1701 = vmatpush1.msra.mxu0 0.0
    %1702 = vmatprep.subr.mxu0 0.0
    %1703 = vmatpush1.msra.mxu0 0.0
    %1704 = vmatprep.mubr.f32.mxu0 0.0
    %v1705 = vand.u32 %v1457, 4294901760
    %1706 = vmatmul.mubr.f32.gmra.mrb[0].mxu0 %v1705
    %v1707 = vpop.f32.mrb[0].mxu0
    %v1708 = vadd.f32 %v1547, %v1707
    %v1709 = vpop.f32.mrb[0].mxu0
    %1710 = vmatprep.mubr.f32.mxu0 0.0
    %v1711 = vand.u32 %v1458, 4294901760
    %1712 = vmatmul.mubr.f32.gmra.mrb[0].mxu0 %v1711
    %v1713 = vpop.f32.mrb[0].mxu0
    %v1714 = vadd.f32 %v1557, %v1713
    %v1715 = vpop.f32.mrb[0].mxu0
    %1716 = vdwg.mxu0
    %1717 = vmatprep.subr.mxu0 0.0
    %v1718 = vand.u32 %v31, 4294901760
    %v1719 = vsub.f32 %v31, %v1718
    %1720 = vmatpush1.msra.mxu0 %v1719
    %1721 = vmatprep.subr.mxu0 0.0
    %v1722 = vand.u32 %v32, 4294901760
    %v1723 = vsub.f32 %v32, %v1722
    %1724 = vmatpush1.msra.mxu0 %v1723
    %1725 = vmatprep.subr.mxu0 0.0
    %v1726 = vand.u32 %v33, 4294901760
    %v1727 = vsub.f32 %v33, %v1726
    %1728 = vmatpush1.msra.mxu0 %v1727
    %1729 = vmatprep.subr.mxu0 0.0
    %v1730 = vand.u32 %v34, 4294901760
    %v1731 = vsub.f32 %v34, %v1730
    %1732 = vmatpush1.msra.mxu0 %v1731
    %1733 = vmatprep.subr.mxu0 0.0
    %v1734 = vand.u32 %v35, 4294901760
    %v1735 = vsub.f32 %v35, %v1734
    %1736 = vmatpush1.msra.mxu0 %v1735
    %1737 = vmatprep.subr.mxu0 0.0
    %v1738 = vand.u32 %v36, 4294901760
    %v1739 = vsub.f32 %v36, %v1738
    %1740 = vmatpush1.msra.mxu0 %v1739
    %1741 = vmatprep.subr.mxu0 0.0
    %v1742 = vand.u32 %v37, 4294901760
    %v1743 = vsub.f32 %v37, %v1742
    %1744 = vmatpush1.msra.mxu0 %v1743
    %1745 = vmatprep.subr.mxu0 0.0
    %v1746 = vand.u32 %v38, 4294901760
    %v1747 = vsub.f32 %v38, %v1746
    %1748 = vmatpush1.msra.mxu0 %v1747
    %1749 = vmatprep.subr.mxu0 0.0
    %v1750 = vand.u32 %v39, 4294901760
    %v1751 = vsub.f32 %v39, %v1750
    %1752 = vmatpush1.msra.mxu0 %v1751
    %1753 = vmatprep.subr.mxu0 0.0
    %v1754 = vand.u32 %v40, 4294901760
    %v1755 = vsub.f32 %v40, %v1754
    %1756 = vmatpush1.msra.mxu0 %v1755
    %1757 = vmatprep.subr.mxu0 0.0
    %v1758 = vand.u32 %v41, 4294901760
    %v1759 = vsub.f32 %v41, %v1758
    %1760 = vmatpush1.msra.mxu0 %v1759
    %1761 = vmatprep.subr.mxu0 0.0
    %v1762 = vand.u32 %v42, 4294901760
    %v1763 = vsub.f32 %v42, %v1762
    %1764 = vmatpush1.msra.mxu0 %v1763
    %1765 = vmatprep.subr.mxu0 0.0
    %v1766 = vand.u32 %v43, 4294901760
    %v1767 = vsub.f32 %v43, %v1766
    %1768 = vmatpush1.msra.mxu0 %v1767
    %1769 = vmatprep.subr.mxu0 0.0
    %v1770 = vand.u32 %v44, 4294901760
    %v1771 = vsub.f32 %v44, %v1770
    %1772 = vmatpush1.msra.mxu0 %v1771
    %1773 = vmatprep.subr.mxu0 0.0
    %v1774 = vand.u32 %v45, 4294901760
    %v1775 = vsub.f32 %v45, %v1774
    %1776 = vmatpush1.msra.mxu0 %v1775
    %1777 = vmatprep.subr.mxu0 0.0
    %v1778 = vand.u32 %v46, 4294901760
    %v1779 = vsub.f32 %v46, %v1778
    %1780 = vmatpush1.msra.mxu0 %v1779
    %1781 = vmatprep.subr.mxu0 0.0
    %1782 = vmatpush1.msra.mxu0 0.0
    %1783 = vmatprep.subr.mxu0 0.0
    %1784 = vmatpush1.msra.mxu0 0.0
    %1785 = vmatprep.subr.mxu0 0.0
    %1786 = vmatpush1.msra.mxu0 0.0
    %1787 = vmatprep.subr.mxu0 0.0
    %1788 = vmatpush1.msra.mxu0 0.0
    %1789 = vmatprep.subr.mxu0 0.0
    %1790 = vmatpush1.msra.mxu0 0.0
    %1791 = vmatprep.subr.mxu0 0.0
    %1792 = vmatpush1.msra.mxu0 0.0
    %1793 = vmatprep.subr.mxu0 0.0
    %1794 = vmatpush1.msra.mxu0 0.0
    %1795 = vmatprep.subr.mxu0 0.0
    %1796 = vmatpush1.msra.mxu0 0.0
    %1797 = vmatprep.subr.mxu0 0.0
    %1798 = vmatpush1.msra.mxu0 0.0
    %1799 = vmatprep.subr.mxu0 0.0
    %1800 = vmatpush1.msra.mxu0 0.0
    %1801 = vmatprep.subr.mxu0 0.0
    %1802 = vmatpush1.msra.mxu0 0.0
    %1803 = vmatprep.subr.mxu0 0.0
    %1804 = vmatpush1.msra.mxu0 0.0
    %1805 = vmatprep.subr.mxu0 0.0
    %1806 = vmatpush1.msra.mxu0 0.0
    %1807 = vmatprep.subr.mxu0 0.0
    %1808 = vmatpush1.msra.mxu0 0.0
    %1809 = vmatprep.subr.mxu0 0.0
    %1810 = vmatpush1.msra.mxu0 0.0
    %1811 = vmatprep.subr.mxu0 0.0
    %1812 = vmatpush1.msra.mxu0 0.0
    %1813 = vmatprep.mubr.f32.mxu0 0.0
    %v1814 = vand.u32 %v1457, 4294901760
    %v1815 = vsub.f32 %v1457, %v1814
    %1816 = vmatmul.mubr.f32.gmra.mrb[0].mxu0 %v1815
    %v1817 = vpop.f32.mrb[0].mxu0
    %v1818 = vadd.f32 %v1708, %v1817
    %v1819 = vpop.f32.mrb[0].mxu0
    %1820 = vmatprep.mubr.f32.mxu0 0.0
    %v1821 = vand.u32 %v1458, 4294901760
    %v1822 = vsub.f32 %v1458, %v1821
    %1823 = vmatmul.mubr.f32.gmra.mrb[0].mxu0 %v1822
    %v1824 = vpop.f32.mrb[0].mxu0
    %v1825 = vadd.f32 %v1714, %v1824
    %v1826 = vpop.f32.mrb[0].mxu0
    %1827 = vdwg.mxu0
    %1828 = vmatprep.subr.mxu0 0.0
    %v1829 = vand.u32 %v31, 4294901760
    %1830 = vmatpush1.msra.mxu0 %v1829
    %1831 = vmatprep.subr.mxu0 0.0
    %v1832 = vand.u32 %v32, 4294901760
    %1833 = vmatpush1.msra.mxu0 %v1832
    %1834 = vmatprep.subr.mxu0 0.0
    %v1835 = vand.u32 %v33, 4294901760
    %1836 = vmatpush1.msra.mxu0 %v1835
    %1837 = vmatprep.subr.mxu0 0.0
    %v1838 = vand.u32 %v34, 4294901760
    %1839 = vmatpush1.msra.mxu0 %v1838
    %1840 = vmatprep.subr.mxu0 0.0
    %v1841 = vand.u32 %v35, 4294901760
    %1842 = vmatpush1.msra.mxu0 %v1841
    %1843 = vmatprep.subr.mxu0 0.0
    %v1844 = vand.u32 %v36, 4294901760
    %1845 = vmatpush1.msra.mxu0 %v1844
    %1846 = vmatprep.subr.mxu0 0.0
    %v1847 = vand.u32 %v37, 4294901760
    %1848 = vmatpush1.msra.mxu0 %v1847
    %1849 = vmatprep.subr.mxu0 0.0
    %v1850 = vand.u32 %v38, 4294901760
    %1851 = vmatpush1.msra.mxu0 %v1850
    %1852 = vmatprep.subr.mxu0 0.0
    %v1853 = vand.u32 %v39, 4294901760
    %1854 = vmatpush1.msra.mxu0 %v1853
    %1855 = vmatprep.subr.mxu0 0.0
    %v1856 = vand.u32 %v40, 4294901760
    %1857 = vmatpush1.msra.mxu0 %v1856
    %1858 = vmatprep.subr.mxu0 0.0
    %v1859 = vand.u32 %v41, 4294901760
    %1860 = vmatpush1.msra.mxu0 %v1859
    %1861 = vmatprep.subr.mxu0 0.0
    %v1862 = vand.u32 %v42, 4294901760
    %1863 = vmatpush1.msra.mxu0 %v1862
    %1864 = vmatprep.subr.mxu0 0.0
    %v1865 = vand.u32 %v43, 4294901760
    %1866 = vmatpush1.msra.mxu0 %v1865
    %1867 = vmatprep.subr.mxu0 0.0
    %v1868 = vand.u32 %v44, 4294901760
    %1869 = vmatpush1.msra.mxu0 %v1868
    %1870 = vmatprep.subr.mxu0 0.0
    %v1871 = vand.u32 %v45, 4294901760
    %1872 = vmatpush1.msra.mxu0 %v1871
    %1873 = vmatprep.subr.mxu0 0.0
    %v1874 = vand.u32 %v46, 4294901760
    %1875 = vmatpush1.msra.mxu0 %v1874
    %1876 = vmatprep.subr.mxu0 0.0
    %1877 = vmatpush1.msra.mxu0 0.0
    %1878 = vmatprep.subr.mxu0 0.0
    %1879 = vmatpush1.msra.mxu0 0.0
    %1880 = vmatprep.subr.mxu0 0.0
    %1881 = vmatpush1.msra.mxu0 0.0
    %1882 = vmatprep.subr.mxu0 0.0
    %1883 = vmatpush1.msra.mxu0 0.0
    %1884 = vmatprep.subr.mxu0 0.0
    %1885 = vmatpush1.msra.mxu0 0.0
    %1886 = vmatprep.subr.mxu0 0.0
    %1887 = vmatpush1.msra.mxu0 0.0
    %1888 = vmatprep.subr.mxu0 0.0
    %1889 = vmatpush1.msra.mxu0 0.0
    %1890 = vmatprep.subr.mxu0 0.0
    %1891 = vmatpush1.msra.mxu0 0.0
    %1892 = vmatprep.subr.mxu0 0.0
    %1893 = vmatpush1.msra.mxu0 0.0
    %1894 = vmatprep.subr.mxu0 0.0
    %1895 = vmatpush1.msra.mxu0 0.0
    %1896 = vmatprep.subr.mxu0 0.0
    %1897 = vmatpush1.msra.mxu0 0.0
    %1898 = vmatprep.subr.mxu0 0.0
    %1899 = vmatpush1.msra.mxu0 0.0
    %1900 = vmatprep.subr.mxu0 0.0
    %1901 = vmatpush1.msra.mxu0 0.0
    %1902 = vmatprep.subr.mxu0 0.0
    %1903 = vmatpush1.msra.mxu0 0.0
    %1904 = vmatprep.subr.mxu0 0.0
    %1905 = vmatpush1.msra.mxu0 0.0
    %1906 = vmatprep.subr.mxu0 0.0
    %1907 = vmatpush1.msra.mxu0 0.0
    %1908 = vmatprep.mubr.f32.mxu0 0.0
    %v1909 = vand.u32 %v1457, 4294901760
    %v1910 = vsub.f32 %v1457, %v1909
    %v1911 = vand.u32 %v1910, 4294901760
    %1912 = vmatmul.mubr.f32.gmra.mrb[0].mxu0 %v1911
    %v1913 = vpop.f32.mrb[0].mxu0
    %v1914 = vadd.f32 %v1818, %v1913
    %v1915 = vpop.f32.mrb[0].mxu0
    %1916 = vmatprep.mubr.f32.mxu0 0.0
    %v1917 = vand.u32 %v1458, 4294901760
    %v1918 = vsub.f32 %v1458, %v1917
    %v1919 = vand.u32 %v1918, 4294901760
    %1920 = vmatmul.mubr.f32.gmra.mrb[0].mxu0 %v1919
    %v1921 = vpop.f32.mrb[0].mxu0
    %v1922 = vadd.f32 %v1825, %v1921
    %v1923 = vpop.f32.mrb[0].mxu0
    %1924 = vdwg.mxu0
    %1925 = vmatprep.subr.mxu0 0.0
    %v1926 = vand.u32 %v31, 4294901760
    %v1927 = vsub.f32 %v31, %v1926
    %v1928 = vand.u32 %v1927, 4294901760
    %1929 = vmatpush1.msra.mxu0 %v1928
    %1930 = vmatprep.subr.mxu0 0.0
    %v1931 = vand.u32 %v32, 4294901760
    %v1932 = vsub.f32 %v32, %v1931
    %v1933 = vand.u32 %v1932, 4294901760
    %1934 = vmatpush1.msra.mxu0 %v1933
    %1935 = vmatprep.subr.mxu0 0.0
    %v1936 = vand.u32 %v33, 4294901760
    %v1937 = vsub.f32 %v33, %v1936
    %v1938 = vand.u32 %v1937, 4294901760
    %1939 = vmatpush1.msra.mxu0 %v1938
    %1940 = vmatprep.subr.mxu0 0.0
    %v1941 = vand.u32 %v34, 4294901760
    %v1942 = vsub.f32 %v34, %v1941
    %v1943 = vand.u32 %v1942, 4294901760
    %1944 = vmatpush1.msra.mxu0 %v1943
    %1945 = vmatprep.subr.mxu0 0.0
    %v1946 = vand.u32 %v35, 4294901760
    %v1947 = vsub.f32 %v35, %v1946
    %v1948 = vand.u32 %v1947, 4294901760
    %1949 = vmatpush1.msra.mxu0 %v1948
    %1950 = vmatprep.subr.mxu0 0.0
    %v1951 = vand.u32 %v36, 4294901760
    %v1952 = vsub.f32 %v36, %v1951
    %v1953 = vand.u32 %v1952, 4294901760
    %1954 = vmatpush1.msra.mxu0 %v1953
    %1955 = vmatprep.subr.mxu0 0.0
    %v1956 = vand.u32 %v37, 4294901760
    %v1957 = vsub.f32 %v37, %v1956
    %v1958 = vand.u32 %v1957, 4294901760
    %1959 = vmatpush1.msra.mxu0 %v1958
    %1960 = vmatprep.subr.mxu0 0.0
    %v1961 = vand.u32 %v38, 4294901760
    %v1962 = vsub.f32 %v38, %v1961
    %v1963 = vand.u32 %v1962, 4294901760
    %1964 = vmatpush1.msra.mxu0 %v1963
    %1965 = vmatprep.subr.mxu0 0.0
    %v1966 = vand.u32 %v39, 4294901760
    %v1967 = vsub.f32 %v39, %v1966
    %v1968 = vand.u32 %v1967, 4294901760
    %1969 = vmatpush1.msra.mxu0 %v1968
    %1970 = vmatprep.subr.mxu0 0.0
    %v1971 = vand.u32 %v40, 4294901760
    %v1972 = vsub.f32 %v40, %v1971
    %v1973 = vand.u32 %v1972, 4294901760
    %1974 = vmatpush1.msra.mxu0 %v1973
    %1975 = vmatprep.subr.mxu0 0.0
    %v1976 = vand.u32 %v41, 4294901760
    %v1977 = vsub.f32 %v41, %v1976
    %v1978 = vand.u32 %v1977, 4294901760
    %1979 = vmatpush1.msra.mxu0 %v1978
    %1980 = vmatprep.subr.mxu0 0.0
    %v1981 = vand.u32 %v42, 4294901760
    %v1982 = vsub.f32 %v42, %v1981
    %v1983 = vand.u32 %v1982, 4294901760
    %1984 = vmatpush1.msra.mxu0 %v1983
    %1985 = vmatprep.subr.mxu0 0.0
    %v1986 = vand.u32 %v43, 4294901760
    %v1987 = vsub.f32 %v43, %v1986
    %v1988 = vand.u32 %v1987, 4294901760
    %1989 = vmatpush1.msra.mxu0 %v1988
    %1990 = vmatprep.subr.mxu0 0.0
    %v1991 = vand.u32 %v44, 4294901760
    %v1992 = vsub.f32 %v44, %v1991
    %v1993 = vand.u32 %v1992, 4294901760
    %1994 = vmatpush1.msra.mxu0 %v1993
    %1995 = vmatprep.subr.mxu0 0.0
    %v1996 = vand.u32 %v45, 4294901760
    %v1997 = vsub.f32 %v45, %v1996
    %v1998 = vand.u32 %v1997, 4294901760
    %1999 = vmatpush1.msra.mxu0 %v1998
    %2000 = vmatprep.subr.mxu0 0.0
    %v2001 = vand.u32 %v46, 4294901760
    %v2002 = vsub.f32 %v46, %v2001
    %v2003 = vand.u32 %v2002, 4294901760
    %2004 = vmatpush1.msra.mxu0 %v2003
    %2005 = vmatprep.subr.mxu0 0.0
    %2006 = vmatpush1.msra.mxu0 0.0
    %2007 = vmatprep.subr.mxu0 0.0
    %2008 = vmatpush1.msra.mxu0 0.0
    %2009 = vmatprep.subr.mxu0 0.0
    %2010 = vmatpush1.msra.mxu0 0.0
    %2011 = vmatprep.subr.mxu0 0.0
    %2012 = vmatpush1.msra.mxu0 0.0
    %2013 = vmatprep.subr.mxu0 0.0
    %2014 = vmatpush1.msra.mxu0 0.0
    %2015 = vmatprep.subr.mxu0 0.0
    %2016 = vmatpush1.msra.mxu0 0.0
    %2017 = vmatprep.subr.mxu0 0.0
    %2018 = vmatpush1.msra.mxu0 0.0
    %2019 = vmatprep.subr.mxu0 0.0
    %2020 = vmatpush1.msra.mxu0 0.0
    %2021 = vmatprep.subr.mxu0 0.0
    %2022 = vmatpush1.msra.mxu0 0.0
    %2023 = vmatprep.subr.mxu0 0.0
    %2024 = vmatpush1.msra.mxu0 0.0
    %2025 = vmatprep.subr.mxu0 0.0
    %2026 = vmatpush1.msra.mxu0 0.0
    %2027 = vmatprep.subr.mxu0 0.0
    %2028 = vmatpush1.msra.mxu0 0.0
    %2029 = vmatprep.subr.mxu0 0.0
    %2030 = vmatpush1.msra.mxu0 0.0
    %2031 = vmatprep.subr.mxu0 0.0
    %2032 = vmatpush1.msra.mxu0 0.0
    %2033 = vmatprep.subr.mxu0 0.0
    %2034 = vmatpush1.msra.mxu0 0.0
    %2035 = vmatprep.subr.mxu0 0.0
    %2036 = vmatpush1.msra.mxu0 0.0
    %2037 = vmatprep.mubr.f32.mxu0 0.0
    %v2038 = vand.u32 %v1457, 4294901760
    %2039 = vmatmul.mubr.f32.gmra.mrb[0].mxu0 %v2038
    %v2040 = vpop.f32.mrb[0].mxu0
    %v2041 = vadd.f32 %v1914, %v2040
    %v2042 = vpop.f32.mrb[0].mxu0
    %2043 = vmatprep.mubr.f32.mxu0 0.0
    %v2044 = vand.u32 %v1458, 4294901760
    %2045 = vmatmul.mubr.f32.gmra.mrb[0].mxu0 %v2044
    %v2046 = vpop.f32.mrb[0].mxu0
    %v2047 = vadd.f32 %v1922, %v2046
    %v2048 = vpop.f32.mrb[0].mxu0
    %2049 = vdwg.mxu0
    %2050 = vmatprep.subr.mxu0 0.0
    %v2051 = vand.u32 %v31, 4294901760
    %2052 = vmatpush1.msra.mxu0 %v2051
    %2053 = vmatprep.subr.mxu0 0.0
    %v2054 = vand.u32 %v32, 4294901760
    %2055 = vmatpush1.msra.mxu0 %v2054
    %2056 = vmatprep.subr.mxu0 0.0
    %v2057 = vand.u32 %v33, 4294901760
    %2058 = vmatpush1.msra.mxu0 %v2057
    %2059 = vmatprep.subr.mxu0 0.0
    %v2060 = vand.u32 %v34, 4294901760
    %2061 = vmatpush1.msra.mxu0 %v2060
    %2062 = vmatprep.subr.mxu0 0.0
    %v2063 = vand.u32 %v35, 4294901760
    %2064 = vmatpush1.msra.mxu0 %v2063
    %2065 = vmatprep.subr.mxu0 0.0
    %v2066 = vand.u32 %v36, 4294901760
    %2067 = vmatpush1.msra.mxu0 %v2066
    %2068 = vmatprep.subr.mxu0 0.0
    %v2069 = vand.u32 %v37, 4294901760
    %2070 = vmatpush1.msra.mxu0 %v2069
    %2071 = vmatprep.subr.mxu0 0.0
    %v2072 = vand.u32 %v38, 4294901760
    %2073 = vmatpush1.msra.mxu0 %v2072
    %2074 = vmatprep.subr.mxu0 0.0
    %v2075 = vand.u32 %v39, 4294901760
    %2076 = vmatpush1.msra.mxu0 %v2075
    %2077 = vmatprep.subr.mxu0 0.0
    %v2078 = vand.u32 %v40, 4294901760
    %2079 = vmatpush1.msra.mxu0 %v2078
    %2080 = vmatprep.subr.mxu0 0.0
    %v2081 = vand.u32 %v41, 4294901760
    %2082 = vmatpush1.msra.mxu0 %v2081
    %2083 = vmatprep.subr.mxu0 0.0
    %v2084 = vand.u32 %v42, 4294901760
    %2085 = vmatpush1.msra.mxu0 %v2084
    %2086 = vmatprep.subr.mxu0 0.0
    %v2087 = vand.u32 %v43, 4294901760
    %2088 = vmatpush1.msra.mxu0 %v2087
    %2089 = vmatprep.subr.mxu0 0.0
    %v2090 = vand.u32 %v44, 4294901760
    %2091 = vmatpush1.msra.mxu0 %v2090
    %2092 = vmatprep.subr.mxu0 0.0
    %v2093 = vand.u32 %v45, 4294901760
    %2094 = vmatpush1.msra.mxu0 %v2093
    %2095 = vmatprep.subr.mxu0 0.0
    %v2096 = vand.u32 %v46, 4294901760
    %2097 = vmatpush1.msra.mxu0 %v2096
    %2098 = vmatprep.subr.mxu0 0.0
    %2099 = vmatpush1.msra.mxu0 0.0
    %2100 = vmatprep.subr.mxu0 0.0
    %2101 = vmatpush1.msra.mxu0 0.0
    %2102 = vmatprep.subr.mxu0 0.0
    %2103 = vmatpush1.msra.mxu0 0.0
    %2104 = vmatprep.subr.mxu0 0.0
    %2105 = vmatpush1.msra.mxu0 0.0
    %2106 = vmatprep.subr.mxu0 0.0
    %2107 = vmatpush1.msra.mxu0 0.0
    %2108 = vmatprep.subr.mxu0 0.0
    %2109 = vmatpush1.msra.mxu0 0.0
    %2110 = vmatprep.subr.mxu0 0.0
    %2111 = vmatpush1.msra.mxu0 0.0
    %2112 = vmatprep.subr.mxu0 0.0
    %2113 = vmatpush1.msra.mxu0 0.0
    %2114 = vmatprep.subr.mxu0 0.0
    %2115 = vmatpush1.msra.mxu0 0.0
    %2116 = vmatprep.subr.mxu0 0.0
    %2117 = vmatpush1.msra.mxu0 0.0
    %2118 = vmatprep.subr.mxu0 0.0
    %2119 = vmatpush1.msra.mxu0 0.0
    %2120 = vmatprep.subr.mxu0 0.0
    %2121 = vmatpush1.msra.mxu0 0.0
    %2122 = vmatprep.subr.mxu0 0.0
    %2123 = vmatpush1.msra.mxu0 0.0
    %2124 = vmatprep.subr.mxu0 0.0
    %2125 = vmatpush1.msra.mxu0 0.0
    %2126 = vmatprep.subr.mxu0 0.0
    %2127 = vmatpush1.msra.mxu0 0.0
    %2128 = vmatprep.subr.mxu0 0.0
    %2129 = vmatpush1.msra.mxu0 0.0
    %2130 = vmatprep.mubr.f32.mxu0 0.0
    %v2131 = vand.u32 %v1457, 4294901760
    %2132 = vmatmul.mubr.f32.gmra.mrb[0].mxu0 %v2131
    %v2133 = vpop.f32.mrb[0].mxu0
    %v2134 = vadd.f32 %v2041, %v2133
    %v2135 = vpop.f32.mrb[0].mxu0
    %2136 = vmatprep.mubr.f32.mxu0 0.0
    %v2137 = vand.u32 %v1458, 4294901760
    %2138 = vmatmul.mubr.f32.gmra.mrb[0].mxu0 %v2137
    %v2139 = vpop.f32.mrb[0].mxu0
    %v2140 = vadd.f32 %v2047, %v2139
    %v2141 = vpop.f32.mrb[0].mxu0
    %2142 = vdwg.mxu0
    %2143 = vst [vmem:[#allocation5 + $0x10] sm:$0xff] %v2134
    %2144 = vst [vmem:[#allocation5 + $0x50] sm:$0xff] %v2140
    %2145 = vset.pattern.permute.xlu0 3
    %2146 = vperm.xlu0 %2145, %v29
    %v2147 = vpop.permute.xlu0 %2146
    %2148 = vset.pattern.permute.xlu0 3
    %2149 = vperm.xlu0 %2148, %v30
    %v2150 = vpop.permute.xlu0 %2149
    %vm2151 = vcmp.eq.s32.totalorder %v2147, %v50
    %vm2152 = vcmp.eq.s32.totalorder %v2150, %v50
    %v2153 = vsel %vm2151, 1, 0
    %v2154 = vsel %vm2152, 1, 0
    %v2155 = vcvt.s32.f32 %v2153
    %v2156 = vcvt.s32.f32 %v2154
    %2157 = vmatprep.subr.mxu0 0.0
    %v2158 = vand.u32 %v31, 4294901760
    %2159 = vmatpush1.msra.mxu0 %v2158
    %2160 = vmatprep.subr.mxu0 0.0
    %v2161 = vand.u32 %v32, 4294901760
    %2162 = vmatpush1.msra.mxu0 %v2161
    %2163 = vmatprep.subr.mxu0 0.0
    %v2164 = vand.u32 %v33, 4294901760
    %2165 = vmatpush1.msra.mxu0 %v2164
    %2166 = vmatprep.subr.mxu0 0.0
    %v2167 = vand.u32 %v34, 4294901760
    %2168 = vmatpush1.msra.mxu0 %v2167
    %2169 = vmatprep.subr.mxu0 0.0
    %v2170 = vand.u32 %v35, 4294901760
    %2171 = vmatpush1.msra.mxu0 %v2170
    %2172 = vmatprep.subr.mxu0 0.0
    %v2173 = vand.u32 %v36, 4294901760
    %2174 = vmatpush1.msra.mxu0 %v2173
    %2175 = vmatprep.subr.mxu0 0.0
    %v2176 = vand.u32 %v37, 4294901760
    %2177 = vmatpush1.msra.mxu0 %v2176
    %2178 = vmatprep.subr.mxu0 0.0
    %v2179 = vand.u32 %v38, 4294901760
    %2180 = vmatpush1.msra.mxu0 %v2179
    %2181 = vmatprep.subr.mxu0 0.0
    %v2182 = vand.u32 %v39, 4294901760
    %2183 = vmatpush1.msra.mxu0 %v2182
    %2184 = vmatprep.subr.mxu0 0.0
    %v2185 = vand.u32 %v40, 4294901760
    %2186 = vmatpush1.msra.mxu0 %v2185
    %2187 = vmatprep.subr.mxu0 0.0
    %v2188 = vand.u32 %v41, 4294901760
    %2189 = vmatpush1.msra.mxu0 %v2188
    %2190 = vmatprep.subr.mxu0 0.0
    %v2191 = vand.u32 %v42, 4294901760
    %2192 = vmatpush1.msra.mxu0 %v2191
    %2193 = vmatprep.subr.mxu0 0.0
    %v2194 = vand.u32 %v43, 4294901760
    %2195 = vmatpush1.msra.mxu0 %v2194
    %2196 = vmatprep.subr.mxu0 0.0
    %v2197 = vand.u32 %v44, 4294901760
    %2198 = vmatpush1.msra.mxu0 %v2197
    %2199 = vmatprep.subr.mxu0 0.0
    %v2200 = vand.u32 %v45, 4294901760
    %2201 = vmatpush1.msra.mxu0 %v2200
    %2202 = vmatprep.subr.mxu0 0.0
    %v2203 = vand.u32 %v46, 4294901760
    %2204 = vmatpush1.msra.mxu0 %v2203
    %2205 = vmatprep.subr.mxu0 0.0
    %2206 = vmatpush1.msra.mxu0 0.0
    %2207 = vmatprep.subr.mxu0 0.0
    %2208 = vmatpush1.msra.mxu0 0.0
    %2209 = vmatprep.subr.mxu0 0.0
    %2210 = vmatpush1.msra.mxu0 0.0
    %2211 = vmatprep.subr.mxu0 0.0
    %2212 = vmatpush1.msra.mxu0 0.0
    %2213 = vmatprep.subr.mxu0 0.0
    %2214 = vmatpush1.msra.mxu0 0.0
    %2215 = vmatprep.subr.mxu0 0.0
    %2216 = vmatpush1.msra.mxu0 0.0
    %2217 = vmatprep.subr.mxu0 0.0
    %2218 = vmatpush1.msra.mxu0 0.0
    %2219 = vmatprep.subr.mxu0 0.0
    %2220 = vmatpush1.msra.mxu0 0.0
    %2221 = vmatprep.subr.mxu0 0.0
    %2222 = vmatpush1.msra.mxu0 0.0
    %2223 = vmatprep.subr.mxu0 0.0
    %2224 = vmatpush1.msra.mxu0 0.0
    %2225 = vmatprep.subr.mxu0 0.0
    %2226 = vmatpush1.msra.mxu0 0.0
    %2227 = vmatprep.subr.mxu0 0.0
    %2228 = vmatpush1.msra.mxu0 0.0
    %2229 = vmatprep.subr.mxu0 0.0
    %2230 = vmatpush1.msra.mxu0 0.0
    %2231 = vmatprep.subr.mxu0 0.0
    %2232 = vmatpush1.msra.mxu0 0.0
    %2233 = vmatprep.subr.mxu0 0.0
    %2234 = vmatpush1.msra.mxu0 0.0
    %2235 = vmatprep.subr.mxu0 0.0
    %2236 = vmatpush1.msra.mxu0 0.0
    %2237 = vmatprep.mubr.f32.mxu0 0.0
    %v2238 = vand.u32 %v2155, 4294901760
    %v2239 = vsub.f32 %v2155, %v2238
    %v2240 = vand.u32 %v2239, 4294901760
    %v2241 = vsub.f32 %v2239, %v2240
    %v2242 = vand.u32 %v2241, 4294901760
    %2243 = vmatmul.mubr.f32.gmra.mrb[0].mxu0 %v2242
    %v2244 = vpop.f32.mrb[0].mxu0
    %v2245 = vadd.f32 %v47, %v2244
    %v2246 = vpop.f32.mrb[0].mxu0
    %2247 = vmatprep.mubr.f32.mxu0 0.0
    %v2248 = vand.u32 %v2156, 4294901760
    %v2249 = vsub.f32 %v2156, %v2248
    %v2250 = vand.u32 %v2249, 4294901760
    %v2251 = vsub.f32 %v2249, %v2250
    %v2252 = vand.u32 %v2251, 4294901760
    %2253 = vmatmul.mubr.f32.gmra.mrb[0].mxu0 %v2252
    %v2254 = vpop.f32.mrb[0].mxu0
    %v2255 = vadd.f32 %v48, %v2254
    %v2256 = vpop.f32.mrb[0].mxu0
    %2257 = vdwg.mxu0
    %2258 = vmatprep.subr.mxu0 0.0
    %v2259 = vand.u32 %v31, 4294901760
    %v2260 = vsub.f32 %v31, %v2259
    %v2261 = vand.u32 %v2260, 4294901760
    %v2262 = vsub.f32 %v2260, %v2261
    %v2263 = vand.u32 %v2262, 4294901760
    %2264 = vmatpush1.msra.mxu0 %v2263
    %2265 = vmatprep.subr.mxu0 0.0
    %v2266 = vand.u32 %v32, 4294901760
    %v2267 = vsub.f32 %v32, %v2266
    %v2268 = vand.u32 %v2267, 4294901760
    %v2269 = vsub.f32 %v2267, %v2268
    %v2270 = vand.u32 %v2269, 4294901760
    %2271 = vmatpush1.msra.mxu0 %v2270
    %2272 = vmatprep.subr.mxu0 0.0
    %v2273 = vand.u32 %v33, 4294901760
    %v2274 = vsub.f32 %v33, %v2273
    %v2275 = vand.u32 %v2274, 4294901760
    %v2276 = vsub.f32 %v2274, %v2275
    %v2277 = vand.u32 %v2276, 4294901760
    %2278 = vmatpush1.msra.mxu0 %v2277
    %2279 = vmatprep.subr.mxu0 0.0
    %v2280 = vand.u32 %v34, 4294901760
    %v2281 = vsub.f32 %v34, %v2280
    %v2282 = vand.u32 %v2281, 4294901760
    %v2283 = vsub.f32 %v2281, %v2282
    %v2284 = vand.u32 %v2283, 4294901760
    %2285 = vmatpush1.msra.mxu0 %v2284
    %2286 = vmatprep.subr.mxu0 0.0
    %v2287 = vand.u32 %v35, 4294901760
    %v2288 = vsub.f32 %v35, %v2287
    %v2289 = vand.u32 %v2288, 4294901760
    %v2290 = vsub.f32 %v2288, %v2289
    %v2291 = vand.u32 %v2290, 4294901760
    %2292 = vmatpush1.msra.mxu0 %v2291
    %2293 = vmatprep.subr.mxu0 0.0
    %v2294 = vand.u32 %v36, 4294901760
    %v2295 = vsub.f32 %v36, %v2294
    %v2296 = vand.u32 %v2295, 4294901760
    %v2297 = vsub.f32 %v2295, %v2296
    %v2298 = vand.u32 %v2297, 4294901760
    %2299 = vmatpush1.msra.mxu0 %v2298
    %2300 = vmatprep.subr.mxu0 0.0
    %v2301 = vand.u32 %v37, 4294901760
    %v2302 = vsub.f32 %v37, %v2301
    %v2303 = vand.u32 %v2302, 4294901760
    %v2304 = vsub.f32 %v2302, %v2303
    %v2305 = vand.u32 %v2304, 4294901760
    %2306 = vmatpush1.msra.mxu0 %v2305
    %2307 = vmatprep.subr.mxu0 0.0
    %v2308 = vand.u32 %v38, 4294901760
    %v2309 = vsub.f32 %v38, %v2308
    %v2310 = vand.u32 %v2309, 4294901760
    %v2311 = vsub.f32 %v2309, %v2310
    %v2312 = vand.u32 %v2311, 4294901760
    %2313 = vmatpush1.msra.mxu0 %v2312
    %2314 = vmatprep.subr.mxu0 0.0
    %v2315 = vand.u32 %v39, 4294901760
    %v2316 = vsub.f32 %v39, %v2315
    %v2317 = vand.u32 %v2316, 4294901760
    %v2318 = vsub.f32 %v2316, %v2317
    %v2319 = vand.u32 %v2318, 4294901760
    %2320 = vmatpush1.msra.mxu0 %v2319
    %2321 = vmatprep.subr.mxu0 0.0
    %v2322 = vand.u32 %v40, 4294901760
    %v2323 = vsub.f32 %v40, %v2322
    %v2324 = vand.u32 %v2323, 4294901760
    %v2325 = vsub.f32 %v2323, %v2324
    %v2326 = vand.u32 %v2325, 4294901760
    %2327 = vmatpush1.msra.mxu0 %v2326
    %2328 = vmatprep.subr.mxu0 0.0
    %v2329 = vand.u32 %v41, 4294901760
    %v2330 = vsub.f32 %v41, %v2329
    %v2331 = vand.u32 %v2330, 4294901760
    %v2332 = vsub.f32 %v2330, %v2331
    %v2333 = vand.u32 %v2332, 4294901760
    %2334 = vmatpush1.msra.mxu0 %v2333
    %2335 = vmatprep.subr.mxu0 0.0
    %v2336 = vand.u32 %v42, 4294901760
    %v2337 = vsub.f32 %v42, %v2336
    %v2338 = vand.u32 %v2337, 4294901760
    %v2339 = vsub.f32 %v2337, %v2338
    %v2340 = vand.u32 %v2339, 4294901760
    %2341 = vmatpush1.msra.mxu0 %v2340
    %2342 = vmatprep.subr.mxu0 0.0
    %v2343 = vand.u32 %v43, 4294901760
    %v2344 = vsub.f32 %v43, %v2343
    %v2345 = vand.u32 %v2344, 4294901760
    %v2346 = vsub.f32 %v2344, %v2345
    %v2347 = vand.u32 %v2346, 4294901760
    %2348 = vmatpush1.msra.mxu0 %v2347
    %2349 = vmatprep.subr.mxu0 0.0
    %v2350 = vand.u32 %v44, 4294901760
    %v2351 = vsub.f32 %v44, %v2350
    %v2352 = vand.u32 %v2351, 4294901760
    %v2353 = vsub.f32 %v2351, %v2352
    %v2354 = vand.u32 %v2353, 4294901760
    %2355 = vmatpush1.msra.mxu0 %v2354
    %2356 = vmatprep.subr.mxu0 0.0
    %v2357 = vand.u32 %v45, 4294901760
    %v2358 = vsub.f32 %v45, %v2357
    %v2359 = vand.u32 %v2358, 4294901760
    %v2360 = vsub.f32 %v2358, %v2359
    %v2361 = vand.u32 %v2360, 4294901760
    %2362 = vmatpush1.msra.mxu0 %v2361
    %2363 = vmatprep.subr.mxu0 0.0
    %v2364 = vand.u32 %v46, 4294901760
    %v2365 = vsub.f32 %v46, %v2364
    %v2366 = vand.u32 %v2365, 4294901760
    %v2367 = vsub.f32 %v2365, %v2366
    %v2368 = vand.u32 %v2367, 4294901760
    %2369 = vmatpush1.msra.mxu0 %v2368
    %2370 = vmatprep.subr.mxu0 0.0
    %2371 = vmatpush1.msra.mxu0 0.0
    %2372 = vmatprep.subr.mxu0 0.0
    %2373 = vmatpush1.msra.mxu0 0.0
    %2374 = vmatprep.subr.mxu0 0.0
    %2375 = vmatpush1.msra.mxu0 0.0
    %2376 = vmatprep.subr.mxu0 0.0
    %2377 = vmatpush1.msra.mxu0 0.0
    %2378 = vmatprep.subr.mxu0 0.0
    %2379 = vmatpush1.msra.mxu0 0.0
    %2380 = vmatprep.subr.mxu0 0.0
    %2381 = vmatpush1.msra.mxu0 0.0
    %2382 = vmatprep.subr.mxu0 0.0
    %2383 = vmatpush1.msra.mxu0 0.0
    %2384 = vmatprep.subr.mxu0 0.0
    %2385 = vmatpush1.msra.mxu0 0.0
    %2386 = vmatprep.subr.mxu0 0.0
    %2387 = vmatpush1.msra.mxu0 0.0
    %2388 = vmatprep.subr.mxu0 0.0
    %2389 = vmatpush1.msra.mxu0 0.0
    %2390 = vmatprep.subr.mxu0 0.0
    %2391 = vmatpush1.msra.mxu0 0.0
    %2392 = vmatprep.subr.mxu0 0.0
    %2393 = vmatpush1.msra.mxu0 0.0
    %2394 = vmatprep.subr.mxu0 0.0
    %2395 = vmatpush1.msra.mxu0 0.0
    %2396 = vmatprep.subr.mxu0 0.0
    %2397 = vmatpush1.msra.mxu0 0.0
    %2398 = vmatprep.subr.mxu0 0.0
    %2399 = vmatpush1.msra.mxu0 0.0
    %2400 = vmatprep.subr.mxu0 0.0
    %2401 = vmatpush1.msra.mxu0 0.0
    %2402 = vmatprep.mubr.f32.mxu0 0.0
    %v2403 = vand.u32 %v2155, 4294901760
    %2404 = vmatmul.mubr.f32.gmra.mrb[0].mxu0 %v2403
    %v2405 = vpop.f32.mrb[0].mxu0
    %v2406 = vadd.f32 %v2245, %v2405
    %v2407 = vpop.f32.mrb[0].mxu0
    %2408 = vmatprep.mubr.f32.mxu0 0.0
    %v2409 = vand.u32 %v2156, 4294901760
    %2410 = vmatmul.mubr.f32.gmra.mrb[0].mxu0 %v2409
    %v2411 = vpop.f32.mrb[0].mxu0
    %v2412 = vadd.f32 %v2255, %v2411
    %v2413 = vpop.f32.mrb[0].mxu0
    %2414 = vdwg.mxu0
    %2415 = vmatprep.subr.mxu0 0.0
    %v2416 = vand.u32 %v31, 4294901760
    %v2417 = vsub.f32 %v31, %v2416
    %2418 = vmatpush1.msra.mxu0 %v2417
    %2419 = vmatprep.subr.mxu0 0.0
    %v2420 = vand.u32 %v32, 4294901760
    %v2421 = vsub.f32 %v32, %v2420
    %2422 = vmatpush1.msra.mxu0 %v2421
    %2423 = vmatprep.subr.mxu0 0.0
    %v2424 = vand.u32 %v33, 4294901760
    %v2425 = vsub.f32 %v33, %v2424
    %2426 = vmatpush1.msra.mxu0 %v2425
    %2427 = vmatprep.subr.mxu0 0.0
    %v2428 = vand.u32 %v34, 4294901760
    %v2429 = vsub.f32 %v34, %v2428
    %2430 = vmatpush1.msra.mxu0 %v2429
    %2431 = vmatprep.subr.mxu0 0.0
    %v2432 = vand.u32 %v35, 4294901760
    %v2433 = vsub.f32 %v35, %v2432
    %2434 = vmatpush1.msra.mxu0 %v2433
    %2435 = vmatprep.subr.mxu0 0.0
    %v2436 = vand.u32 %v36, 4294901760
    %v2437 = vsub.f32 %v36, %v2436
    %2438 = vmatpush1.msra.mxu0 %v2437
    %2439 = vmatprep.subr.mxu0 0.0
    %v2440 = vand.u32 %v37, 4294901760
    %v2441 = vsub.f32 %v37, %v2440
    %2442 = vmatpush1.msra.mxu0 %v2441
    %2443 = vmatprep.subr.mxu0 0.0
    %v2444 = vand.u32 %v38, 4294901760
    %v2445 = vsub.f32 %v38, %v2444
    %2446 = vmatpush1.msra.mxu0 %v2445
    %2447 = vmatprep.subr.mxu0 0.0
    %v2448 = vand.u32 %v39, 4294901760
    %v2449 = vsub.f32 %v39, %v2448
    %2450 = vmatpush1.msra.mxu0 %v2449
    %2451 = vmatprep.subr.mxu0 0.0
    %v2452 = vand.u32 %v40, 4294901760
    %v2453 = vsub.f32 %v40, %v2452
    %2454 = vmatpush1.msra.mxu0 %v2453
    %2455 = vmatprep.subr.mxu0 0.0
    %v2456 = vand.u32 %v41, 4294901760
    %v2457 = vsub.f32 %v41, %v2456
    %2458 = vmatpush1.msra.mxu0 %v2457
    %2459 = vmatprep.subr.mxu0 0.0
    %v2460 = vand.u32 %v42, 4294901760
    %v2461 = vsub.f32 %v42, %v2460
    %2462 = vmatpush1.msra.mxu0 %v2461
    %2463 = vmatprep.subr.mxu0 0.0
    %v2464 = vand.u32 %v43, 4294901760
    %v2465 = vsub.f32 %v43, %v2464
    %2466 = vmatpush1.msra.mxu0 %v2465
    %2467 = vmatprep.subr.mxu0 0.0
    %v2468 = vand.u32 %v44, 4294901760
    %v2469 = vsub.f32 %v44, %v2468
    %2470 = vmatpush1.msra.mxu0 %v2469
    %2471 = vmatprep.subr.mxu0 0.0
    %v2472 = vand.u32 %v45, 4294901760
    %v2473 = vsub.f32 %v45, %v2472
    %2474 = vmatpush1.msra.mxu0 %v2473
    %2475 = vmatprep.subr.mxu0 0.0
    %v2476 = vand.u32 %v46, 4294901760
    %v2477 = vsub.f32 %v46, %v2476
    %2478 = vmatpush1.msra.mxu0 %v2477
    %2479 = vmatprep.subr.mxu0 0.0
    %2480 = vmatpush1.msra.mxu0 0.0
    %2481 = vmatprep.subr.mxu0 0.0
    %2482 = vmatpush1.msra.mxu0 0.0
    %2483 = vmatprep.subr.mxu0 0.0
    %2484 = vmatpush1.msra.mxu0 0.0
    %2485 = vmatprep.subr.mxu0 0.0
    %2486 = vmatpush1.msra.mxu0 0.0
    %2487 = vmatprep.subr.mxu0 0.0
    %2488 = vmatpush1.msra.mxu0 0.0
    %2489 = vmatprep.subr.mxu0 0.0
    %2490 = vmatpush1.msra.mxu0 0.0
    %2491 = vmatprep.subr.mxu0 0.0
    %2492 = vmatpush1.msra.mxu0 0.0
    %2493 = vmatprep.subr.mxu0 0.0
    %2494 = vmatpush1.msra.mxu0 0.0
    %2495 = vmatprep.subr.mxu0 0.0
    %2496 = vmatpush1.msra.mxu0 0.0
    %2497 = vmatprep.subr.mxu0 0.0
    %2498 = vmatpush1.msra.mxu0 0.0
    %2499 = vmatprep.subr.mxu0 0.0
    %2500 = vmatpush1.msra.mxu0 0.0
    %2501 = vmatprep.subr.mxu0 0.0
    %2502 = vmatpush1.msra.mxu0 0.0
    %2503 = vmatprep.subr.mxu0 0.0
    %2504 = vmatpush1.msra.mxu0 0.0
    %2505 = vmatprep.subr.mxu0 0.0
    %2506 = vmatpush1.msra.mxu0 0.0
    %2507 = vmatprep.subr.mxu0 0.0
    %2508 = vmatpush1.msra.mxu0 0.0
    %2509 = vmatprep.subr.mxu0 0.0
    %2510 = vmatpush1.msra.mxu0 0.0
    %2511 = vmatprep.mubr.f32.mxu0 0.0
    %v2512 = vand.u32 %v2155, 4294901760
    %v2513 = vsub.f32 %v2155, %v2512
    %2514 = vmatmul.mubr.f32.gmra.mrb[0].mxu0 %v2513
    %v2515 = vpop.f32.mrb[0].mxu0
    %v2516 = vadd.f32 %v2406, %v2515
    %v2517 = vpop.f32.mrb[0].mxu0
    %2518 = vmatprep.mubr.f32.mxu0 0.0
    %v2519 = vand.u32 %v2156, 4294901760
    %v2520 = vsub.f32 %v2156, %v2519
    %2521 = vmatmul.mubr.f32.gmra.mrb[0].mxu0 %v2520
    %v2522 = vpop.f32.mrb[0].mxu0
    %v2523 = vadd.f32 %v2412, %v2522
    %v2524 = vpop.f32.mrb[0].mxu0
    %2525 = vdwg.mxu0
    %2526 = vmatprep.subr.mxu0 0.0
    %v2527 = vand.u32 %v31, 4294901760
    %2528 = vmatpush1.msra.mxu0 %v2527
    %2529 = vmatprep.subr.mxu0 0.0
    %v2530 = vand.u32 %v32, 4294901760
    %2531 = vmatpush1.msra.mxu0 %v2530
    %2532 = vmatprep.subr.mxu0 0.0
    %v2533 = vand.u32 %v33, 4294901760
    %2534 = vmatpush1.msra.mxu0 %v2533
    %2535 = vmatprep.subr.mxu0 0.0
    %v2536 = vand.u32 %v34, 4294901760
    %2537 = vmatpush1.msra.mxu0 %v2536
    %2538 = vmatprep.subr.mxu0 0.0
    %v2539 = vand.u32 %v35, 4294901760
    %2540 = vmatpush1.msra.mxu0 %v2539
    %2541 = vmatprep.subr.mxu0 0.0
    %v2542 = vand.u32 %v36, 4294901760
    %2543 = vmatpush1.msra.mxu0 %v2542
    %2544 = vmatprep.subr.mxu0 0.0
    %v2545 = vand.u32 %v37, 4294901760
    %2546 = vmatpush1.msra.mxu0 %v2545
    %2547 = vmatprep.subr.mxu0 0.0
    %v2548 = vand.u32 %v38, 4294901760
    %2549 = vmatpush1.msra.mxu0 %v2548
    %2550 = vmatprep.subr.mxu0 0.0
    %v2551 = vand.u32 %v39, 4294901760
    %2552 = vmatpush1.msra.mxu0 %v2551
    %2553 = vmatprep.subr.mxu0 0.0
    %v2554 = vand.u32 %v40, 4294901760
    %2555 = vmatpush1.msra.mxu0 %v2554
    %2556 = vmatprep.subr.mxu0 0.0
    %v2557 = vand.u32 %v41, 4294901760
    %2558 = vmatpush1.msra.mxu0 %v2557
    %2559 = vmatprep.subr.mxu0 0.0
    %v2560 = vand.u32 %v42, 4294901760
    %2561 = vmatpush1.msra.mxu0 %v2560
    %2562 = vmatprep.subr.mxu0 0.0
    %v2563 = vand.u32 %v43, 4294901760
    %2564 = vmatpush1.msra.mxu0 %v2563
    %2565 = vmatprep.subr.mxu0 0.0
    %v2566 = vand.u32 %v44, 4294901760
    %2567 = vmatpush1.msra.mxu0 %v2566
    %2568 = vmatprep.subr.mxu0 0.0
    %v2569 = vand.u32 %v45, 4294901760
    %2570 = vmatpush1.msra.mxu0 %v2569
    %2571 = vmatprep.subr.mxu0 0.0
    %v2572 = vand.u32 %v46, 4294901760
    %2573 = vmatpush1.msra.mxu0 %v2572
    %2574 = vmatprep.subr.mxu0 0.0
    %2575 = vmatpush1.msra.mxu0 0.0
    %2576 = vmatprep.subr.mxu0 0.0
    %2577 = vmatpush1.msra.mxu0 0.0
    %2578 = vmatprep.subr.mxu0 0.0
    %2579 = vmatpush1.msra.mxu0 0.0
    %2580 = vmatprep.subr.mxu0 0.0
    %2581 = vmatpush1.msra.mxu0 0.0
    %2582 = vmatprep.subr.mxu0 0.0
    %2583 = vmatpush1.msra.mxu0 0.0
    %2584 = vmatprep.subr.mxu0 0.0
    %2585 = vmatpush1.msra.mxu0 0.0
    %2586 = vmatprep.subr.mxu0 0.0
    %2587 = vmatpush1.msra.mxu0 0.0
    %2588 = vmatprep.subr.mxu0 0.0
    %2589 = vmatpush1.msra.mxu0 0.0
    %2590 = vmatprep.subr.mxu0 0.0
    %2591 = vmatpush1.msra.mxu0 0.0
    %2592 = vmatprep.subr.mxu0 0.0
    %2593 = vmatpush1.msra.mxu0 0.0
    %2594 = vmatprep.subr.mxu0 0.0
    %2595 = vmatpush1.msra.mxu0 0.0
    %2596 = vmatprep.subr.mxu0 0.0
    %2597 = vmatpush1.msra.mxu0 0.0
    %2598 = vmatprep.subr.mxu0 0.0
    %2599 = vmatpush1.msra.mxu0 0.0
    %2600 = vmatprep.subr.mxu0 0.0
    %2601 = vmatpush1.msra.mxu0 0.0
    %2602 = vmatprep.subr.mxu0 0.0
    %2603 = vmatpush1.msra.mxu0 0.0
    %2604 = vmatprep.subr.mxu0 0.0
    %2605 = vmatpush1.msra.mxu0 0.0
    %2606 = vmatprep.mubr.f32.mxu0 0.0
    %v2607 = vand.u32 %v2155, 4294901760
    %v2608 = vsub.f32 %v2155, %v2607
    %v2609 = vand.u32 %v2608, 4294901760
    %2610 = vmatmul.mubr.f32.gmra.mrb[0].mxu0 %v2609
    %v2611 = vpop.f32.mrb[0].mxu0
    %v2612 = vadd.f32 %v2516, %v2611
    %v2613 = vpop.f32.mrb[0].mxu0
    %2614 = vmatprep.mubr.f32.mxu0 0.0
    %v2615 = vand.u32 %v2156, 4294901760
    %v2616 = vsub.f32 %v2156, %v2615
    %v2617 = vand.u32 %v2616, 4294901760
    %2618 = vmatmul.mubr.f32.gmra.mrb[0].mxu0 %v2617
    %v2619 = vpop.f32.mrb[0].mxu0
    %v2620 = vadd.f32 %v2523, %v2619
    %v2621 = vpop.f32.mrb[0].mxu0
    %2622 = vdwg.mxu0
    %2623 = vmatprep.subr.mxu0 0.0
    %v2624 = vand.u32 %v31, 4294901760
    %v2625 = vsub.f32 %v31, %v2624
    %v2626 = vand.u32 %v2625, 4294901760
    %2627 = vmatpush1.msra.mxu0 %v2626
    %2628 = vmatprep.subr.mxu0 0.0
    %v2629 = vand.u32 %v32, 4294901760
    %v2630 = vsub.f32 %v32, %v2629
    %v2631 = vand.u32 %v2630, 4294901760
    %2632 = vmatpush1.msra.mxu0 %v2631
    %2633 = vmatprep.subr.mxu0 0.0
    %v2634 = vand.u32 %v33, 4294901760
    %v2635 = vsub.f32 %v33, %v2634
    %v2636 = vand.u32 %v2635, 4294901760
    %2637 = vmatpush1.msra.mxu0 %v2636
    %2638 = vmatprep.subr.mxu0 0.0
    %v2639 = vand.u32 %v34, 4294901760
    %v2640 = vsub.f32 %v34, %v2639
    %v2641 = vand.u32 %v2640, 4294901760
    %2642 = vmatpush1.msra.mxu0 %v2641
    %2643 = vmatprep.subr.mxu0 0.0
    %v2644 = vand.u32 %v35, 4294901760
    %v2645 = vsub.f32 %v35, %v2644
    %v2646 = vand.u32 %v2645, 4294901760
    %2647 = vmatpush1.msra.mxu0 %v2646
    %2648 = vmatprep.subr.mxu0 0.0
    %v2649 = vand.u32 %v36, 4294901760
    %v2650 = vsub.f32 %v36, %v2649
    %v2651 = vand.u32 %v2650, 4294901760
    %2652 = vmatpush1.msra.mxu0 %v2651
    %2653 = vmatprep.subr.mxu0 0.0
    %v2654 = vand.u32 %v37, 4294901760
    %v2655 = vsub.f32 %v37, %v2654
    %v2656 = vand.u32 %v2655, 4294901760
    %2657 = vmatpush1.msra.mxu0 %v2656
    %2658 = vmatprep.subr.mxu0 0.0
    %v2659 = vand.u32 %v38, 4294901760
    %v2660 = vsub.f32 %v38, %v2659
    %v2661 = vand.u32 %v2660, 4294901760
    %2662 = vmatpush1.msra.mxu0 %v2661
    %2663 = vmatprep.subr.mxu0 0.0
    %v2664 = vand.u32 %v39, 4294901760
    %v2665 = vsub.f32 %v39, %v2664
    %v2666 = vand.u32 %v2665, 4294901760
    %2667 = vmatpush1.msra.mxu0 %v2666
    %2668 = vmatprep.subr.mxu0 0.0
    %v2669 = vand.u32 %v40, 4294901760
    %v2670 = vsub.f32 %v40, %v2669
    %v2671 = vand.u32 %v2670, 4294901760
    %2672 = vmatpush1.msra.mxu0 %v2671
    %2673 = vmatprep.subr.mxu0 0.0
    %v2674 = vand.u32 %v41, 4294901760
    %v2675 = vsub.f32 %v41, %v2674
    %v2676 = vand.u32 %v2675, 4294901760
    %2677 = vmatpush1.msra.mxu0 %v2676
    %2678 = vmatprep.subr.mxu0 0.0
    %v2679 = vand.u32 %v42, 4294901760
    %v2680 = vsub.f32 %v42, %v2679
    %v2681 = vand.u32 %v2680, 4294901760
    %2682 = vmatpush1.msra.mxu0 %v2681
    %2683 = vmatprep.subr.mxu0 0.0
    %v2684 = vand.u32 %v43, 4294901760
    %v2685 = vsub.f32 %v43, %v2684
    %v2686 = vand.u32 %v2685, 4294901760
    %2687 = vmatpush1.msra.mxu0 %v2686
    %2688 = vmatprep.subr.mxu0 0.0
    %v2689 = vand.u32 %v44, 4294901760
    %v2690 = vsub.f32 %v44, %v2689
    %v2691 = vand.u32 %v2690, 4294901760
    %2692 = vmatpush1.msra.mxu0 %v2691
    %2693 = vmatprep.subr.mxu0 0.0
    %v2694 = vand.u32 %v45, 4294901760
    %v2695 = vsub.f32 %v45, %v2694
    %v2696 = vand.u32 %v2695, 4294901760
    %2697 = vmatpush1.msra.mxu0 %v2696
    %2698 = vmatprep.subr.mxu0 0.0
    %v2699 = vand.u32 %v46, 4294901760
    %v2700 = vsub.f32 %v46, %v2699
    %v2701 = vand.u32 %v2700, 4294901760
    %2702 = vmatpush1.msra.mxu0 %v2701
    %2703 = vmatprep.subr.mxu0 0.0
    %2704 = vmatpush1.msra.mxu0 0.0
    %2705 = vmatprep.subr.mxu0 0.0
    %2706 = vmatpush1.msra.mxu0 0.0
    %2707 = vmatprep.subr.mxu0 0.0
    %2708 = vmatpush1.msra.mxu0 0.0
    %2709 = vmatprep.subr.mxu0 0.0
    %2710 = vmatpush1.msra.mxu0 0.0
    %2711 = vmatprep.subr.mxu0 0.0
    %2712 = vmatpush1.msra.mxu0 0.0
    %2713 = vmatprep.subr.mxu0 0.0
    %2714 = vmatpush1.msra.mxu0 0.0
    %2715 = vmatprep.subr.mxu0 0.0
    %2716 = vmatpush1.msra.mxu0 0.0
    %2717 = vmatprep.subr.mxu0 0.0
    %2718 = vmatpush1.msra.mxu0 0.0
    %2719 = vmatprep.subr.mxu0 0.0
    %2720 = vmatpush1.msra.mxu0 0.0
    %2721 = vmatprep.subr.mxu0 0.0
    %2722 = vmatpush1.msra.mxu0 0.0
    %2723 = vmatprep.subr.mxu0 0.0
    %2724 = vmatpush1.msra.mxu0 0.0
    %2725 = vmatprep.subr.mxu0 0.0
    %2726 = vmatpush1.msra.mxu0 0.0
    %2727 = vmatprep.subr.mxu0 0.0
    %2728 = vmatpush1.msra.mxu0 0.0
    %2729 = vmatprep.subr.mxu0 0.0
    %2730 = vmatpush1.msra.mxu0 0.0
    %2731 = vmatprep.subr.mxu0 0.0
    %2732 = vmatpush1.msra.mxu0 0.0
    %2733 = vmatprep.subr.mxu0 0.0
    %2734 = vmatpush1.msra.mxu0 0.0
    %2735 = vmatprep.mubr.f32.mxu0 0.0
    %v2736 = vand.u32 %v2155, 4294901760
    %2737 = vmatmul.mubr.f32.gmra.mrb[0].mxu0 %v2736
    %v2738 = vpop.f32.mrb[0].mxu0
    %v2739 = vadd.f32 %v2612, %v2738
    %v2740 = vpop.f32.mrb[0].mxu0
    %2741 = vmatprep.mubr.f32.mxu0 0.0
    %v2742 = vand.u32 %v2156, 4294901760
    %2743 = vmatmul.mubr.f32.gmra.mrb[0].mxu0 %v2742
    %v2744 = vpop.f32.mrb[0].mxu0
    %v2745 = vadd.f32 %v2620, %v2744
    %v2746 = vpop.f32.mrb[0].mxu0
    %2747 = vdwg.mxu0
    %2748 = vmatprep.subr.mxu0 0.0
    %v2749 = vand.u32 %v31, 4294901760
    %2750 = vmatpush1.msra.mxu0 %v2749
    %2751 = vmatprep.subr.mxu0 0.0
    %v2752 = vand.u32 %v32, 4294901760
    %2753 = vmatpush1.msra.mxu0 %v2752
    %2754 = vmatprep.subr.mxu0 0.0
    %v2755 = vand.u32 %v33, 4294901760
    %2756 = vmatpush1.msra.mxu0 %v2755
    %2757 = vmatprep.subr.mxu0 0.0
    %v2758 = vand.u32 %v34, 4294901760
    %2759 = vmatpush1.msra.mxu0 %v2758
    %2760 = vmatprep.subr.mxu0 0.0
    %v2761 = vand.u32 %v35, 4294901760
    %2762 = vmatpush1.msra.mxu0 %v2761
    %2763 = vmatprep.subr.mxu0 0.0
    %v2764 = vand.u32 %v36, 4294901760
    %2765 = vmatpush1.msra.mxu0 %v2764
    %2766 = vmatprep.subr.mxu0 0.0
    %v2767 = vand.u32 %v37, 4294901760
    %2768 = vmatpush1.msra.mxu0 %v2767
    %2769 = vmatprep.subr.mxu0 0.0
    %v2770 = vand.u32 %v38, 4294901760
    %2771 = vmatpush1.msra.mxu0 %v2770
    %2772 = vmatprep.subr.mxu0 0.0
    %v2773 = vand.u32 %v39, 4294901760
    %2774 = vmatpush1.msra.mxu0 %v2773
    %2775 = vmatprep.subr.mxu0 0.0
    %v2776 = vand.u32 %v40, 4294901760
    %2777 = vmatpush1.msra.mxu0 %v2776
    %2778 = vmatprep.subr.mxu0 0.0
    %v2779 = vand.u32 %v41, 4294901760
    %2780 = vmatpush1.msra.mxu0 %v2779
    %2781 = vmatprep.subr.mxu0 0.0
    %v2782 = vand.u32 %v42, 4294901760
    %2783 = vmatpush1.msra.mxu0 %v2782
    %2784 = vmatprep.subr.mxu0 0.0
    %v2785 = vand.u32 %v43, 4294901760
    %2786 = vmatpush1.msra.mxu0 %v2785
    %2787 = vmatprep.subr.mxu0 0.0
    %v2788 = vand.u32 %v44, 4294901760
    %2789 = vmatpush1.msra.mxu0 %v2788
    %2790 = vmatprep.subr.mxu0 0.0
    %v2791 = vand.u32 %v45, 4294901760
    %2792 = vmatpush1.msra.mxu0 %v2791
    %2793 = vmatprep.subr.mxu0 0.0
    %v2794 = vand.u32 %v46, 4294901760
    %2795 = vmatpush1.msra.mxu0 %v2794
    %2796 = vmatprep.subr.mxu0 0.0
    %2797 = vmatpush1.msra.mxu0 0.0
    %2798 = vmatprep.subr.mxu0 0.0
    %2799 = vmatpush1.msra.mxu0 0.0
    %2800 = vmatprep.subr.mxu0 0.0
    %2801 = vmatpush1.msra.mxu0 0.0
    %2802 = vmatprep.subr.mxu0 0.0
    %2803 = vmatpush1.msra.mxu0 0.0
    %2804 = vmatprep.subr.mxu0 0.0
    %2805 = vmatpush1.msra.mxu0 0.0
    %2806 = vmatprep.subr.mxu0 0.0
    %2807 = vmatpush1.msra.mxu0 0.0
    %2808 = vmatprep.subr.mxu0 0.0
    %2809 = vmatpush1.msra.mxu0 0.0
    %2810 = vmatprep.subr.mxu0 0.0
    %2811 = vmatpush1.msra.mxu0 0.0
    %2812 = vmatprep.subr.mxu0 0.0
    %2813 = vmatpush1.msra.mxu0 0.0
    %2814 = vmatprep.subr.mxu0 0.0
    %2815 = vmatpush1.msra.mxu0 0.0
    %2816 = vmatprep.subr.mxu0 0.0
    %2817 = vmatpush1.msra.mxu0 0.0
    %2818 = vmatprep.subr.mxu0 0.0
    %2819 = vmatpush1.msra.mxu0 0.0
    %2820 = vmatprep.subr.mxu0 0.0
    %2821 = vmatpush1.msra.mxu0 0.0
    %2822 = vmatprep.subr.mxu0 0.0
    %2823 = vmatpush1.msra.mxu0 0.0
    %2824 = vmatprep.subr.mxu0 0.0
    %2825 = vmatpush1.msra.mxu0 0.0
    %2826 = vmatprep.subr.mxu0 0.0
    %2827 = vmatpush1.msra.mxu0 0.0
    %2828 = vmatprep.mubr.f32.mxu0 0.0
    %v2829 = vand.u32 %v2155, 4294901760
    %2830 = vmatmul.mubr.f32.gmra.mrb[0].mxu0 %v2829
    %v2831 = vpop.f32.mrb[0].mxu0
    %v2832 = vadd.f32 %v2739, %v2831
    %v2833 = vpop.f32.mrb[0].mxu0
    %2834 = vmatprep.mubr.f32.mxu0 0.0
    %v2835 = vand.u32 %v2156, 4294901760
    %2836 = vmatmul.mubr.f32.gmra.mrb[0].mxu0 %v2835
    %v2837 = vpop.f32.mrb[0].mxu0
    %v2838 = vadd.f32 %v2745, %v2837
    %v2839 = vpop.f32.mrb[0].mxu0
    %2840 = vdwg.mxu0
    %2841 = vst [vmem:[#allocation5 + $0x18] sm:$0xff] %v2832
    %2842 = vst [vmem:[#allocation5 + $0x58] sm:$0xff] %v2838
    %2843 = vset.pattern.permute.xlu0 4
    %2844 = vperm.xlu0 %2843, %v29
    %v2845 = vpop.permute.xlu0 %2844
    %2846 = vset.pattern.permute.xlu0 4
    %2847 = vperm.xlu0 %2846, %v30
    %v2848 = vpop.permute.xlu0 %2847
    %vm2849 = vcmp.eq.s32.totalorder %v2845, %v50
    %vm2850 = vcmp.eq.s32.totalorder %v2848, %v50
    %v2851 = vsel %vm2849, 1, 0
    %v2852 = vsel %vm2850, 1, 0
    %v2853 = vcvt.s32.f32 %v2851
    %v2854 = vcvt.s32.f32 %v2852
    %2855 = vmatprep.subr.mxu0 0.0
    %v2856 = vand.u32 %v31, 4294901760
    %2857 = vmatpush1.msra.mxu0 %v2856
    %2858 = vmatprep.subr.mxu0 0.0
    %v2859 = vand.u32 %v32, 4294901760
    %2860 = vmatpush1.msra.mxu0 %v2859
    %2861 = vmatprep.subr.mxu0 0.0
    %v2862 = vand.u32 %v33, 4294901760
    %2863 = vmatpush1.msra.mxu0 %v2862
    %2864 = vmatprep.subr.mxu0 0.0
    %v2865 = vand.u32 %v34, 4294901760
    %2866 = vmatpush1.msra.mxu0 %v2865
    %2867 = vmatprep.subr.mxu0 0.0
    %v2868 = vand.u32 %v35, 4294901760
    %2869 = vmatpush1.msra.mxu0 %v2868
    %2870 = vmatprep.subr.mxu0 0.0
    %v2871 = vand.u32 %v36, 4294901760
    %2872 = vmatpush1.msra.mxu0 %v2871
    %2873 = vmatprep.subr.mxu0 0.0
    %v2874 = vand.u32 %v37, 4294901760
    %2875 = vmatpush1.msra.mxu0 %v2874
    %2876 = vmatprep.subr.mxu0 0.0
    %v2877 = vand.u32 %v38, 4294901760
    %2878 = vmatpush1.msra.mxu0 %v2877
    %2879 = vmatprep.subr.mxu0 0.0
    %v2880 = vand.u32 %v39, 4294901760
    %2881 = vmatpush1.msra.mxu0 %v2880
    %2882 = vmatprep.subr.mxu0 0.0
    %v2883 = vand.u32 %v40, 4294901760
    %2884 = vmatpush1.msra.mxu0 %v2883
    %2885 = vmatprep.subr.mxu0 0.0
    %v2886 = vand.u32 %v41, 4294901760
    %2887 = vmatpush1.msra.mxu0 %v2886
    %2888 = vmatprep.subr.mxu0 0.0
    %v2889 = vand.u32 %v42, 4294901760
    %2890 = vmatpush1.msra.mxu0 %v2889
    %2891 = vmatprep.subr.mxu0 0.0
    %v2892 = vand.u32 %v43, 4294901760
    %2893 = vmatpush1.msra.mxu0 %v2892
    %2894 = vmatprep.subr.mxu0 0.0
    %v2895 = vand.u32 %v44, 4294901760
    %2896 = vmatpush1.msra.mxu0 %v2895
    %2897 = vmatprep.subr.mxu0 0.0
    %v2898 = vand.u32 %v45, 4294901760
    %2899 = vmatpush1.msra.mxu0 %v2898
    %2900 = vmatprep.subr.mxu0 0.0
    %v2901 = vand.u32 %v46, 4294901760
    %2902 = vmatpush1.msra.mxu0 %v2901
    %2903 = vmatprep.subr.mxu0 0.0
    %2904 = vmatpush1.msra.mxu0 0.0
    %2905 = vmatprep.subr.mxu0 0.0
    %2906 = vmatpush1.msra.mxu0 0.0
    %2907 = vmatprep.subr.mxu0 0.0
    %2908 = vmatpush1.msra.mxu0 0.0
    %2909 = vmatprep.subr.mxu0 0.0
    %2910 = vmatpush1.msra.mxu0 0.0
    %2911 = vmatprep.subr.mxu0 0.0
    %2912 = vmatpush1.msra.mxu0 0.0
    %2913 = vmatprep.subr.mxu0 0.0
    %2914 = vmatpush1.msra.mxu0 0.0
    %2915 = vmatprep.subr.mxu0 0.0
    %2916 = vmatpush1.msra.mxu0 0.0
    %2917 = vmatprep.subr.mxu0 0.0
    %2918 = vmatpush1.msra.mxu0 0.0
    %2919 = vmatprep.subr.mxu0 0.0
    %2920 = vmatpush1.msra.mxu0 0.0
    %2921 = vmatprep.subr.mxu0 0.0
    %2922 = vmatpush1.msra.mxu0 0.0
    %2923 = vmatprep.subr.mxu0 0.0
    %2924 = vmatpush1.msra.mxu0 0.0
    %2925 = vmatprep.subr.mxu0 0.0
    %2926 = vmatpush1.msra.mxu0 0.0
    %2927 = vmatprep.subr.mxu0 0.0
    %2928 = vmatpush1.msra.mxu0 0.0
    %2929 = vmatprep.subr.mxu0 0.0
    %2930 = vmatpush1.msra.mxu0 0.0
    %2931 = vmatprep.subr.mxu0 0.0
    %2932 = vmatpush1.msra.mxu0 0.0
    %2933 = vmatprep.subr.mxu0 0.0
    %2934 = vmatpush1.msra.mxu0 0.0
    %2935 = vmatprep.mubr.f32.mxu0 0.0
    %v2936 = vand.u32 %v2853, 4294901760
    %v2937 = vsub.f32 %v2853, %v2936
    %v2938 = vand.u32 %v2937, 4294901760
    %v2939 = vsub.f32 %v2937, %v2938
    %v2940 = vand.u32 %v2939, 4294901760
    %2941 = vmatmul.mubr.f32.gmra.mrb[0].mxu0 %v2940
    %v2942 = vpop.f32.mrb[0].mxu0
    %v2943 = vadd.f32 %v47, %v2942
    %v2944 = vpop.f32.mrb[0].mxu0
    %2945 = vmatprep.mubr.f32.mxu0 0.0
    %v2946 = vand.u32 %v2854, 4294901760
    %v2947 = vsub.f32 %v2854, %v2946
    %v2948 = vand.u32 %v2947, 4294901760
    %v2949 = vsub.f32 %v2947, %v2948
    %v2950 = vand.u32 %v2949, 4294901760
    %2951 = vmatmul.mubr.f32.gmra.mrb[0].mxu0 %v2950
    %v2952 = vpop.f32.mrb[0].mxu0
    %v2953 = vadd.f32 %v48, %v2952
    %v2954 = vpop.f32.mrb[0].mxu0
    %2955 = vdwg.mxu0
    %2956 = vmatprep.subr.mxu0 0.0
    %v2957 = vand.u32 %v31, 4294901760
    %v2958 = vsub.f32 %v31, %v2957
    %v2959 = vand.u32 %v2958, 4294901760
    %v2960 = vsub.f32 %v2958, %v2959
    %v2961 = vand.u32 %v2960, 4294901760
    %2962 = vmatpush1.msra.mxu0 %v2961
    %2963 = vmatprep.subr.mxu0 0.0
    %v2964 = vand.u32 %v32, 4294901760
    %v2965 = vsub.f32 %v32, %v2964
    %v2966 = vand.u32 %v2965, 4294901760
    %v2967 = vsub.f32 %v2965, %v2966
    %v2968 = vand.u32 %v2967, 4294901760
    %2969 = vmatpush1.msra.mxu0 %v2968
    %2970 = vmatprep.subr.mxu0 0.0
    %v2971 = vand.u32 %v33, 4294901760
    %v2972 = vsub.f32 %v33, %v2971
    %v2973 = vand.u32 %v2972, 4294901760
    %v2974 = vsub.f32 %v2972, %v2973
    %v2975 = vand.u32 %v2974, 4294901760
    %2976 = vmatpush1.msra.mxu0 %v2975
    %2977 = vmatprep.subr.mxu0 0.0
    %v2978 = vand.u32 %v34, 4294901760
    %v2979 = vsub.f32 %v34, %v2978
    %v2980 = vand.u32 %v2979, 4294901760
    %v2981 = vsub.f32 %v2979, %v2980
    %v2982 = vand.u32 %v2981, 4294901760
    %2983 = vmatpush1.msra.mxu0 %v2982
    %2984 = vmatprep.subr.mxu0 0.0
    %v2985 = vand.u32 %v35, 4294901760
    %v2986 = vsub.f32 %v35, %v2985
    %v2987 = vand.u32 %v2986, 4294901760
    %v2988 = vsub.f32 %v2986, %v2987
    %v2989 = vand.u32 %v2988, 4294901760
    %2990 = vmatpush1.msra.mxu0 %v2989
    %2991 = vmatprep.subr.mxu0 0.0
    %v2992 = vand.u32 %v36, 4294901760
    %v2993 = vsub.f32 %v36, %v2992
    %v2994 = vand.u32 %v2993, 4294901760
    %v2995 = vsub.f32 %v2993, %v2994
    %v2996 = vand.u32 %v2995, 4294901760
    %2997 = vmatpush1.msra.mxu0 %v2996
    %2998 = vmatprep.subr.mxu0 0.0
    %v2999 = vand.u32 %v37, 4294901760
    %v3000 = vsub.f32 %v37, %v2999
    %v3001 = vand.u32 %v3000, 4294901760
    %v3002 = vsub.f32 %v3000, %v3001
    %v3003 = vand.u32 %v3002, 4294901760
    %3004 = vmatpush1.msra.mxu0 %v3003
    %3005 = vmatprep.subr.mxu0 0.0
    %v3006 = vand.u32 %v38, 4294901760
    %v3007 = vsub.f32 %v38, %v3006
    %v3008 = vand.u32 %v3007, 4294901760
    %v3009 = vsub.f32 %v3007, %v3008
    %v3010 = vand.u32 %v3009, 4294901760
    %3011 = vmatpush1.msra.mxu0 %v3010
    %3012 = vmatprep.subr.mxu0 0.0
    %v3013 = vand.u32 %v39, 4294901760
    %v3014 = vsub.f32 %v39, %v3013
    %v3015 = vand.u32 %v3014, 4294901760
    %v3016 = vsub.f32 %v3014, %v3015
    %v3017 = vand.u32 %v3016, 4294901760
    %3018 = vmatpush1.msra.mxu0 %v3017
    %3019 = vmatprep.subr.mxu0 0.0
    %v3020 = vand.u32 %v40, 4294901760
    %v3021 = vsub.f32 %v40, %v3020
    %v3022 = vand.u32 %v3021, 4294901760
    %v3023 = vsub.f32 %v3021, %v3022
    %v3024 = vand.u32 %v3023, 4294901760
    %3025 = vmatpush1.msra.mxu0 %v3024
    %3026 = vmatprep.subr.mxu0 0.0
    %v3027 = vand.u32 %v41, 4294901760
    %v3028 = vsub.f32 %v41, %v3027
    %v3029 = vand.u32 %v3028, 4294901760
    %v3030 = vsub.f32 %v3028, %v3029
    %v3031 = vand.u32 %v3030, 4294901760
    %3032 = vmatpush1.msra.mxu0 %v3031
    %3033 = vmatprep.subr.mxu0 0.0
    %v3034 = vand.u32 %v42, 4294901760
    %v3035 = vsub.f32 %v42, %v3034
    %v3036 = vand.u32 %v3035, 4294901760
    %v3037 = vsub.f32 %v3035, %v3036
    %v3038 = vand.u32 %v3037, 4294901760
    %3039 = vmatpush1.msra.mxu0 %v3038
    %3040 = vmatprep.subr.mxu0 0.0
    %v3041 = vand.u32 %v43, 4294901760
    %v3042 = vsub.f32 %v43, %v3041
    %v3043 = vand.u32 %v3042, 4294901760
    %v3044 = vsub.f32 %v3042, %v3043
    %v3045 = vand.u32 %v3044, 4294901760
    %3046 = vmatpush1.msra.mxu0 %v3045
    %3047 = vmatprep.subr.mxu0 0.0
    %v3048 = vand.u32 %v44, 4294901760
    %v3049 = vsub.f32 %v44, %v3048
    %v3050 = vand.u32 %v3049, 4294901760
    %v3051 = vsub.f32 %v3049, %v3050
    %v3052 = vand.u32 %v3051, 4294901760
    %3053 = vmatpush1.msra.mxu0 %v3052
    %3054 = vmatprep.subr.mxu0 0.0
    %v3055 = vand.u32 %v45, 4294901760
    %v3056 = vsub.f32 %v45, %v3055
    %v3057 = vand.u32 %v3056, 4294901760
    %v3058 = vsub.f32 %v3056, %v3057
    %v3059 = vand.u32 %v3058, 4294901760
    %3060 = vmatpush1.msra.mxu0 %v3059
    %3061 = vmatprep.subr.mxu0 0.0
    %v3062 = vand.u32 %v46, 4294901760
    %v3063 = vsub.f32 %v46, %v3062
    %v3064 = vand.u32 %v3063, 4294901760
    %v3065 = vsub.f32 %v3063, %v3064
    %v3066 = vand.u32 %v3065, 4294901760
    %3067 = vmatpush1.msra.mxu0 %v3066
    %3068 = vmatprep.subr.mxu0 0.0
    %3069 = vmatpush1.msra.mxu0 0.0
    %3070 = vmatprep.subr.mxu0 0.0
    %3071 = vmatpush1.msra.mxu0 0.0
    %3072 = vmatprep.subr.mxu0 0.0
    %3073 = vmatpush1.msra.mxu0 0.0
    %3074 = vmatprep.subr.mxu0 0.0
    %3075 = vmatpush1.msra.mxu0 0.0
    %3076 = vmatprep.subr.mxu0 0.0
    %3077 = vmatpush1.msra.mxu0 0.0
    %3078 = vmatprep.subr.mxu0 0.0
    %3079 = vmatpush1.msra.mxu0 0.0
    %3080 = vmatprep.subr.mxu0 0.0
    %3081 = vmatpush1.msra.mxu0 0.0
    %3082 = vmatprep.subr.mxu0 0.0
    %3083 = vmatpush1.msra.mxu0 0.0
    %3084 = vmatprep.subr.mxu0 0.0
    %3085 = vmatpush1.msra.mxu0 0.0
    %3086 = vmatprep.subr.mxu0 0.0
    %3087 = vmatpush1.msra.mxu0 0.0
    %3088 = vmatprep.subr.mxu0 0.0
    %3089 = vmatpush1.msra.mxu0 0.0
    %3090 = vmatprep.subr.mxu0 0.0
    %3091 = vmatpush1.msra.mxu0 0.0
    %3092 = vmatprep.subr.mxu0 0.0
    %3093 = vmatpush1.msra.mxu0 0.0
    %3094 = vmatprep.subr.mxu0 0.0
    %3095 = vmatpush1.msra.mxu0 0.0
    %3096 = vmatprep.subr.mxu0 0.0
    %3097 = vmatpush1.msra.mxu0 0.0
    %3098 = vmatprep.subr.mxu0 0.0
    %3099 = vmatpush1.msra.mxu0 0.0
    %3100 = vmatprep.mubr.f32.mxu0 0.0
    %v3101 = vand.u32 %v2853, 4294901760
    %3102 = vmatmul.mubr.f32.gmra.mrb[0].mxu0 %v3101
    %v3103 = vpop.f32.mrb[0].mxu0
    %v3104 = vadd.f32 %v2943, %v3103
    %v3105 = vpop.f32.mrb[0].mxu0
    %3106 = vmatprep.mubr.f32.mxu0 0.0
    %v3107 = vand.u32 %v2854, 4294901760
    %3108 = vmatmul.mubr.f32.gmra.mrb[0].mxu0 %v3107
    %v3109 = vpop.f32.mrb[0].mxu0
    %v3110 = vadd.f32 %v2953, %v3109
    %v3111 = vpop.f32.mrb[0].mxu0
    %3112 = vdwg.mxu0
    %3113 = vmatprep.subr.mxu0 0.0
    %v3114 = vand.u32 %v31, 4294901760
    %v3115 = vsub.f32 %v31, %v3114
    %3116 = vmatpush1.msra.mxu0 %v3115
    %3117 = vmatprep.subr.mxu0 0.0
    %v3118 = vand.u32 %v32, 4294901760
    %v3119 = vsub.f32 %v32, %v3118
    %3120 = vmatpush1.msra.mxu0 %v3119
    %3121 = vmatprep.subr.mxu0 0.0
    %v3122 = vand.u32 %v33, 4294901760
    %v3123 = vsub.f32 %v33, %v3122
    %3124 = vmatpush1.msra.mxu0 %v3123
    %3125 = vmatprep.subr.mxu0 0.0
    %v3126 = vand.u32 %v34, 4294901760
    %v3127 = vsub.f32 %v34, %v3126
    %3128 = vmatpush1.msra.mxu0 %v3127
    %3129 = vmatprep.subr.mxu0 0.0
    %v3130 = vand.u32 %v35, 4294901760
    %v3131 = vsub.f32 %v35, %v3130
    %3132 = vmatpush1.msra.mxu0 %v3131
    %3133 = vmatprep.subr.mxu0 0.0
    %v3134 = vand.u32 %v36, 4294901760
    %v3135 = vsub.f32 %v36, %v3134
    %3136 = vmatpush1.msra.mxu0 %v3135
    %3137 = vmatprep.subr.mxu0 0.0
    %v3138 = vand.u32 %v37, 4294901760
    %v3139 = vsub.f32 %v37, %v3138
    %3140 = vmatpush1.msra.mxu0 %v3139
    %3141 = vmatprep.subr.mxu0 0.0
    %v3142 = vand.u32 %v38, 4294901760
    %v3143 = vsub.f32 %v38, %v3142
    %3144 = vmatpush1.msra.mxu0 %v3143
    %3145 = vmatprep.subr.mxu0 0.0
    %v3146 = vand.u32 %v39, 4294901760
    %v3147 = vsub.f32 %v39, %v3146
    %3148 = vmatpush1.msra.mxu0 %v3147
    %3149 = vmatprep.subr.mxu0 0.0
    %v3150 = vand.u32 %v40, 4294901760
    %v3151 = vsub.f32 %v40, %v3150
    %3152 = vmatpush1.msra.mxu0 %v3151
    %3153 = vmatprep.subr.mxu0 0.0
    %v3154 = vand.u32 %v41, 4294901760
    %v3155 = vsub.f32 %v41, %v3154
    %3156 = vmatpush1.msra.mxu0 %v3155
    %3157 = vmatprep.subr.mxu0 0.0
    %v3158 = vand.u32 %v42, 4294901760
    %v3159 = vsub.f32 %v42, %v3158
    %3160 = vmatpush1.msra.mxu0 %v3159
    %3161 = vmatprep.subr.mxu0 0.0
    %v3162 = vand.u32 %v43, 4294901760
    %v3163 = vsub.f32 %v43, %v3162
    %3164 = vmatpush1.msra.mxu0 %v3163
    %3165 = vmatprep.subr.mxu0 0.0
    %v3166 = vand.u32 %v44, 4294901760
    %v3167 = vsub.f32 %v44, %v3166
    %3168 = vmatpush1.msra.mxu0 %v3167
    %3169 = vmatprep.subr.mxu0 0.0
    %v3170 = vand.u32 %v45, 4294901760
    %v3171 = vsub.f32 %v45, %v3170
    %3172 = vmatpush1.msra.mxu0 %v3171
    %3173 = vmatprep.subr.mxu0 0.0
    %v3174 = vand.u32 %v46, 4294901760
    %v3175 = vsub.f32 %v46, %v3174
    %3176 = vmatpush1.msra.mxu0 %v3175
    %3177 = vmatprep.subr.mxu0 0.0
    %3178 = vmatpush1.msra.mxu0 0.0
    %3179 = vmatprep.subr.mxu0 0.0
    %3180 = vmatpush1.msra.mxu0 0.0
    %3181 = vmatprep.subr.mxu0 0.0
    %3182 = vmatpush1.msra.mxu0 0.0
    %3183 = vmatprep.subr.mxu0 0.0
    %3184 = vmatpush1.msra.mxu0 0.0
    %3185 = vmatprep.subr.mxu0 0.0
    %3186 = vmatpush1.msra.mxu0 0.0
    %3187 = vmatprep.subr.mxu0 0.0
    %3188 = vmatpush1.msra.mxu0 0.0
    %3189 = vmatprep.subr.mxu0 0.0
    %3190 = vmatpush1.msra.mxu0 0.0
    %3191 = vmatprep.subr.mxu0 0.0
    %3192 = vmatpush1.msra.mxu0 0.0
    %3193 = vmatprep.subr.mxu0 0.0
    %3194 = vmatpush1.msra.mxu0 0.0
    %3195 = vmatprep.subr.mxu0 0.0
    %3196 = vmatpush1.msra.mxu0 0.0
    %3197 = vmatprep.subr.mxu0 0.0
    %3198 = vmatpush1.msra.mxu0 0.0
    %3199 = vmatprep.subr.mxu0 0.0
    %3200 = vmatpush1.msra.mxu0 0.0
    %3201 = vmatprep.subr.mxu0 0.0
    %3202 = vmatpush1.msra.mxu0 0.0
    %3203 = vmatprep.subr.mxu0 0.0
    %3204 = vmatpush1.msra.mxu0 0.0
    %3205 = vmatprep.subr.mxu0 0.0
    %3206 = vmatpush1.msra.mxu0 0.0
    %3207 = vmatprep.subr.mxu0 0.0
    %3208 = vmatpush1.msra.mxu0 0.0
    %3209 = vmatprep.mubr.f32.mxu0 0.0
    %v3210 = vand.u32 %v2853, 4294901760
    %v3211 = vsub.f32 %v2853, %v3210
    %3212 = vmatmul.mubr.f32.gmra.mrb[0].mxu0 %v3211
    %v3213 = vpop.f32.mrb[0].mxu0
    %v3214 = vadd.f32 %v3104, %v3213
    %v3215 = vpop.f32.mrb[0].mxu0
    %3216 = vmatprep.mubr.f32.mxu0 0.0
    %v3217 = vand.u32 %v2854, 4294901760
    %v3218 = vsub.f32 %v2854, %v3217
    %3219 = vmatmul.mubr.f32.gmra.mrb[0].mxu0 %v3218
    %v3220 = vpop.f32.mrb[0].mxu0
    %v3221 = vadd.f32 %v3110, %v3220
    %v3222 = vpop.f32.mrb[0].mxu0
    %3223 = vdwg.mxu0
    %3224 = vmatprep.subr.mxu0 0.0
    %v3225 = vand.u32 %v31, 4294901760
    %3226 = vmatpush1.msra.mxu0 %v3225
    %3227 = vmatprep.subr.mxu0 0.0
    %v3228 = vand.u32 %v32, 4294901760
    %3229 = vmatpush1.msra.mxu0 %v3228
    %3230 = vmatprep.subr.mxu0 0.0
    %v3231 = vand.u32 %v33, 4294901760
    %3232 = vmatpush1.msra.mxu0 %v3231
    %3233 = vmatprep.subr.mxu0 0.0
    %v3234 = vand.u32 %v34, 4294901760
    %3235 = vmatpush1.msra.mxu0 %v3234
    %3236 = vmatprep.subr.mxu0 0.0
    %v3237 = vand.u32 %v35, 4294901760
    %3238 = vmatpush1.msra.mxu0 %v3237
    %3239 = vmatprep.subr.mxu0 0.0
    %v3240 = vand.u32 %v36, 4294901760
    %3241 = vmatpush1.msra.mxu0 %v3240
    %3242 = vmatprep.subr.mxu0 0.0
    %v3243 = vand.u32 %v37, 4294901760
    %3244 = vmatpush1.msra.mxu0 %v3243
    %3245 = vmatprep.subr.mxu0 0.0
    %v3246 = vand.u32 %v38, 4294901760
    %3247 = vmatpush1.msra.mxu0 %v3246
    %3248 = vmatprep.subr.mxu0 0.0
    %v3249 = vand.u32 %v39, 4294901760
    %3250 = vmatpush1.msra.mxu0 %v3249
    %3251 = vmatprep.subr.mxu0 0.0
    %v3252 = vand.u32 %v40, 4294901760
    %3253 = vmatpush1.msra.mxu0 %v3252
    %3254 = vmatprep.subr.mxu0 0.0
    %v3255 = vand.u32 %v41, 4294901760
    %3256 = vmatpush1.msra.mxu0 %v3255
    %3257 = vmatprep.subr.mxu0 0.0
    %v3258 = vand.u32 %v42, 4294901760
    %3259 = vmatpush1.msra.mxu0 %v3258
    %3260 = vmatprep.subr.mxu0 0.0
    %v3261 = vand.u32 %v43, 4294901760
    %3262 = vmatpush1.msra.mxu0 %v3261
    %3263 = vmatprep.subr.mxu0 0.0
    %v3264 = vand.u32 %v44, 4294901760
    %3265 = vmatpush1.msra.mxu0 %v3264
    %3266 = vmatprep.subr.mxu0 0.0
    %v3267 = vand.u32 %v45, 4294901760
    %3268 = vmatpush1.msra.mxu0 %v3267
    %3269 = vmatprep.subr.mxu0 0.0
    %v3270 = vand.u32 %v46, 4294901760
    %3271 = vmatpush1.msra.mxu0 %v3270
    %3272 = vmatprep.subr.mxu0 0.0
    %3273 = vmatpush1.msra.mxu0 0.0
    %3274 = vmatprep.subr.mxu0 0.0
    %3275 = vmatpush1.msra.mxu0 0.0
    %3276 = vmatprep.subr.mxu0 0.0
    %3277 = vmatpush1.msra.mxu0 0.0
    %3278 = vmatprep.subr.mxu0 0.0
    %3279 = vmatpush1.msra.mxu0 0.0
    %3280 = vmatprep.subr.mxu0 0.0
    %3281 = vmatpush1.msra.mxu0 0.0
    %3282 = vmatprep.subr.mxu0 0.0
    %3283 = vmatpush1.msra.mxu0 0.0
    %3284 = vmatprep.subr.mxu0 0.0
    %3285 = vmatpush1.msra.mxu0 0.0
    %3286 = vmatprep.subr.mxu0 0.0
    %3287 = vmatpush1.msra.mxu0 0.0
    %3288 = vmatprep.subr.mxu0 0.0
    %3289 = vmatpush1.msra.mxu0 0.0
    %3290 = vmatprep.subr.mxu0 0.0
    %3291 = vmatpush1.msra.mxu0 0.0
    %3292 = vmatprep.subr.mxu0 0.0
    %3293 = vmatpush1.msra.mxu0 0.0
    %3294 = vmatprep.subr.mxu0 0.0
    %3295 = vmatpush1.msra.mxu0 0.0
    %3296 = vmatprep.subr.mxu0 0.0
    %3297 = vmatpush1.msra.mxu0 0.0
    %3298 = vmatprep.subr.mxu0 0.0
    %3299 = vmatpush1.msra.mxu0 0.0
    %3300 = vmatprep.subr.mxu0 0.0
    %3301 = vmatpush1.msra.mxu0 0.0
    %3302 = vmatprep.subr.mxu0 0.0
    %3303 = vmatpush1.msra.mxu0 0.0
    %3304 = vmatprep.mubr.f32.mxu0 0.0
    %v3305 = vand.u32 %v2853, 4294901760
    %v3306 = vsub.f32 %v2853, %v3305
    %v3307 = vand.u32 %v3306, 4294901760
    %3308 = vmatmul.mubr.f32.gmra.mrb[0].mxu0 %v3307
    %v3309 = vpop.f32.mrb[0].mxu0
    %v3310 = vadd.f32 %v3214, %v3309
    %v3311 = vpop.f32.mrb[0].mxu0
    %3312 = vmatprep.mubr.f32.mxu0 0.0
    %v3313 = vand.u32 %v2854, 4294901760
    %v3314 = vsub.f32 %v2854, %v3313
    %v3315 = vand.u32 %v3314, 4294901760
    %3316 = vmatmul.mubr.f32.gmra.mrb[0].mxu0 %v3315
    %v3317 = vpop.f32.mrb[0].mxu0
    %v3318 = vadd.f32 %v3221, %v3317
    %v3319 = vpop.f32.mrb[0].mxu0
    %3320 = vdwg.mxu0
    %3321 = vmatprep.subr.mxu0 0.0
    %v3322 = vand.u32 %v31, 4294901760
    %v3323 = vsub.f32 %v31, %v3322
    %v3324 = vand.u32 %v3323, 4294901760
    %3325 = vmatpush1.msra.mxu0 %v3324
    %3326 = vmatprep.subr.mxu0 0.0
    %v3327 = vand.u32 %v32, 4294901760
    %v3328 = vsub.f32 %v32, %v3327
    %v3329 = vand.u32 %v3328, 4294901760
    %3330 = vmatpush1.msra.mxu0 %v3329
    %3331 = vmatprep.subr.mxu0 0.0
    %v3332 = vand.u32 %v33, 4294901760
    %v3333 = vsub.f32 %v33, %v3332
    %v3334 = vand.u32 %v3333, 4294901760
    %3335 = vmatpush1.msra.mxu0 %v3334
    %3336 = vmatprep.subr.mxu0 0.0
    %v3337 = vand.u32 %v34, 4294901760
    %v3338 = vsub.f32 %v34, %v3337
    %v3339 = vand.u32 %v3338, 4294901760
    %3340 = vmatpush1.msra.mxu0 %v3339
    %3341 = vmatprep.subr.mxu0 0.0
    %v3342 = vand.u32 %v35, 4294901760
    %v3343 = vsub.f32 %v35, %v3342
    %v3344 = vand.u32 %v3343, 4294901760
    %3345 = vmatpush1.msra.mxu0 %v3344
    %3346 = vmatprep.subr.mxu0 0.0
    %v3347 = vand.u32 %v36, 4294901760
    %v3348 = vsub.f32 %v36, %v3347
    %v3349 = vand.u32 %v3348, 4294901760
    %3350 = vmatpush1.msra.mxu0 %v3349
    %3351 = vmatprep.subr.mxu0 0.0
    %v3352 = vand.u32 %v37, 4294901760
    %v3353 = vsub.f32 %v37, %v3352
    %v3354 = vand.u32 %v3353, 4294901760
    %3355 = vmatpush1.msra.mxu0 %v3354
    %3356 = vmatprep.subr.mxu0 0.0
    %v3357 = vand.u32 %v38, 4294901760
    %v3358 = vsub.f32 %v38, %v3357
    %v3359 = vand.u32 %v3358, 4294901760
    %3360 = vmatpush1.msra.mxu0 %v3359
    %3361 = vmatprep.subr.mxu0 0.0
    %v3362 = vand.u32 %v39, 4294901760
    %v3363 = vsub.f32 %v39, %v3362
    %v3364 = vand.u32 %v3363, 4294901760
    %3365 = vmatpush1.msra.mxu0 %v3364
    %3366 = vmatprep.subr.mxu0 0.0
    %v3367 = vand.u32 %v40, 4294901760
    %v3368 = vsub.f32 %v40, %v3367
    %v3369 = vand.u32 %v3368, 4294901760
    %3370 = vmatpush1.msra.mxu0 %v3369
    %3371 = vmatprep.subr.mxu0 0.0
    %v3372 = vand.u32 %v41, 4294901760
    %v3373 = vsub.f32 %v41, %v3372
    %v3374 = vand.u32 %v3373, 4294901760
    %3375 = vmatpush1.msra.mxu0 %v3374
    %3376 = vmatprep.subr.mxu0 0.0
    %v3377 = vand.u32 %v42, 4294901760
    %v3378 = vsub.f32 %v42, %v3377
    %v3379 = vand.u32 %v3378, 4294901760
    %3380 = vmatpush1.msra.mxu0 %v3379
    %3381 = vmatprep.subr.mxu0 0.0
    %v3382 = vand.u32 %v43, 4294901760
    %v3383 = vsub.f32 %v43, %v3382
    %v3384 = vand.u32 %v3383, 4294901760
    %3385 = vmatpush1.msra.mxu0 %v3384
    %3386 = vmatprep.subr.mxu0 0.0
    %v3387 = vand.u32 %v44, 4294901760
    %v3388 = vsub.f32 %v44, %v3387
    %v3389 = vand.u32 %v3388, 4294901760
    %3390 = vmatpush1.msra.mxu0 %v3389
    %3391 = vmatprep.subr.mxu0 0.0
    %v3392 = vand.u32 %v45, 4294901760
    %v3393 = vsub.f32 %v45, %v3392
    %v3394 = vand.u32 %v3393, 4294901760
    %3395 = vmatpush1.msra.mxu0 %v3394
    %3396 = vmatprep.subr.mxu0 0.0
    %v3397 = vand.u32 %v46, 4294901760
    %v3398 = vsub.f32 %v46, %v3397
    %v3399 = vand.u32 %v3398, 4294901760
    %3400 = vmatpush1.msra.mxu0 %v3399
    %3401 = vmatprep.subr.mxu0 0.0
    %3402 = vmatpush1.msra.mxu0 0.0
    %3403 = vmatprep.subr.mxu0 0.0
    %3404 = vmatpush1.msra.mxu0 0.0
    %3405 = vmatprep.subr.mxu0 0.0
    %3406 = vmatpush1.msra.mxu0 0.0
    %3407 = vmatprep.subr.mxu0 0.0
    %3408 = vmatpush1.msra.mxu0 0.0
    %3409 = vmatprep.subr.mxu0 0.0
    %3410 = vmatpush1.msra.mxu0 0.0
    %3411 = vmatprep.subr.mxu0 0.0
    %3412 = vmatpush1.msra.mxu0 0.0
    %3413 = vmatprep.subr.mxu0 0.0
    %3414 = vmatpush1.msra.mxu0 0.0
    %3415 = vmatprep.subr.mxu0 0.0
    %3416 = vmatpush1.msra.mxu0 0.0
    %3417 = vmatprep.subr.mxu0 0.0
    %3418 = vmatpush1.msra.mxu0 0.0
    %3419 = vmatprep.subr.mxu0 0.0
    %3420 = vmatpush1.msra.mxu0 0.0
    %3421 = vmatprep.subr.mxu0 0.0
    %3422 = vmatpush1.msra.mxu0 0.0
    %3423 = vmatprep.subr.mxu0 0.0
    %3424 = vmatpush1.msra.mxu0 0.0
    %3425 = vmatprep.subr.mxu0 0.0
    %3426 = vmatpush1.msra.mxu0 0.0
    %3427 = vmatprep.subr.mxu0 0.0
    %3428 = vmatpush1.msra.mxu0 0.0
    %3429 = vmatprep.subr.mxu0 0.0
    %3430 = vmatpush1.msra.mxu0 0.0
    %3431 = vmatprep.subr.mxu0 0.0
    %3432 = vmatpush1.msra.mxu0 0.0
    %3433 = vmatprep.mubr.f32.mxu0 0.0
    %v3434 = vand.u32 %v2853, 4294901760
    %3435 = vmatmul.mubr.f32.gmra.mrb[0].mxu0 %v3434
    %v3436 = vpop.f32.mrb[0].mxu0
    %v3437 = vadd.f32 %v3310, %v3436
    %v3438 = vpop.f32.mrb[0].mxu0
    %3439 = vmatprep.mubr.f32.mxu0 0.0
    %v3440 = vand.u32 %v2854, 4294901760
    %3441 = vmatmul.mubr.f32.gmra.mrb[0].mxu0 %v3440
    %v3442 = vpop.f32.mrb[0].mxu0
    %v3443 = vadd.f32 %v3318, %v3442
    %v3444 = vpop.f32.mrb[0].mxu0
    %3445 = vdwg.mxu0
    %3446 = vmatprep.subr.mxu0 0.0
    %v3447 = vand.u32 %v31, 4294901760
    %3448 = vmatpush1.msra.mxu0 %v3447
    %3449 = vmatprep.subr.mxu0 0.0
    %v3450 = vand.u32 %v32, 4294901760
    %3451 = vmatpush1.msra.mxu0 %v3450
    %3452 = vmatprep.subr.mxu0 0.0
    %v3453 = vand.u32 %v33, 4294901760
    %3454 = vmatpush1.msra.mxu0 %v3453
    %3455 = vmatprep.subr.mxu0 0.0
    %v3456 = vand.u32 %v34, 4294901760
    %3457 = vmatpush1.msra.mxu0 %v3456
    %3458 = vmatprep.subr.mxu0 0.0
    %v3459 = vand.u32 %v35, 4294901760
    %3460 = vmatpush1.msra.mxu0 %v3459
    %3461 = vmatprep.subr.mxu0 0.0
    %v3462 = vand.u32 %v36, 4294901760
    %3463 = vmatpush1.msra.mxu0 %v3462
    %3464 = vmatprep.subr.mxu0 0.0
    %v3465 = vand.u32 %v37, 4294901760
    %3466 = vmatpush1.msra.mxu0 %v3465
    %3467 = vmatprep.subr.mxu0 0.0
    %v3468 = vand.u32 %v38, 4294901760
    %3469 = vmatpush1.msra.mxu0 %v3468
    %3470 = vmatprep.subr.mxu0 0.0
    %v3471 = vand.u32 %v39, 4294901760
    %3472 = vmatpush1.msra.mxu0 %v3471
    %3473 = vmatprep.subr.mxu0 0.0
    %v3474 = vand.u32 %v40, 4294901760
    %3475 = vmatpush1.msra.mxu0 %v3474
    %3476 = vmatprep.subr.mxu0 0.0
    %v3477 = vand.u32 %v41, 4294901760
    %3478 = vmatpush1.msra.mxu0 %v3477
    %3479 = vmatprep.subr.mxu0 0.0
    %v3480 = vand.u32 %v42, 4294901760
    %3481 = vmatpush1.msra.mxu0 %v3480
    %3482 = vmatprep.subr.mxu0 0.0
    %v3483 = vand.u32 %v43, 4294901760
    %3484 = vmatpush1.msra.mxu0 %v3483
    %3485 = vmatprep.subr.mxu0 0.0
    %v3486 = vand.u32 %v44, 4294901760
    %3487 = vmatpush1.msra.mxu0 %v3486
    %3488 = vmatprep.subr.mxu0 0.0
    %v3489 = vand.u32 %v45, 4294901760
    %3490 = vmatpush1.msra.mxu0 %v3489
    %3491 = vmatprep.subr.mxu0 0.0
    %v3492 = vand.u32 %v46, 4294901760
    %3493 = vmatpush1.msra.mxu0 %v3492
    %3494 = vmatprep.subr.mxu0 0.0
    %3495 = vmatpush1.msra.mxu0 0.0
    %3496 = vmatprep.subr.mxu0 0.0
    %3497 = vmatpush1.msra.mxu0 0.0
    %3498 = vmatprep.subr.mxu0 0.0
    %3499 = vmatpush1.msra.mxu0 0.0
    %3500 = vmatprep.subr.mxu0 0.0
    %3501 = vmatpush1.msra.mxu0 0.0
    %3502 = vmatprep.subr.mxu0 0.0
    %3503 = vmatpush1.msra.mxu0 0.0
    %3504 = vmatprep.subr.mxu0 0.0
    %3505 = vmatpush1.msra.mxu0 0.0
    %3506 = vmatprep.subr.mxu0 0.0
    %3507 = vmatpush1.msra.mxu0 0.0
    %3508 = vmatprep.subr.mxu0 0.0
    %3509 = vmatpush1.msra.mxu0 0.0
    %3510 = vmatprep.subr.mxu0 0.0
    %3511 = vmatpush1.msra.mxu0 0.0
    %3512 = vmatprep.subr.mxu0 0.0
    %3513 = vmatpush1.msra.mxu0 0.0
    %3514 = vmatprep.subr.mxu0 0.0
    %3515 = vmatpush1.msra.mxu0 0.0
    %3516 = vmatprep.subr.mxu0 0.0
    %3517 = vmatpush1.msra.mxu0 0.0
    %3518 = vmatprep.subr.mxu0 0.0
    %3519 = vmatpush1.msra.mxu0 0.0
    %3520 = vmatprep.subr.mxu0 0.0
    %3521 = vmatpush1.msra.mxu0 0.0
    %3522 = vmatprep.subr.mxu0 0.0
    %3523 = vmatpush1.msra.mxu0 0.0
    %3524 = vmatprep.subr.mxu0 0.0
    %3525 = vmatpush1.msra.mxu0 0.0
    %3526 = vmatprep.mubr.f32.mxu0 0.0
    %v3527 = vand.u32 %v2853, 4294901760
    %3528 = vmatmul.mubr.f32.gmra.mrb[0].mxu0 %v3527
    %v3529 = vpop.f32.mrb[0].mxu0
    %v3530 = vadd.f32 %v3437, %v3529
    %v3531 = vpop.f32.mrb[0].mxu0
    %3532 = vmatprep.mubr.f32.mxu0 0.0
    %v3533 = vand.u32 %v2854, 4294901760
    %3534 = vmatmul.mubr.f32.gmra.mrb[0].mxu0 %v3533
    %v3535 = vpop.f32.mrb[0].mxu0
    %v3536 = vadd.f32 %v3443, %v3535
    %v3537 = vpop.f32.mrb[0].mxu0
    %3538 = vdwg.mxu0
    %3539 = vst [vmem:[#allocation5 + $0x20] sm:$0xff] %v3530
    %3540 = vst [vmem:[#allocation5 + $0x60] sm:$0xff] %v3536
    %3541 = vset.pattern.permute.xlu0 5
    %3542 = vperm.xlu0 %3541, %v29
    %v3543 = vpop.permute.xlu0 %3542
    %3544 = vset.pattern.permute.xlu0 5
    %3545 = vperm.xlu0 %3544, %v30
    %v3546 = vpop.permute.xlu0 %3545
    %vm3547 = vcmp.eq.s32.totalorder %v3543, %v50
    %vm3548 = vcmp.eq.s32.totalorder %v3546, %v50
    %v3549 = vsel %vm3547, 1, 0
    %v3550 = vsel %vm3548, 1, 0
    %v3551 = vcvt.s32.f32 %v3549
    %v3552 = vcvt.s32.f32 %v3550
    %3553 = vmatprep.subr.mxu0 0.0
    %v3554 = vand.u32 %v31, 4294901760
    %3555 = vmatpush1.msra.mxu0 %v3554
    %3556 = vmatprep.subr.mxu0 0.0
    %v3557 = vand.u32 %v32, 4294901760
    %3558 = vmatpush1.msra.mxu0 %v3557
    %3559 = vmatprep.subr.mxu0 0.0
    %v3560 = vand.u32 %v33, 4294901760
    %3561 = vmatpush1.msra.mxu0 %v3560
    %3562 = vmatprep.subr.mxu0 0.0
    %v3563 = vand.u32 %v34, 4294901760
    %3564 = vmatpush1.msra.mxu0 %v3563
    %3565 = vmatprep.subr.mxu0 0.0
    %v3566 = vand.u32 %v35, 4294901760
    %3567 = vmatpush1.msra.mxu0 %v3566
    %3568 = vmatprep.subr.mxu0 0.0
    %v3569 = vand.u32 %v36, 4294901760
    %3570 = vmatpush1.msra.mxu0 %v3569
    %3571 = vmatprep.subr.mxu0 0.0
    %v3572 = vand.u32 %v37, 4294901760
    %3573 = vmatpush1.msra.mxu0 %v3572
    %3574 = vmatprep.subr.mxu0 0.0
    %v3575 = vand.u32 %v38, 4294901760
    %3576 = vmatpush1.msra.mxu0 %v3575
    %3577 = vmatprep.subr.mxu0 0.0
    %v3578 = vand.u32 %v39, 4294901760
    %3579 = vmatpush1.msra.mxu0 %v3578
    %3580 = vmatprep.subr.mxu0 0.0
    %v3581 = vand.u32 %v40, 4294901760
    %3582 = vmatpush1.msra.mxu0 %v3581
    %3583 = vmatprep.subr.mxu0 0.0
    %v3584 = vand.u32 %v41, 4294901760
    %3585 = vmatpush1.msra.mxu0 %v3584
    %3586 = vmatprep.subr.mxu0 0.0
    %v3587 = vand.u32 %v42, 4294901760
    %3588 = vmatpush1.msra.mxu0 %v3587
    %3589 = vmatprep.subr.mxu0 0.0
    %v3590 = vand.u32 %v43, 4294901760
    %3591 = vmatpush1.msra.mxu0 %v3590
    %3592 = vmatprep.subr.mxu0 0.0
    %v3593 = vand.u32 %v44, 4294901760
    %3594 = vmatpush1.msra.mxu0 %v3593
    %3595 = vmatprep.subr.mxu0 0.0
    %v3596 = vand.u32 %v45, 4294901760
    %3597 = vmatpush1.msra.mxu0 %v3596
    %3598 = vmatprep.subr.mxu0 0.0
    %v3599 = vand.u32 %v46, 4294901760
    %3600 = vmatpush1.msra.mxu0 %v3599
    %3601 = vmatprep.subr.mxu0 0.0
    %3602 = vmatpush1.msra.mxu0 0.0
    %3603 = vmatprep.subr.mxu0 0.0
    %3604 = vmatpush1.msra.mxu0 0.0
    %3605 = vmatprep.subr.mxu0 0.0
    %3606 = vmatpush1.msra.mxu0 0.0
    %3607 = vmatprep.subr.mxu0 0.0
    %3608 = vmatpush1.msra.mxu0 0.0
    %3609 = vmatprep.subr.mxu0 0.0
    %3610 = vmatpush1.msra.mxu0 0.0
    %3611 = vmatprep.subr.mxu0 0.0
    %3612 = vmatpush1.msra.mxu0 0.0
    %3613 = vmatprep.subr.mxu0 0.0
    %3614 = vmatpush1.msra.mxu0 0.0
    %3615 = vmatprep.subr.mxu0 0.0
    %3616 = vmatpush1.msra.mxu0 0.0
    %3617 = vmatprep.subr.mxu0 0.0
    %3618 = vmatpush1.msra.mxu0 0.0
    %3619 = vmatprep.subr.mxu0 0.0
    %3620 = vmatpush1.msra.mxu0 0.0
    %3621 = vmatprep.subr.mxu0 0.0
    %3622 = vmatpush1.msra.mxu0 0.0
    %3623 = vmatprep.subr.mxu0 0.0
    %3624 = vmatpush1.msra.mxu0 0.0
    %3625 = vmatprep.subr.mxu0 0.0
    %3626 = vmatpush1.msra.mxu0 0.0
    %3627 = vmatprep.subr.mxu0 0.0
    %3628 = vmatpush1.msra.mxu0 0.0
    %3629 = vmatprep.subr.mxu0 0.0
    %3630 = vmatpush1.msra.mxu0 0.0
    %3631 = vmatprep.subr.mxu0 0.0
    %3632 = vmatpush1.msra.mxu0 0.0
    %3633 = vmatprep.mubr.f32.mxu0 0.0
    %v3634 = vand.u32 %v3551, 4294901760
    %v3635 = vsub.f32 %v3551, %v3634
    %v3636 = vand.u32 %v3635, 4294901760
    %v3637 = vsub.f32 %v3635, %v3636
    %v3638 = vand.u32 %v3637, 4294901760
    %3639 = vmatmul.mubr.f32.gmra.mrb[0].mxu0 %v3638
    %v3640 = vpop.f32.mrb[0].mxu0
    %v3641 = vadd.f32 %v47, %v3640
    %v3642 = vpop.f32.mrb[0].mxu0
    %3643 = vmatprep.mubr.f32.mxu0 0.0
    %v3644 = vand.u32 %v3552, 4294901760
    %v3645 = vsub.f32 %v3552, %v3644
    %v3646 = vand.u32 %v3645, 4294901760
    %v3647 = vsub.f32 %v3645, %v3646
    %v3648 = vand.u32 %v3647, 4294901760
    %3649 = vmatmul.mubr.f32.gmra.mrb[0].mxu0 %v3648
    %v3650 = vpop.f32.mrb[0].mxu0
    %v3651 = vadd.f32 %v48, %v3650
    %v3652 = vpop.f32.mrb[0].mxu0
    %3653 = vdwg.mxu0
    %3654 = vmatprep.subr.mxu0 0.0
    %v3655 = vand.u32 %v31, 4294901760
    %v3656 = vsub.f32 %v31, %v3655
    %v3657 = vand.u32 %v3656, 4294901760
    %v3658 = vsub.f32 %v3656, %v3657
    %v3659 = vand.u32 %v3658, 4294901760
    %3660 = vmatpush1.msra.mxu0 %v3659
    %3661 = vmatprep.subr.mxu0 0.0
    %v3662 = vand.u32 %v32, 4294901760
    %v3663 = vsub.f32 %v32, %v3662
    %v3664 = vand.u32 %v3663, 4294901760
    %v3665 = vsub.f32 %v3663, %v3664
    %v3666 = vand.u32 %v3665, 4294901760
    %3667 = vmatpush1.msra.mxu0 %v3666
    %3668 = vmatprep.subr.mxu0 0.0
    %v3669 = vand.u32 %v33, 4294901760
    %v3670 = vsub.f32 %v33, %v3669
    %v3671 = vand.u32 %v3670, 4294901760
    %v3672 = vsub.f32 %v3670, %v3671
    %v3673 = vand.u32 %v3672, 4294901760
    %3674 = vmatpush1.msra.mxu0 %v3673
    %3675 = vmatprep.subr.mxu0 0.0
    %v3676 = vand.u32 %v34, 4294901760
    %v3677 = vsub.f32 %v34, %v3676
    %v3678 = vand.u32 %v3677, 4294901760
    %v3679 = vsub.f32 %v3677, %v3678
    %v3680 = vand.u32 %v3679, 4294901760
    %3681 = vmatpush1.msra.mxu0 %v3680
    %3682 = vmatprep.subr.mxu0 0.0
    %v3683 = vand.u32 %v35, 4294901760
    %v3684 = vsub.f32 %v35, %v3683
    %v3685 = vand.u32 %v3684, 4294901760
    %v3686 = vsub.f32 %v3684, %v3685
    %v3687 = vand.u32 %v3686, 4294901760
    %3688 = vmatpush1.msra.mxu0 %v3687
    %3689 = vmatprep.subr.mxu0 0.0
    %v3690 = vand.u32 %v36, 4294901760
    %v3691 = vsub.f32 %v36, %v3690
    %v3692 = vand.u32 %v3691, 4294901760
    %v3693 = vsub.f32 %v3691, %v3692
    %v3694 = vand.u32 %v3693, 4294901760
    %3695 = vmatpush1.msra.mxu0 %v3694
    %3696 = vmatprep.subr.mxu0 0.0
    %v3697 = vand.u32 %v37, 4294901760
    %v3698 = vsub.f32 %v37, %v3697
    %v3699 = vand.u32 %v3698, 4294901760
    %v3700 = vsub.f32 %v3698, %v3699
    %v3701 = vand.u32 %v3700, 4294901760
    %3702 = vmatpush1.msra.mxu0 %v3701
    %3703 = vmatprep.subr.mxu0 0.0
    %v3704 = vand.u32 %v38, 4294901760
    %v3705 = vsub.f32 %v38, %v3704
    %v3706 = vand.u32 %v3705, 4294901760
    %v3707 = vsub.f32 %v3705, %v3706
    %v3708 = vand.u32 %v3707, 4294901760
    %3709 = vmatpush1.msra.mxu0 %v3708
    %3710 = vmatprep.subr.mxu0 0.0
    %v3711 = vand.u32 %v39, 4294901760
    %v3712 = vsub.f32 %v39, %v3711
    %v3713 = vand.u32 %v3712, 4294901760
    %v3714 = vsub.f32 %v3712, %v3713
    %v3715 = vand.u32 %v3714, 4294901760
    %3716 = vmatpush1.msra.mxu0 %v3715
    %3717 = vmatprep.subr.mxu0 0.0
    %v3718 = vand.u32 %v40, 4294901760
    %v3719 = vsub.f32 %v40, %v3718
    %v3720 = vand.u32 %v3719, 4294901760
    %v3721 = vsub.f32 %v3719, %v3720
    %v3722 = vand.u32 %v3721, 4294901760
    %3723 = vmatpush1.msra.mxu0 %v3722
    %3724 = vmatprep.subr.mxu0 0.0
    %v3725 = vand.u32 %v41, 4294901760
    %v3726 = vsub.f32 %v41, %v3725
    %v3727 = vand.u32 %v3726, 4294901760
    %v3728 = vsub.f32 %v3726, %v3727
    %v3729 = vand.u32 %v3728, 4294901760
    %3730 = vmatpush1.msra.mxu0 %v3729
    %3731 = vmatprep.subr.mxu0 0.0
    %v3732 = vand.u32 %v42, 4294901760
    %v3733 = vsub.f32 %v42, %v3732
    %v3734 = vand.u32 %v3733, 4294901760
    %v3735 = vsub.f32 %v3733, %v3734
    %v3736 = vand.u32 %v3735, 4294901760
    %3737 = vmatpush1.msra.mxu0 %v3736
    %3738 = vmatprep.subr.mxu0 0.0
    %v3739 = vand.u32 %v43, 4294901760
    %v3740 = vsub.f32 %v43, %v3739
    %v3741 = vand.u32 %v3740, 4294901760
    %v3742 = vsub.f32 %v3740, %v3741
    %v3743 = vand.u32 %v3742, 4294901760
    %3744 = vmatpush1.msra.mxu0 %v3743
    %3745 = vmatprep.subr.mxu0 0.0
    %v3746 = vand.u32 %v44, 4294901760
    %v3747 = vsub.f32 %v44, %v3746
    %v3748 = vand.u32 %v3747, 4294901760
    %v3749 = vsub.f32 %v3747, %v3748
    %v3750 = vand.u32 %v3749, 4294901760
    %3751 = vmatpush1.msra.mxu0 %v3750
    %3752 = vmatprep.subr.mxu0 0.0
    %v3753 = vand.u32 %v45, 4294901760
    %v3754 = vsub.f32 %v45, %v3753
    %v3755 = vand.u32 %v3754, 4294901760
    %v3756 = vsub.f32 %v3754, %v3755
    %v3757 = vand.u32 %v3756, 4294901760
    %3758 = vmatpush1.msra.mxu0 %v3757
    %3759 = vmatprep.subr.mxu0 0.0
    %v3760 = vand.u32 %v46, 4294901760
    %v3761 = vsub.f32 %v46, %v3760
    %v3762 = vand.u32 %v3761, 4294901760
    %v3763 = vsub.f32 %v3761, %v3762
    %v3764 = vand.u32 %v3763, 4294901760
    %3765 = vmatpush1.msra.mxu0 %v3764
    %3766 = vmatprep.subr.mxu0 0.0
    %3767 = vmatpush1.msra.mxu0 0.0
    %3768 = vmatprep.subr.mxu0 0.0
    %3769 = vmatpush1.msra.mxu0 0.0
    %3770 = vmatprep.subr.mxu0 0.0
    %3771 = vmatpush1.msra.mxu0 0.0
    %3772 = vmatprep.subr.mxu0 0.0
    %3773 = vmatpush1.msra.mxu0 0.0
    %3774 = vmatprep.subr.mxu0 0.0
    %3775 = vmatpush1.msra.mxu0 0.0
    %3776 = vmatprep.subr.mxu0 0.0
    %3777 = vmatpush1.msra.mxu0 0.0
    %3778 = vmatprep.subr.mxu0 0.0
    %3779 = vmatpush1.msra.mxu0 0.0
    %3780 = vmatprep.subr.mxu0 0.0
    %3781 = vmatpush1.msra.mxu0 0.0
    %3782 = vmatprep.subr.mxu0 0.0
    %3783 = vmatpush1.msra.mxu0 0.0
    %3784 = vmatprep.subr.mxu0 0.0
    %3785 = vmatpush1.msra.mxu0 0.0
    %3786 = vmatprep.subr.mxu0 0.0
    %3787 = vmatpush1.msra.mxu0 0.0
    %3788 = vmatprep.subr.mxu0 0.0
    %3789 = vmatpush1.msra.mxu0 0.0
    %3790 = vmatprep.subr.mxu0 0.0
    %3791 = vmatpush1.msra.mxu0 0.0
    %3792 = vmatprep.subr.mxu0 0.0
    %3793 = vmatpush1.msra.mxu0 0.0
    %3794 = vmatprep.subr.mxu0 0.0
    %3795 = vmatpush1.msra.mxu0 0.0
    %3796 = vmatprep.subr.mxu0 0.0
    %3797 = vmatpush1.msra.mxu0 0.0
    %3798 = vmatprep.mubr.f32.mxu0 0.0
    %v3799 = vand.u32 %v3551, 4294901760
    %3800 = vmatmul.mubr.f32.gmra.mrb[0].mxu0 %v3799
    %v3801 = vpop.f32.mrb[0].mxu0
    %v3802 = vadd.f32 %v3641, %v3801
    %v3803 = vpop.f32.mrb[0].mxu0
    %3804 = vmatprep.mubr.f32.mxu0 0.0
    %v3805 = vand.u32 %v3552, 4294901760
    %3806 = vmatmul.mubr.f32.gmra.mrb[0].mxu0 %v3805
    %v3807 = vpop.f32.mrb[0].mxu0
    %v3808 = vadd.f32 %v3651, %v3807
    %v3809 = vpop.f32.mrb[0].mxu0
    %3810 = vdwg.mxu0
    %3811 = vmatprep.subr.mxu0 0.0
    %v3812 = vand.u32 %v31, 4294901760
    %v3813 = vsub.f32 %v31, %v3812
    %3814 = vmatpush1.msra.mxu0 %v3813
    %3815 = vmatprep.subr.mxu0 0.0
    %v3816 = vand.u32 %v32, 4294901760
    %v3817 = vsub.f32 %v32, %v3816
    %3818 = vmatpush1.msra.mxu0 %v3817
    %3819 = vmatprep.subr.mxu0 0.0
    %v3820 = vand.u32 %v33, 4294901760
    %v3821 = vsub.f32 %v33, %v3820
    %3822 = vmatpush1.msra.mxu0 %v3821
    %3823 = vmatprep.subr.mxu0 0.0
    %v3824 = vand.u32 %v34, 4294901760
    %v3825 = vsub.f32 %v34, %v3824
    %3826 = vmatpush1.msra.mxu0 %v3825
    %3827 = vmatprep.subr.mxu0 0.0
    %v3828 = vand.u32 %v35, 4294901760
    %v3829 = vsub.f32 %v35, %v3828
    %3830 = vmatpush1.msra.mxu0 %v3829
    %3831 = vmatprep.subr.mxu0 0.0
    %v3832 = vand.u32 %v36, 4294901760
    %v3833 = vsub.f32 %v36, %v3832
    %3834 = vmatpush1.msra.mxu0 %v3833
    %3835 = vmatprep.subr.mxu0 0.0
    %v3836 = vand.u32 %v37, 4294901760
    %v3837 = vsub.f32 %v37, %v3836
    %3838 = vmatpush1.msra.mxu0 %v3837
    %3839 = vmatprep.subr.mxu0 0.0
    %v3840 = vand.u32 %v38, 4294901760
    %v3841 = vsub.f32 %v38, %v3840
    %3842 = vmatpush1.msra.mxu0 %v3841
    %3843 = vmatprep.subr.mxu0 0.0
    %v3844 = vand.u32 %v39, 4294901760
    %v3845 = vsub.f32 %v39, %v3844
    %3846 = vmatpush1.msra.mxu0 %v3845
    %3847 = vmatprep.subr.mxu0 0.0
    %v3848 = vand.u32 %v40, 4294901760
    %v3849 = vsub.f32 %v40, %v3848
    %3850 = vmatpush1.msra.mxu0 %v3849
    %3851 = vmatprep.subr.mxu0 0.0
    %v3852 = vand.u32 %v41, 4294901760
    %v3853 = vsub.f32 %v41, %v3852
    %3854 = vmatpush1.msra.mxu0 %v3853
    %3855 = vmatprep.subr.mxu0 0.0
    %v3856 = vand.u32 %v42, 4294901760
    %v3857 = vsub.f32 %v42, %v3856
    %3858 = vmatpush1.msra.mxu0 %v3857
    %3859 = vmatprep.subr.mxu0 0.0
    %v3860 = vand.u32 %v43, 4294901760
    %v3861 = vsub.f32 %v43, %v3860
    %3862 = vmatpush1.msra.mxu0 %v3861
    %3863 = vmatprep.subr.mxu0 0.0
    %v3864 = vand.u32 %v44, 4294901760
    %v3865 = vsub.f32 %v44, %v3864
    %3866 = vmatpush1.msra.mxu0 %v3865
    %3867 = vmatprep.subr.mxu0 0.0
    %v3868 = vand.u32 %v45, 4294901760
    %v3869 = vsub.f32 %v45, %v3868
    %3870 = vmatpush1.msra.mxu0 %v3869
    %3871 = vmatprep.subr.mxu0 0.0
    %v3872 = vand.u32 %v46, 4294901760
    %v3873 = vsub.f32 %v46, %v3872
    %3874 = vmatpush1.msra.mxu0 %v3873
    %3875 = vmatprep.subr.mxu0 0.0
    %3876 = vmatpush1.msra.mxu0 0.0
    %3877 = vmatprep.subr.mxu0 0.0
    %3878 = vmatpush1.msra.mxu0 0.0
    %3879 = vmatprep.subr.mxu0 0.0
    %3880 = vmatpush1.msra.mxu0 0.0
    %3881 = vmatprep.subr.mxu0 0.0
    %3882 = vmatpush1.msra.mxu0 0.0
    %3883 = vmatprep.subr.mxu0 0.0
    %3884 = vmatpush1.msra.mxu0 0.0
    %3885 = vmatprep.subr.mxu0 0.0
    %3886 = vmatpush1.msra.mxu0 0.0
    %3887 = vmatprep.subr.mxu0 0.0
    %3888 = vmatpush1.msra.mxu0 0.0
    %3889 = vmatprep.subr.mxu0 0.0
    %3890 = vmatpush1.msra.mxu0 0.0
    %3891 = vmatprep.subr.mxu0 0.0
    %3892 = vmatpush1.msra.mxu0 0.0
    %3893 = vmatprep.subr.mxu0 0.0
    %3894 = vmatpush1.msra.mxu0 0.0
    %3895 = vmatprep.subr.mxu0 0.0
    %3896 = vmatpush1.msra.mxu0 0.0
    %3897 = vmatprep.subr.mxu0 0.0
    %3898 = vmatpush1.msra.mxu0 0.0
    %3899 = vmatprep.subr.mxu0 0.0
    %3900 = vmatpush1.msra.mxu0 0.0
    %3901 = vmatprep.subr.mxu0 0.0
    %3902 = vmatpush1.msra.mxu0 0.0
    %3903 = vmatprep.subr.mxu0 0.0
    %3904 = vmatpush1.msra.mxu0 0.0
    %3905 = vmatprep.subr.mxu0 0.0
    %3906 = vmatpush1.msra.mxu0 0.0
    %3907 = vmatprep.mubr.f32.mxu0 0.0
    %v3908 = vand.u32 %v3551, 4294901760
    %v3909 = vsub.f32 %v3551, %v3908
    %3910 = vmatmul.mubr.f32.gmra.mrb[0].mxu0 %v3909
    %v3911 = vpop.f32.mrb[0].mxu0
    %v3912 = vadd.f32 %v3802, %v3911
    %v3913 = vpop.f32.mrb[0].mxu0
    %3914 = vmatprep.mubr.f32.mxu0 0.0
    %v3915 = vand.u32 %v3552, 4294901760
    %v3916 = vsub.f32 %v3552, %v3915
    %3917 = vmatmul.mubr.f32.gmra.mrb[0].mxu0 %v3916
    %v3918 = vpop.f32.mrb[0].mxu0
    %v3919 = vadd.f32 %v3808, %v3918
    %v3920 = vpop.f32.mrb[0].mxu0
    %3921 = vdwg.mxu0
    %3922 = vmatprep.subr.mxu0 0.0
    %v3923 = vand.u32 %v31, 4294901760
    %3924 = vmatpush1.msra.mxu0 %v3923
    %3925 = vmatprep.subr.mxu0 0.0
    %v3926 = vand.u32 %v32, 4294901760
    %3927 = vmatpush1.msra.mxu0 %v3926
    %3928 = vmatprep.subr.mxu0 0.0
    %v3929 = vand.u32 %v33, 4294901760
    %3930 = vmatpush1.msra.mxu0 %v3929
    %3931 = vmatprep.subr.mxu0 0.0
    %v3932 = vand.u32 %v34, 4294901760
    %3933 = vmatpush1.msra.mxu0 %v3932
    %3934 = vmatprep.subr.mxu0 0.0
    %v3935 = vand.u32 %v35, 4294901760
    %3936 = vmatpush1.msra.mxu0 %v3935
    %3937 = vmatprep.subr.mxu0 0.0
    %v3938 = vand.u32 %v36, 4294901760
    %3939 = vmatpush1.msra.mxu0 %v3938
    %3940 = vmatprep.subr.mxu0 0.0
    %v3941 = vand.u32 %v37, 4294901760
    %3942 = vmatpush1.msra.mxu0 %v3941
    %3943 = vmatprep.subr.mxu0 0.0
    %v3944 = vand.u32 %v38, 4294901760
    %3945 = vmatpush1.msra.mxu0 %v3944
    %3946 = vmatprep.subr.mxu0 0.0
    %v3947 = vand.u32 %v39, 4294901760
    %3948 = vmatpush1.msra.mxu0 %v3947
    %3949 = vmatprep.subr.mxu0 0.0
    %v3950 = vand.u32 %v40, 4294901760
    %3951 = vmatpush1.msra.mxu0 %v3950
    %3952 = vmatprep.subr.mxu0 0.0
    %v3953 = vand.u32 %v41, 4294901760
    %3954 = vmatpush1.msra.mxu0 %v3953
    %3955 = vmatprep.subr.mxu0 0.0
    %v3956 = vand.u32 %v42, 4294901760
    %3957 = vmatpush1.msra.mxu0 %v3956
    %3958 = vmatprep.subr.mxu0 0.0
    %v3959 = vand.u32 %v43, 4294901760
    %3960 = vmatpush1.msra.mxu0 %v3959
    %3961 = vmatprep.subr.mxu0 0.0
    %v3962 = vand.u32 %v44, 4294901760
    %3963 = vmatpush1.msra.mxu0 %v3962
    %3964 = vmatprep.subr.mxu0 0.0
    %v3965 = vand.u32 %v45, 4294901760
    %3966 = vmatpush1.msra.mxu0 %v3965
    %3967 = vmatprep.subr.mxu0 0.0
    %v3968 = vand.u32 %v46, 4294901760
    %3969 = vmatpush1.msra.mxu0 %v3968
    %3970 = vmatprep.subr.mxu0 0.0
    %3971 = vmatpush1.msra.mxu0 0.0
    %3972 = vmatprep.subr.mxu0 0.0
    %3973 = vmatpush1.msra.mxu0 0.0
    %3974 = vmatprep.subr.mxu0 0.0
    %3975 = vmatpush1.msra.mxu0 0.0
    %3976 = vmatprep.subr.mxu0 0.0
    %3977 = vmatpush1.msra.mxu0 0.0
    %3978 = vmatprep.subr.mxu0 0.0
    %3979 = vmatpush1.msra.mxu0 0.0
    %3980 = vmatprep.subr.mxu0 0.0
    %3981 = vmatpush1.msra.mxu0 0.0
    %3982 = vmatprep.subr.mxu0 0.0
    %3983 = vmatpush1.msra.mxu0 0.0
    %3984 = vmatprep.subr.mxu0 0.0
    %3985 = vmatpush1.msra.mxu0 0.0
    %3986 = vmatprep.subr.mxu0 0.0
    %3987 = vmatpush1.msra.mxu0 0.0
    %3988 = vmatprep.subr.mxu0 0.0
    %3989 = vmatpush1.msra.mxu0 0.0
    %3990 = vmatprep.subr.mxu0 0.0
    %3991 = vmatpush1.msra.mxu0 0.0
    %3992 = vmatprep.subr.mxu0 0.0
    %3993 = vmatpush1.msra.mxu0 0.0
    %3994 = vmatprep.subr.mxu0 0.0
    %3995 = vmatpush1.msra.mxu0 0.0
    %3996 = vmatprep.subr.mxu0 0.0
    %3997 = vmatpush1.msra.mxu0 0.0
    %3998 = vmatprep.subr.mxu0 0.0
    %3999 = vmatpush1.msra.mxu0 0.0
    %4000 = vmatprep.subr.mxu0 0.0
    %4001 = vmatpush1.msra.mxu0 0.0
    %4002 = vmatprep.mubr.f32.mxu0 0.0
    %v4003 = vand.u32 %v3551, 4294901760
    %v4004 = vsub.f32 %v3551, %v4003
    %v4005 = vand.u32 %v4004, 4294901760
    %4006 = vmatmul.mubr.f32.gmra.mrb[0].mxu0 %v4005
    %v4007 = vpop.f32.mrb[0].mxu0
    %v4008 = vadd.f32 %v3912, %v4007
    %v4009 = vpop.f32.mrb[0].mxu0
    %4010 = vmatprep.mubr.f32.mxu0 0.0
    %v4011 = vand.u32 %v3552, 4294901760
    %v4012 = vsub.f32 %v3552, %v4011
    %v4013 = vand.u32 %v4012, 4294901760
    %4014 = vmatmul.mubr.f32.gmra.mrb[0].mxu0 %v4013
    %v4015 = vpop.f32.mrb[0].mxu0
    %v4016 = vadd.f32 %v3919, %v4015
    %v4017 = vpop.f32.mrb[0].mxu0
    %4018 = vdwg.mxu0
    %4019 = vmatprep.subr.mxu0 0.0
    %v4020 = vand.u32 %v31, 4294901760
    %v4021 = vsub.f32 %v31, %v4020
    %v4022 = vand.u32 %v4021, 4294901760
    %4023 = vmatpush1.msra.mxu0 %v4022
    %4024 = vmatprep.subr.mxu0 0.0
    %v4025 = vand.u32 %v32, 4294901760
    %v4026 = vsub.f32 %v32, %v4025
    %v4027 = vand.u32 %v4026, 4294901760
    %4028 = vmatpush1.msra.mxu0 %v4027
    %4029 = vmatprep.subr.mxu0 0.0
    %v4030 = vand.u32 %v33, 4294901760
    %v4031 = vsub.f32 %v33, %v4030
    %v4032 = vand.u32 %v4031, 4294901760
    %4033 = vmatpush1.msra.mxu0 %v4032
    %4034 = vmatprep.subr.mxu0 0.0
    %v4035 = vand.u32 %v34, 4294901760
    %v4036 = vsub.f32 %v34, %v4035
    %v4037 = vand.u32 %v4036, 4294901760
    %4038 = vmatpush1.msra.mxu0 %v4037
    %4039 = vmatprep.subr.mxu0 0.0
    %v4040 = vand.u32 %v35, 4294901760
    %v4041 = vsub.f32 %v35, %v4040
    %v4042 = vand.u32 %v4041, 4294901760
    %4043 = vmatpush1.msra.mxu0 %v4042
    %4044 = vmatprep.subr.mxu0 0.0
    %v4045 = vand.u32 %v36, 4294901760
    %v4046 = vsub.f32 %v36, %v4045
    %v4047 = vand.u32 %v4046, 4294901760
    %4048 = vmatpush1.msra.mxu0 %v4047
    %4049 = vmatprep.subr.mxu0 0.0
    %v4050 = vand.u32 %v37, 4294901760
    %v4051 = vsub.f32 %v37, %v4050
    %v4052 = vand.u32 %v4051, 4294901760
    %4053 = vmatpush1.msra.mxu0 %v4052
    %4054 = vmatprep.subr.mxu0 0.0
    %v4055 = vand.u32 %v38, 4294901760
    %v4056 = vsub.f32 %v38, %v4055
    %v4057 = vand.u32 %v4056, 4294901760
    %4058 = vmatpush1.msra.mxu0 %v4057
    %4059 = vmatprep.subr.mxu0 0.0
    %v4060 = vand.u32 %v39, 4294901760
    %v4061 = vsub.f32 %v39, %v4060
    %v4062 = vand.u32 %v4061, 4294901760
    %4063 = vmatpush1.msra.mxu0 %v4062
    %4064 = vmatprep.subr.mxu0 0.0
    %v4065 = vand.u32 %v40, 4294901760
    %v4066 = vsub.f32 %v40, %v4065
    %v4067 = vand.u32 %v4066, 4294901760
    %4068 = vmatpush1.msra.mxu0 %v4067
    %4069 = vmatprep.subr.mxu0 0.0
    %v4070 = vand.u32 %v41, 4294901760
    %v4071 = vsub.f32 %v41, %v4070
    %v4072 = vand.u32 %v4071, 4294901760
    %4073 = vmatpush1.msra.mxu0 %v4072
    %4074 = vmatprep.subr.mxu0 0.0
    %v4075 = vand.u32 %v42, 4294901760
    %v4076 = vsub.f32 %v42, %v4075
    %v4077 = vand.u32 %v4076, 4294901760
    %4078 = vmatpush1.msra.mxu0 %v4077
    %4079 = vmatprep.subr.mxu0 0.0
    %v4080 = vand.u32 %v43, 4294901760
    %v4081 = vsub.f32 %v43, %v4080
    %v4082 = vand.u32 %v4081, 4294901760
    %4083 = vmatpush1.msra.mxu0 %v4082
    %4084 = vmatprep.subr.mxu0 0.0
    %v4085 = vand.u32 %v44, 4294901760
    %v4086 = vsub.f32 %v44, %v4085
    %v4087 = vand.u32 %v4086, 4294901760
    %4088 = vmatpush1.msra.mxu0 %v4087
    %4089 = vmatprep.subr.mxu0 0.0
    %v4090 = vand.u32 %v45, 4294901760
    %v4091 = vsub.f32 %v45, %v4090
    %v4092 = vand.u32 %v4091, 4294901760
    %4093 = vmatpush1.msra.mxu0 %v4092
    %4094 = vmatprep.subr.mxu0 0.0
    %v4095 = vand.u32 %v46, 4294901760
    %v4096 = vsub.f32 %v46, %v4095
    %v4097 = vand.u32 %v4096, 4294901760
    %4098 = vmatpush1.msra.mxu0 %v4097
    %4099 = vmatprep.subr.mxu0 0.0
    %4100 = vmatpush1.msra.mxu0 0.0
    %4101 = vmatprep.subr.mxu0 0.0
    %4102 = vmatpush1.msra.mxu0 0.0
    %4103 = vmatprep.subr.mxu0 0.0
    %4104 = vmatpush1.msra.mxu0 0.0
    %4105 = vmatprep.subr.mxu0 0.0
    %4106 = vmatpush1.msra.mxu0 0.0
    %4107 = vmatprep.subr.mxu0 0.0
    %4108 = vmatpush1.msra.mxu0 0.0
    %4109 = vmatprep.subr.mxu0 0.0
    %4110 = vmatpush1.msra.mxu0 0.0
    %4111 = vmatprep.subr.mxu0 0.0
    %4112 = vmatpush1.msra.mxu0 0.0
    %4113 = vmatprep.subr.mxu0 0.0
    %4114 = vmatpush1.msra.mxu0 0.0
    %4115 = vmatprep.subr.mxu0 0.0
    %4116 = vmatpush1.msra.mxu0 0.0
    %4117 = vmatprep.subr.mxu0 0.0
    %4118 = vmatpush1.msra.mxu0 0.0
    %4119 = vmatprep.subr.mxu0 0.0
    %4120 = vmatpush1.msra.mxu0 0.0
    %4121 = vmatprep.subr.mxu0 0.0
    %4122 = vmatpush1.msra.mxu0 0.0
    %4123 = vmatprep.subr.mxu0 0.0
    %4124 = vmatpush1.msra.mxu0 0.0
    %4125 = vmatprep.subr.mxu0 0.0
    %4126 = vmatpush1.msra.mxu0 0.0
    %4127 = vmatprep.subr.mxu0 0.0
    %4128 = vmatpush1.msra.mxu0 0.0
    %4129 = vmatprep.subr.mxu0 0.0
    %4130 = vmatpush1.msra.mxu0 0.0
    %4131 = vmatprep.mubr.f32.mxu0 0.0
    %v4132 = vand.u32 %v3551, 4294901760
    %4133 = vmatmul.mubr.f32.gmra.mrb[0].mxu0 %v4132
    %v4134 = vpop.f32.mrb[0].mxu0
    %v4135 = vadd.f32 %v4008, %v4134
    %v4136 = vpop.f32.mrb[0].mxu0
    %4137 = vmatprep.mubr.f32.mxu0 0.0
    %v4138 = vand.u32 %v3552, 4294901760
    %4139 = vmatmul.mubr.f32.gmra.mrb[0].mxu0 %v4138
    %v4140 = vpop.f32.mrb[0].mxu0
    %v4141 = vadd.f32 %v4016, %v4140
    %v4142 = vpop.f32.mrb[0].mxu0
    %4143 = vdwg.mxu0
    %4144 = vmatprep.subr.mxu0 0.0
    %v4145 = vand.u32 %v31, 4294901760
    %4146 = vmatpush1.msra.mxu0 %v4145
    %4147 = vmatprep.subr.mxu0 0.0
    %v4148 = vand.u32 %v32, 4294901760
    %4149 = vmatpush1.msra.mxu0 %v4148
    %4150 = vmatprep.subr.mxu0 0.0
    %v4151 = vand.u32 %v33, 4294901760
    %4152 = vmatpush1.msra.mxu0 %v4151
    %4153 = vmatprep.subr.mxu0 0.0
    %v4154 = vand.u32 %v34, 4294901760
    %4155 = vmatpush1.msra.mxu0 %v4154
    %4156 = vmatprep.subr.mxu0 0.0
    %v4157 = vand.u32 %v35, 4294901760
    %4158 = vmatpush1.msra.mxu0 %v4157
    %4159 = vmatprep.subr.mxu0 0.0
    %v4160 = vand.u32 %v36, 4294901760
    %4161 = vmatpush1.msra.mxu0 %v4160
    %4162 = vmatprep.subr.mxu0 0.0
    %v4163 = vand.u32 %v37, 4294901760
    %4164 = vmatpush1.msra.mxu0 %v4163
    %4165 = vmatprep.subr.mxu0 0.0
    %v4166 = vand.u32 %v38, 4294901760
    %4167 = vmatpush1.msra.mxu0 %v4166
    %4168 = vmatprep.subr.mxu0 0.0
    %v4169 = vand.u32 %v39, 4294901760
    %4170 = vmatpush1.msra.mxu0 %v4169
    %4171 = vmatprep.subr.mxu0 0.0
    %v4172 = vand.u32 %v40, 4294901760
    %4173 = vmatpush1.msra.mxu0 %v4172
    %4174 = vmatprep.subr.mxu0 0.0
    %v4175 = vand.u32 %v41, 4294901760
    %4176 = vmatpush1.msra.mxu0 %v4175
    %4177 = vmatprep.subr.mxu0 0.0
    %v4178 = vand.u32 %v42, 4294901760
    %4179 = vmatpush1.msra.mxu0 %v4178
    %4180 = vmatprep.subr.mxu0 0.0
    %v4181 = vand.u32 %v43, 4294901760
    %4182 = vmatpush1.msra.mxu0 %v4181
    %4183 = vmatprep.subr.mxu0 0.0
    %v4184 = vand.u32 %v44, 4294901760
    %4185 = vmatpush1.msra.mxu0 %v4184
    %4186 = vmatprep.subr.mxu0 0.0
    %v4187 = vand.u32 %v45, 4294901760
    %4188 = vmatpush1.msra.mxu0 %v4187
    %4189 = vmatprep.subr.mxu0 0.0
    %v4190 = vand.u32 %v46, 4294901760
    %4191 = vmatpush1.msra.mxu0 %v4190
    %4192 = vmatprep.subr.mxu0 0.0
    %4193 = vmatpush1.msra.mxu0 0.0
    %4194 = vmatprep.subr.mxu0 0.0
    %4195 = vmatpush1.msra.mxu0 0.0
    %4196 = vmatprep.subr.mxu0 0.0
    %4197 = vmatpush1.msra.mxu0 0.0
    %4198 = vmatprep.subr.mxu0 0.0
    %4199 = vmatpush1.msra.mxu0 0.0
    %4200 = vmatprep.subr.mxu0 0.0
    %4201 = vmatpush1.msra.mxu0 0.0
    %4202 = vmatprep.subr.mxu0 0.0
    %4203 = vmatpush1.msra.mxu0 0.0
    %4204 = vmatprep.subr.mxu0 0.0
    %4205 = vmatpush1.msra.mxu0 0.0
    %4206 = vmatprep.subr.mxu0 0.0
    %4207 = vmatpush1.msra.mxu0 0.0
    %4208 = vmatprep.subr.mxu0 0.0
    %4209 = vmatpush1.msra.mxu0 0.0
    %4210 = vmatprep.subr.mxu0 0.0
    %4211 = vmatpush1.msra.mxu0 0.0
    %4212 = vmatprep.subr.mxu0 0.0
    %4213 = vmatpush1.msra.mxu0 0.0
    %4214 = vmatprep.subr.mxu0 0.0
    %4215 = vmatpush1.msra.mxu0 0.0
    %4216 = vmatprep.subr.mxu0 0.0
    %4217 = vmatpush1.msra.mxu0 0.0
    %4218 = vmatprep.subr.mxu0 0.0
    %4219 = vmatpush1.msra.mxu0 0.0
    %4220 = vmatprep.subr.mxu0 0.0
    %4221 = vmatpush1.msra.mxu0 0.0
    %4222 = vmatprep.subr.mxu0 0.0
    %4223 = vmatpush1.msra.mxu0 0.0
    %4224 = vmatprep.mubr.f32.mxu0 0.0
    %v4225 = vand.u32 %v3551, 4294901760
    %4226 = vmatmul.mubr.f32.gmra.mrb[0].mxu0 %v4225
    %v4227 = vpop.f32.mrb[0].mxu0
    %v4228 = vadd.f32 %v4135, %v4227
    %v4229 = vpop.f32.mrb[0].mxu0
    %4230 = vmatprep.mubr.f32.mxu0 0.0
    %v4231 = vand.u32 %v3552, 4294901760
    %4232 = vmatmul.mubr.f32.gmra.mrb[0].mxu0 %v4231
    %v4233 = vpop.f32.mrb[0].mxu0
    %v4234 = vadd.f32 %v4141, %v4233
    %v4235 = vpop.f32.mrb[0].mxu0
    %4236 = vdwg.mxu0
    %4237 = vst [vmem:[#allocation5 + $0x28] sm:$0xff] %v4228
    %4238 = vst [vmem:[#allocation5 + $0x68] sm:$0xff] %v4234
    %4239 = vset.pattern.permute.xlu0 6
    %4240 = vperm.xlu0 %4239, %v29
    %v4241 = vpop.permute.xlu0 %4240
    %4242 = vset.pattern.permute.xlu0 6
    %4243 = vperm.xlu0 %4242, %v30
    %v4244 = vpop.permute.xlu0 %4243
    %vm4245 = vcmp.eq.s32.totalorder %v4241, %v50
    %vm4246 = vcmp.eq.s32.totalorder %v4244, %v50
    %v4247 = vsel %vm4245, 1, 0
    %v4248 = vsel %vm4246, 1, 0
    %v4249 = vcvt.s32.f32 %v4247
    %v4250 = vcvt.s32.f32 %v4248
    %4251 = vmatprep.subr.mxu0 0.0
    %v4252 = vand.u32 %v31, 4294901760
    %4253 = vmatpush1.msra.mxu0 %v4252
    %4254 = vmatprep.subr.mxu0 0.0
    %v4255 = vand.u32 %v32, 4294901760
    %4256 = vmatpush1.msra.mxu0 %v4255
    %4257 = vmatprep.subr.mxu0 0.0
    %v4258 = vand.u32 %v33, 4294901760
    %4259 = vmatpush1.msra.mxu0 %v4258
    %4260 = vmatprep.subr.mxu0 0.0
    %v4261 = vand.u32 %v34, 4294901760
    %4262 = vmatpush1.msra.mxu0 %v4261
    %4263 = vmatprep.subr.mxu0 0.0
    %v4264 = vand.u32 %v35, 4294901760
    %4265 = vmatpush1.msra.mxu0 %v4264
    %4266 = vmatprep.subr.mxu0 0.0
    %v4267 = vand.u32 %v36, 4294901760
    %4268 = vmatpush1.msra.mxu0 %v4267
    %4269 = vmatprep.subr.mxu0 0.0
    %v4270 = vand.u32 %v37, 4294901760
    %4271 = vmatpush1.msra.mxu0 %v4270
    %4272 = vmatprep.subr.mxu0 0.0
    %v4273 = vand.u32 %v38, 4294901760
    %4274 = vmatpush1.msra.mxu0 %v4273
    %4275 = vmatprep.subr.mxu0 0.0
    %v4276 = vand.u32 %v39, 4294901760
    %4277 = vmatpush1.msra.mxu0 %v4276
    %4278 = vmatprep.subr.mxu0 0.0
    %v4279 = vand.u32 %v40, 4294901760
    %4280 = vmatpush1.msra.mxu0 %v4279
    %4281 = vmatprep.subr.mxu0 0.0
    %v4282 = vand.u32 %v41, 4294901760
    %4283 = vmatpush1.msra.mxu0 %v4282
    %4284 = vmatprep.subr.mxu0 0.0
    %v4285 = vand.u32 %v42, 4294901760
    %4286 = vmatpush1.msra.mxu0 %v4285
    %4287 = vmatprep.subr.mxu0 0.0
    %v4288 = vand.u32 %v43, 4294901760
    %4289 = vmatpush1.msra.mxu0 %v4288
    %4290 = vmatprep.subr.mxu0 0.0
    %v4291 = vand.u32 %v44, 4294901760
    %4292 = vmatpush1.msra.mxu0 %v4291
    %4293 = vmatprep.subr.mxu0 0.0
    %v4294 = vand.u32 %v45, 4294901760
    %4295 = vmatpush1.msra.mxu0 %v4294
    %4296 = vmatprep.subr.mxu0 0.0
    %v4297 = vand.u32 %v46, 4294901760
    %4298 = vmatpush1.msra.mxu0 %v4297
    %4299 = vmatprep.subr.mxu0 0.0
    %4300 = vmatpush1.msra.mxu0 0.0
    %4301 = vmatprep.subr.mxu0 0.0
    %4302 = vmatpush1.msra.mxu0 0.0
    %4303 = vmatprep.subr.mxu0 0.0
    %4304 = vmatpush1.msra.mxu0 0.0
    %4305 = vmatprep.subr.mxu0 0.0
    %4306 = vmatpush1.msra.mxu0 0.0
    %4307 = vmatprep.subr.mxu0 0.0
    %4308 = vmatpush1.msra.mxu0 0.0
    %4309 = vmatprep.subr.mxu0 0.0
    %4310 = vmatpush1.msra.mxu0 0.0
    %4311 = vmatprep.subr.mxu0 0.0
    %4312 = vmatpush1.msra.mxu0 0.0
    %4313 = vmatprep.subr.mxu0 0.0
    %4314 = vmatpush1.msra.mxu0 0.0
    %4315 = vmatprep.subr.mxu0 0.0
    %4316 = vmatpush1.msra.mxu0 0.0
    %4317 = vmatprep.subr.mxu0 0.0
    %4318 = vmatpush1.msra.mxu0 0.0
    %4319 = vmatprep.subr.mxu0 0.0
    %4320 = vmatpush1.msra.mxu0 0.0
    %4321 = vmatprep.subr.mxu0 0.0
    %4322 = vmatpush1.msra.mxu0 0.0
    %4323 = vmatprep.subr.mxu0 0.0
    %4324 = vmatpush1.msra.mxu0 0.0
    %4325 = vmatprep.subr.mxu0 0.0
    %4326 = vmatpush1.msra.mxu0 0.0
    %4327 = vmatprep.subr.mxu0 0.0
    %4328 = vmatpush1.msra.mxu0 0.0
    %4329 = vmatprep.subr.mxu0 0.0
    %4330 = vmatpush1.msra.mxu0 0.0
    %4331 = vmatprep.mubr.f32.mxu0 0.0
    %v4332 = vand.u32 %v4249, 4294901760
    %v4333 = vsub.f32 %v4249, %v4332
    %v4334 = vand.u32 %v4333, 4294901760
    %v4335 = vsub.f32 %v4333, %v4334
    %v4336 = vand.u32 %v4335, 4294901760
    %4337 = vmatmul.mubr.f32.gmra.mrb[0].mxu0 %v4336
    %v4338 = vpop.f32.mrb[0].mxu0
    %v4339 = vadd.f32 %v47, %v4338
    %v4340 = vpop.f32.mrb[0].mxu0
    %4341 = vmatprep.mubr.f32.mxu0 0.0
    %v4342 = vand.u32 %v4250, 4294901760
    %v4343 = vsub.f32 %v4250, %v4342
    %v4344 = vand.u32 %v4343, 4294901760
    %v4345 = vsub.f32 %v4343, %v4344
    %v4346 = vand.u32 %v4345, 4294901760
    %4347 = vmatmul.mubr.f32.gmra.mrb[0].mxu0 %v4346
    %v4348 = vpop.f32.mrb[0].mxu0
    %v4349 = vadd.f32 %v48, %v4348
    %v4350 = vpop.f32.mrb[0].mxu0
    %4351 = vdwg.mxu0
    %4352 = vmatprep.subr.mxu0 0.0
    %v4353 = vand.u32 %v31, 4294901760
    %v4354 = vsub.f32 %v31, %v4353
    %v4355 = vand.u32 %v4354, 4294901760
    %v4356 = vsub.f32 %v4354, %v4355
    %v4357 = vand.u32 %v4356, 4294901760
    %4358 = vmatpush1.msra.mxu0 %v4357
    %4359 = vmatprep.subr.mxu0 0.0
    %v4360 = vand.u32 %v32, 4294901760
    %v4361 = vsub.f32 %v32, %v4360
    %v4362 = vand.u32 %v4361, 4294901760
    %v4363 = vsub.f32 %v4361, %v4362
    %v4364 = vand.u32 %v4363, 4294901760
    %4365 = vmatpush1.msra.mxu0 %v4364
    %4366 = vmatprep.subr.mxu0 0.0
    %v4367 = vand.u32 %v33, 4294901760
    %v4368 = vsub.f32 %v33, %v4367
    %v4369 = vand.u32 %v4368, 4294901760
    %v4370 = vsub.f32 %v4368, %v4369
    %v4371 = vand.u32 %v4370, 4294901760
    %4372 = vmatpush1.msra.mxu0 %v4371
    %4373 = vmatprep.subr.mxu0 0.0
    %v4374 = vand.u32 %v34, 4294901760
    %v4375 = vsub.f32 %v34, %v4374
    %v4376 = vand.u32 %v4375, 4294901760
    %v4377 = vsub.f32 %v4375, %v4376
    %v4378 = vand.u32 %v4377, 4294901760
    %4379 = vmatpush1.msra.mxu0 %v4378
    %4380 = vmatprep.subr.mxu0 0.0
    %v4381 = vand.u32 %v35, 4294901760
    %v4382 = vsub.f32 %v35, %v4381
    %v4383 = vand.u32 %v4382, 4294901760
    %v4384 = vsub.f32 %v4382, %v4383
    %v4385 = vand.u32 %v4384, 4294901760
    %4386 = vmatpush1.msra.mxu0 %v4385
    %4387 = vmatprep.subr.mxu0 0.0
    %v4388 = vand.u32 %v36, 4294901760
    %v4389 = vsub.f32 %v36, %v4388
    %v4390 = vand.u32 %v4389, 4294901760
    %v4391 = vsub.f32 %v4389, %v4390
    %v4392 = vand.u32 %v4391, 4294901760
    %4393 = vmatpush1.msra.mxu0 %v4392
    %4394 = vmatprep.subr.mxu0 0.0
    %v4395 = vand.u32 %v37, 4294901760
    %v4396 = vsub.f32 %v37, %v4395
    %v4397 = vand.u32 %v4396, 4294901760
    %v4398 = vsub.f32 %v4396, %v4397
    %v4399 = vand.u32 %v4398, 4294901760
    %4400 = vmatpush1.msra.mxu0 %v4399
    %4401 = vmatprep.subr.mxu0 0.0
    %v4402 = vand.u32 %v38, 4294901760
    %v4403 = vsub.f32 %v38, %v4402
    %v4404 = vand.u32 %v4403, 4294901760
    %v4405 = vsub.f32 %v4403, %v4404
    %v4406 = vand.u32 %v4405, 4294901760
    %4407 = vmatpush1.msra.mxu0 %v4406
    %4408 = vmatprep.subr.mxu0 0.0
    %v4409 = vand.u32 %v39, 4294901760
    %v4410 = vsub.f32 %v39, %v4409
    %v4411 = vand.u32 %v4410, 4294901760
    %v4412 = vsub.f32 %v4410, %v4411
    %v4413 = vand.u32 %v4412, 4294901760
    %4414 = vmatpush1.msra.mxu0 %v4413
    %4415 = vmatprep.subr.mxu0 0.0
    %v4416 = vand.u32 %v40, 4294901760
    %v4417 = vsub.f32 %v40, %v4416
    %v4418 = vand.u32 %v4417, 4294901760
    %v4419 = vsub.f32 %v4417, %v4418
    %v4420 = vand.u32 %v4419, 4294901760
    %4421 = vmatpush1.msra.mxu0 %v4420
    %4422 = vmatprep.subr.mxu0 0.0
    %v4423 = vand.u32 %v41, 4294901760
    %v4424 = vsub.f32 %v41, %v4423
    %v4425 = vand.u32 %v4424, 4294901760
    %v4426 = vsub.f32 %v4424, %v4425
    %v4427 = vand.u32 %v4426, 4294901760
    %4428 = vmatpush1.msra.mxu0 %v4427
    %4429 = vmatprep.subr.mxu0 0.0
    %v4430 = vand.u32 %v42, 4294901760
    %v4431 = vsub.f32 %v42, %v4430
    %v4432 = vand.u32 %v4431, 4294901760
    %v4433 = vsub.f32 %v4431, %v4432
    %v4434 = vand.u32 %v4433, 4294901760
    %4435 = vmatpush1.msra.mxu0 %v4434
    %4436 = vmatprep.subr.mxu0 0.0
    %v4437 = vand.u32 %v43, 4294901760
    %v4438 = vsub.f32 %v43, %v4437
    %v4439 = vand.u32 %v4438, 4294901760
    %v4440 = vsub.f32 %v4438, %v4439
    %v4441 = vand.u32 %v4440, 4294901760
    %4442 = vmatpush1.msra.mxu0 %v4441
    %4443 = vmatprep.subr.mxu0 0.0
    %v4444 = vand.u32 %v44, 4294901760
    %v4445 = vsub.f32 %v44, %v4444
    %v4446 = vand.u32 %v4445, 4294901760
    %v4447 = vsub.f32 %v4445, %v4446
    %v4448 = vand.u32 %v4447, 4294901760
    %4449 = vmatpush1.msra.mxu0 %v4448
    %4450 = vmatprep.subr.mxu0 0.0
    %v4451 = vand.u32 %v45, 4294901760
    %v4452 = vsub.f32 %v45, %v4451
    %v4453 = vand.u32 %v4452, 4294901760
    %v4454 = vsub.f32 %v4452, %v4453
    %v4455 = vand.u32 %v4454, 4294901760
    %4456 = vmatpush1.msra.mxu0 %v4455
    %4457 = vmatprep.subr.mxu0 0.0
    %v4458 = vand.u32 %v46, 4294901760
    %v4459 = vsub.f32 %v46, %v4458
    %v4460 = vand.u32 %v4459, 4294901760
    %v4461 = vsub.f32 %v4459, %v4460
    %v4462 = vand.u32 %v4461, 4294901760
    %4463 = vmatpush1.msra.mxu0 %v4462
    %4464 = vmatprep.subr.mxu0 0.0
    %4465 = vmatpush1.msra.mxu0 0.0
    %4466 = vmatprep.subr.mxu0 0.0
    %4467 = vmatpush1.msra.mxu0 0.0
    %4468 = vmatprep.subr.mxu0 0.0
    %4469 = vmatpush1.msra.mxu0 0.0
    %4470 = vmatprep.subr.mxu0 0.0
    %4471 = vmatpush1.msra.mxu0 0.0
    %4472 = vmatprep.subr.mxu0 0.0
    %4473 = vmatpush1.msra.mxu0 0.0
    %4474 = vmatprep.subr.mxu0 0.0
    %4475 = vmatpush1.msra.mxu0 0.0
    %4476 = vmatprep.subr.mxu0 0.0
    %4477 = vmatpush1.msra.mxu0 0.0
    %4478 = vmatprep.subr.mxu0 0.0
    %4479 = vmatpush1.msra.mxu0 0.0
    %4480 = vmatprep.subr.mxu0 0.0
    %4481 = vmatpush1.msra.mxu0 0.0
    %4482 = vmatprep.subr.mxu0 0.0
    %4483 = vmatpush1.msra.mxu0 0.0
    %4484 = vmatprep.subr.mxu0 0.0
    %4485 = vmatpush1.msra.mxu0 0.0
    %4486 = vmatprep.subr.mxu0 0.0
    %4487 = vmatpush1.msra.mxu0 0.0
    %4488 = vmatprep.subr.mxu0 0.0
    %4489 = vmatpush1.msra.mxu0 0.0
    %4490 = vmatprep.subr.mxu0 0.0
    %4491 = vmatpush1.msra.mxu0 0.0
    %4492 = vmatprep.subr.mxu0 0.0
    %4493 = vmatpush1.msra.mxu0 0.0
    %4494 = vmatprep.subr.mxu0 0.0
    %4495 = vmatpush1.msra.mxu0 0.0
    %4496 = vmatprep.mubr.f32.mxu0 0.0
    %v4497 = vand.u32 %v4249, 4294901760
    %4498 = vmatmul.mubr.f32.gmra.mrb[0].mxu0 %v4497
    %v4499 = vpop.f32.mrb[0].mxu0
    %v4500 = vadd.f32 %v4339, %v4499
    %v4501 = vpop.f32.mrb[0].mxu0
    %4502 = vmatprep.mubr.f32.mxu0 0.0
    %v4503 = vand.u32 %v4250, 4294901760
    %4504 = vmatmul.mubr.f32.gmra.mrb[0].mxu0 %v4503
    %v4505 = vpop.f32.mrb[0].mxu0
    %v4506 = vadd.f32 %v4349, %v4505
    %v4507 = vpop.f32.mrb[0].mxu0
    %4508 = vdwg.mxu0
    %4509 = vmatprep.subr.mxu0 0.0
    %v4510 = vand.u32 %v31, 4294901760
    %v4511 = vsub.f32 %v31, %v4510
    %4512 = vmatpush1.msra.mxu0 %v4511
    %4513 = vmatprep.subr.mxu0 0.0
    %v4514 = vand.u32 %v32, 4294901760
    %v4515 = vsub.f32 %v32, %v4514
    %4516 = vmatpush1.msra.mxu0 %v4515
    %4517 = vmatprep.subr.mxu0 0.0
    %v4518 = vand.u32 %v33, 4294901760
    %v4519 = vsub.f32 %v33, %v4518
    %4520 = vmatpush1.msra.mxu0 %v4519
    %4521 = vmatprep.subr.mxu0 0.0
    %v4522 = vand.u32 %v34, 4294901760
    %v4523 = vsub.f32 %v34, %v4522
    %4524 = vmatpush1.msra.mxu0 %v4523
    %4525 = vmatprep.subr.mxu0 0.0
    %v4526 = vand.u32 %v35, 4294901760
    %v4527 = vsub.f32 %v35, %v4526
    %4528 = vmatpush1.msra.mxu0 %v4527
    %4529 = vmatprep.subr.mxu0 0.0
    %v4530 = vand.u32 %v36, 4294901760
    %v4531 = vsub.f32 %v36, %v4530
    %4532 = vmatpush1.msra.mxu0 %v4531
    %4533 = vmatprep.subr.mxu0 0.0
    %v4534 = vand.u32 %v37, 4294901760
    %v4535 = vsub.f32 %v37, %v4534
    %4536 = vmatpush1.msra.mxu0 %v4535
    %4537 = vmatprep.subr.mxu0 0.0
    %v4538 = vand.u32 %v38, 4294901760
    %v4539 = vsub.f32 %v38, %v4538
    %4540 = vmatpush1.msra.mxu0 %v4539
    %4541 = vmatprep.subr.mxu0 0.0
    %v4542 = vand.u32 %v39, 4294901760
    %v4543 = vsub.f32 %v39, %v4542
    %4544 = vmatpush1.msra.mxu0 %v4543
    %4545 = vmatprep.subr.mxu0 0.0
    %v4546 = vand.u32 %v40, 4294901760
    %v4547 = vsub.f32 %v40, %v4546
    %4548 = vmatpush1.msra.mxu0 %v4547
    %4549 = vmatprep.subr.mxu0 0.0
    %v4550 = vand.u32 %v41, 4294901760
    %v4551 = vsub.f32 %v41, %v4550
    %4552 = vmatpush1.msra.mxu0 %v4551
    %4553 = vmatprep.subr.mxu0 0.0
    %v4554 = vand.u32 %v42, 4294901760
    %v4555 = vsub.f32 %v42, %v4554
    %4556 = vmatpush1.msra.mxu0 %v4555
    %4557 = vmatprep.subr.mxu0 0.0
    %v4558 = vand.u32 %v43, 4294901760
    %v4559 = vsub.f32 %v43, %v4558
    %4560 = vmatpush1.msra.mxu0 %v4559
    %4561 = vmatprep.subr.mxu0 0.0
    %v4562 = vand.u32 %v44, 4294901760
    %v4563 = vsub.f32 %v44, %v4562
    %4564 = vmatpush1.msra.mxu0 %v4563
    %4565 = vmatprep.subr.mxu0 0.0
    %v4566 = vand.u32 %v45, 4294901760
    %v4567 = vsub.f32 %v45, %v4566
    %4568 = vmatpush1.msra.mxu0 %v4567
    %4569 = vmatprep.subr.mxu0 0.0
    %v4570 = vand.u32 %v46, 4294901760
    %v4571 = vsub.f32 %v46, %v4570
    %4572 = vmatpush1.msra.mxu0 %v4571
    %4573 = vmatprep.subr.mxu0 0.0
    %4574 = vmatpush1.msra.mxu0 0.0
    %4575 = vmatprep.subr.mxu0 0.0
    %4576 = vmatpush1.msra.mxu0 0.0
    %4577 = vmatprep.subr.mxu0 0.0
    %4578 = vmatpush1.msra.mxu0 0.0
    %4579 = vmatprep.subr.mxu0 0.0
    %4580 = vmatpush1.msra.mxu0 0.0
    %4581 = vmatprep.subr.mxu0 0.0
    %4582 = vmatpush1.msra.mxu0 0.0
    %4583 = vmatprep.subr.mxu0 0.0
    %4584 = vmatpush1.msra.mxu0 0.0
    %4585 = vmatprep.subr.mxu0 0.0
    %4586 = vmatpush1.msra.mxu0 0.0
    %4587 = vmatprep.subr.mxu0 0.0
    %4588 = vmatpush1.msra.mxu0 0.0
    %4589 = vmatprep.subr.mxu0 0.0
    %4590 = vmatpush1.msra.mxu0 0.0
    %4591 = vmatprep.subr.mxu0 0.0
    %4592 = vmatpush1.msra.mxu0 0.0
    %4593 = vmatprep.subr.mxu0 0.0
    %4594 = vmatpush1.msra.mxu0 0.0
    %4595 = vmatprep.subr.mxu0 0.0
    %4596 = vmatpush1.msra.mxu0 0.0
    %4597 = vmatprep.subr.mxu0 0.0
    %4598 = vmatpush1.msra.mxu0 0.0
    %4599 = vmatprep.subr.mxu0 0.0
    %4600 = vmatpush1.msra.mxu0 0.0
    %4601 = vmatprep.subr.mxu0 0.0
    %4602 = vmatpush1.msra.mxu0 0.0
    %4603 = vmatprep.subr.mxu0 0.0
    %4604 = vmatpush1.msra.mxu0 0.0
    %4605 = vmatprep.mubr.f32.mxu0 0.0
    %v4606 = vand.u32 %v4249, 4294901760
    %v4607 = vsub.f32 %v4249, %v4606
    %4608 = vmatmul.mubr.f32.gmra.mrb[0].mxu0 %v4607
    %v4609 = vpop.f32.mrb[0].mxu0
    %v4610 = vadd.f32 %v4500, %v4609
    %v4611 = vpop.f32.mrb[0].mxu0
    %4612 = vmatprep.mubr.f32.mxu0 0.0
    %v4613 = vand.u32 %v4250, 4294901760
    %v4614 = vsub.f32 %v4250, %v4613
    %4615 = vmatmul.mubr.f32.gmra.mrb[0].mxu0 %v4614
    %v4616 = vpop.f32.mrb[0].mxu0
    %v4617 = vadd.f32 %v4506, %v4616
    %v4618 = vpop.f32.mrb[0].mxu0
    %4619 = vdwg.mxu0
    %4620 = vmatprep.subr.mxu0 0.0
    %v4621 = vand.u32 %v31, 4294901760
    %4622 = vmatpush1.msra.mxu0 %v4621
    %4623 = vmatprep.subr.mxu0 0.0
    %v4624 = vand.u32 %v32, 4294901760
    %4625 = vmatpush1.msra.mxu0 %v4624
    %4626 = vmatprep.subr.mxu0 0.0
    %v4627 = vand.u32 %v33, 4294901760
    %4628 = vmatpush1.msra.mxu0 %v4627
    %4629 = vmatprep.subr.mxu0 0.0
    %v4630 = vand.u32 %v34, 4294901760
    %4631 = vmatpush1.msra.mxu0 %v4630
    %4632 = vmatprep.subr.mxu0 0.0
    %v4633 = vand.u32 %v35, 4294901760
    %4634 = vmatpush1.msra.mxu0 %v4633
    %4635 = vmatprep.subr.mxu0 0.0
    %v4636 = vand.u32 %v36, 4294901760
    %4637 = vmatpush1.msra.mxu0 %v4636
    %4638 = vmatprep.subr.mxu0 0.0
    %v4639 = vand.u32 %v37, 4294901760
    %4640 = vmatpush1.msra.mxu0 %v4639
    %4641 = vmatprep.subr.mxu0 0.0
    %v4642 = vand.u32 %v38, 4294901760
    %4643 = vmatpush1.msra.mxu0 %v4642
    %4644 = vmatprep.subr.mxu0 0.0
    %v4645 = vand.u32 %v39, 4294901760
    %4646 = vmatpush1.msra.mxu0 %v4645
    %4647 = vmatprep.subr.mxu0 0.0
    %v4648 = vand.u32 %v40, 4294901760
    %4649 = vmatpush1.msra.mxu0 %v4648
    %4650 = vmatprep.subr.mxu0 0.0
    %v4651 = vand.u32 %v41, 4294901760
    %4652 = vmatpush1.msra.mxu0 %v4651
    %4653 = vmatprep.subr.mxu0 0.0
    %v4654 = vand.u32 %v42, 4294901760
    %4655 = vmatpush1.msra.mxu0 %v4654
    %4656 = vmatprep.subr.mxu0 0.0
    %v4657 = vand.u32 %v43, 4294901760
    %4658 = vmatpush1.msra.mxu0 %v4657
    %4659 = vmatprep.subr.mxu0 0.0
    %v4660 = vand.u32 %v44, 4294901760
    %4661 = vmatpush1.msra.mxu0 %v4660
    %4662 = vmatprep.subr.mxu0 0.0
    %v4663 = vand.u32 %v45, 4294901760
    %4664 = vmatpush1.msra.mxu0 %v4663
    %4665 = vmatprep.subr.mxu0 0.0
    %v4666 = vand.u32 %v46, 4294901760
    %4667 = vmatpush1.msra.mxu0 %v4666
    %4668 = vmatprep.subr.mxu0 0.0
    %4669 = vmatpush1.msra.mxu0 0.0
    %4670 = vmatprep.subr.mxu0 0.0
    %4671 = vmatpush1.msra.mxu0 0.0
    %4672 = vmatprep.subr.mxu0 0.0
    %4673 = vmatpush1.msra.mxu0 0.0
    %4674 = vmatprep.subr.mxu0 0.0
    %4675 = vmatpush1.msra.mxu0 0.0
    %4676 = vmatprep.subr.mxu0 0.0
    %4677 = vmatpush1.msra.mxu0 0.0
    %4678 = vmatprep.subr.mxu0 0.0
    %4679 = vmatpush1.msra.mxu0 0.0
    %4680 = vmatprep.subr.mxu0 0.0
    %4681 = vmatpush1.msra.mxu0 0.0
    %4682 = vmatprep.subr.mxu0 0.0
    %4683 = vmatpush1.msra.mxu0 0.0
    %4684 = vmatprep.subr.mxu0 0.0
    %4685 = vmatpush1.msra.mxu0 0.0
    %4686 = vmatprep.subr.mxu0 0.0
    %4687 = vmatpush1.msra.mxu0 0.0
    %4688 = vmatprep.subr.mxu0 0.0
    %4689 = vmatpush1.msra.mxu0 0.0
    %4690 = vmatprep.subr.mxu0 0.0
    %4691 = vmatpush1.msra.mxu0 0.0
    %4692 = vmatprep.subr.mxu0 0.0
    %4693 = vmatpush1.msra.mxu0 0.0
    %4694 = vmatprep.subr.mxu0 0.0
    %4695 = vmatpush1.msra.mxu0 0.0
    %4696 = vmatprep.subr.mxu0 0.0
    %4697 = vmatpush1.msra.mxu0 0.0
    %4698 = vmatprep.subr.mxu0 0.0
    %4699 = vmatpush1.msra.mxu0 0.0
    %4700 = vmatprep.mubr.f32.mxu0 0.0
    %v4701 = vand.u32 %v4249, 4294901760
    %v4702 = vsub.f32 %v4249, %v4701
    %v4703 = vand.u32 %v4702, 4294901760
    %4704 = vmatmul.mubr.f32.gmra.mrb[0].mxu0 %v4703
    %v4705 = vpop.f32.mrb[0].mxu0
    %v4706 = vadd.f32 %v4610, %v4705
    %v4707 = vpop.f32.mrb[0].mxu0
    %4708 = vmatprep.mubr.f32.mxu0 0.0
    %v4709 = vand.u32 %v4250, 4294901760
    %v4710 = vsub.f32 %v4250, %v4709
    %v4711 = vand.u32 %v4710, 4294901760
    %4712 = vmatmul.mubr.f32.gmra.mrb[0].mxu0 %v4711
    %v4713 = vpop.f32.mrb[0].mxu0
    %v4714 = vadd.f32 %v4617, %v4713
    %v4715 = vpop.f32.mrb[0].mxu0
    %4716 = vdwg.mxu0
    %4717 = vmatprep.subr.mxu0 0.0
    %v4718 = vand.u32 %v31, 4294901760
    %v4719 = vsub.f32 %v31, %v4718
    %v4720 = vand.u32 %v4719, 4294901760
    %4721 = vmatpush1.msra.mxu0 %v4720
    %4722 = vmatprep.subr.mxu0 0.0
    %v4723 = vand.u32 %v32, 4294901760
    %v4724 = vsub.f32 %v32, %v4723
    %v4725 = vand.u32 %v4724, 4294901760
    %4726 = vmatpush1.msra.mxu0 %v4725
    %4727 = vmatprep.subr.mxu0 0.0
    %v4728 = vand.u32 %v33, 4294901760
    %v4729 = vsub.f32 %v33, %v4728
    %v4730 = vand.u32 %v4729, 4294901760
    %4731 = vmatpush1.msra.mxu0 %v4730
    %4732 = vmatprep.subr.mxu0 0.0
    %v4733 = vand.u32 %v34, 4294901760
    %v4734 = vsub.f32 %v34, %v4733
    %v4735 = vand.u32 %v4734, 4294901760
    %4736 = vmatpush1.msra.mxu0 %v4735
    %4737 = vmatprep.subr.mxu0 0.0
    %v4738 = vand.u32 %v35, 4294901760
    %v4739 = vsub.f32 %v35, %v4738
    %v4740 = vand.u32 %v4739, 4294901760
    %4741 = vmatpush1.msra.mxu0 %v4740
    %4742 = vmatprep.subr.mxu0 0.0
    %v4743 = vand.u32 %v36, 4294901760
    %v4744 = vsub.f32 %v36, %v4743
    %v4745 = vand.u32 %v4744, 4294901760
    %4746 = vmatpush1.msra.mxu0 %v4745
    %4747 = vmatprep.subr.mxu0 0.0
    %v4748 = vand.u32 %v37, 4294901760
    %v4749 = vsub.f32 %v37, %v4748
    %v4750 = vand.u32 %v4749, 4294901760
    %4751 = vmatpush1.msra.mxu0 %v4750
    %4752 = vmatprep.subr.mxu0 0.0
    %v4753 = vand.u32 %v38, 4294901760
    %v4754 = vsub.f32 %v38, %v4753
    %v4755 = vand.u32 %v4754, 4294901760
    %4756 = vmatpush1.msra.mxu0 %v4755
    %4757 = vmatprep.subr.mxu0 0.0
    %v4758 = vand.u32 %v39, 4294901760
    %v4759 = vsub.f32 %v39, %v4758
    %v4760 = vand.u32 %v4759, 4294901760
    %4761 = vmatpush1.msra.mxu0 %v4760
    %4762 = vmatprep.subr.mxu0 0.0
    %v4763 = vand.u32 %v40, 4294901760
    %v4764 = vsub.f32 %v40, %v4763
    %v4765 = vand.u32 %v4764, 4294901760
    %4766 = vmatpush1.msra.mxu0 %v4765
    %4767 = vmatprep.subr.mxu0 0.0
    %v4768 = vand.u32 %v41, 4294901760
    %v4769 = vsub.f32 %v41, %v4768
    %v4770 = vand.u32 %v4769, 4294901760
    %4771 = vmatpush1.msra.mxu0 %v4770
    %4772 = vmatprep.subr.mxu0 0.0
    %v4773 = vand.u32 %v42, 4294901760
    %v4774 = vsub.f32 %v42, %v4773
    %v4775 = vand.u32 %v4774, 4294901760
    %4776 = vmatpush1.msra.mxu0 %v4775
    %4777 = vmatprep.subr.mxu0 0.0
    %v4778 = vand.u32 %v43, 4294901760
    %v4779 = vsub.f32 %v43, %v4778
    %v4780 = vand.u32 %v4779, 4294901760
    %4781 = vmatpush1.msra.mxu0 %v4780
    %4782 = vmatprep.subr.mxu0 0.0
    %v4783 = vand.u32 %v44, 4294901760
    %v4784 = vsub.f32 %v44, %v4783
    %v4785 = vand.u32 %v4784, 4294901760
    %4786 = vmatpush1.msra.mxu0 %v4785
    %4787 = vmatprep.subr.mxu0 0.0
    %v4788 = vand.u32 %v45, 4294901760
    %v4789 = vsub.f32 %v45, %v4788
    %v4790 = vand.u32 %v4789, 4294901760
    %4791 = vmatpush1.msra.mxu0 %v4790
    %4792 = vmatprep.subr.mxu0 0.0
    %v4793 = vand.u32 %v46, 4294901760
    %v4794 = vsub.f32 %v46, %v4793
    %v4795 = vand.u32 %v4794, 4294901760
    %4796 = vmatpush1.msra.mxu0 %v4795
    %4797 = vmatprep.subr.mxu0 0.0
    %4798 = vmatpush1.msra.mxu0 0.0
    %4799 = vmatprep.subr.mxu0 0.0
    %4800 = vmatpush1.msra.mxu0 0.0
    %4801 = vmatprep.subr.mxu0 0.0
    %4802 = vmatpush1.msra.mxu0 0.0
    %4803 = vmatprep.subr.mxu0 0.0
    %4804 = vmatpush1.msra.mxu0 0.0
    %4805 = vmatprep.subr.mxu0 0.0
    %4806 = vmatpush1.msra.mxu0 0.0
    %4807 = vmatprep.subr.mxu0 0.0
    %4808 = vmatpush1.msra.mxu0 0.0
    %4809 = vmatprep.subr.mxu0 0.0
    %4810 = vmatpush1.msra.mxu0 0.0
    %4811 = vmatprep.subr.mxu0 0.0
    %4812 = vmatpush1.msra.mxu0 0.0
    %4813 = vmatprep.subr.mxu0 0.0
    %4814 = vmatpush1.msra.mxu0 0.0
    %4815 = vmatprep.subr.mxu0 0.0
    %4816 = vmatpush1.msra.mxu0 0.0
    %4817 = vmatprep.subr.mxu0 0.0
    %4818 = vmatpush1.msra.mxu0 0.0
    %4819 = vmatprep.subr.mxu0 0.0
    %4820 = vmatpush1.msra.mxu0 0.0
    %4821 = vmatprep.subr.mxu0 0.0
    %4822 = vmatpush1.msra.mxu0 0.0
    %4823 = vmatprep.subr.mxu0 0.0
    %4824 = vmatpush1.msra.mxu0 0.0
    %4825 = vmatprep.subr.mxu0 0.0
    %4826 = vmatpush1.msra.mxu0 0.0
    %4827 = vmatprep.subr.mxu0 0.0
    %4828 = vmatpush1.msra.mxu0 0.0
    %4829 = vmatprep.mubr.f32.mxu0 0.0
    %v4830 = vand.u32 %v4249, 4294901760
    %4831 = vmatmul.mubr.f32.gmra.mrb[0].mxu0 %v4830
    %v4832 = vpop.f32.mrb[0].mxu0
    %v4833 = vadd.f32 %v4706, %v4832
    %v4834 = vpop.f32.mrb[0].mxu0
    %4835 = vmatprep.mubr.f32.mxu0 0.0
    %v4836 = vand.u32 %v4250, 4294901760
    %4837 = vmatmul.mubr.f32.gmra.mrb[0].mxu0 %v4836
    %v4838 = vpop.f32.mrb[0].mxu0
    %v4839 = vadd.f32 %v4714, %v4838
    %v4840 = vpop.f32.mrb[0].mxu0
    %4841 = vdwg.mxu0
    %4842 = vmatprep.subr.mxu0 0.0
    %v4843 = vand.u32 %v31, 4294901760
    %4844 = vmatpush1.msra.mxu0 %v4843
    %4845 = vmatprep.subr.mxu0 0.0
    %v4846 = vand.u32 %v32, 4294901760
    %4847 = vmatpush1.msra.mxu0 %v4846
    %4848 = vmatprep.subr.mxu0 0.0
    %v4849 = vand.u32 %v33, 4294901760
    %4850 = vmatpush1.msra.mxu0 %v4849
    %4851 = vmatprep.subr.mxu0 0.0
    %v4852 = vand.u32 %v34, 4294901760
    %4853 = vmatpush1.msra.mxu0 %v4852
    %4854 = vmatprep.subr.mxu0 0.0
    %v4855 = vand.u32 %v35, 4294901760
    %4856 = vmatpush1.msra.mxu0 %v4855
    %4857 = vmatprep.subr.mxu0 0.0
    %v4858 = vand.u32 %v36, 4294901760
    %4859 = vmatpush1.msra.mxu0 %v4858
    %4860 = vmatprep.subr.mxu0 0.0
    %v4861 = vand.u32 %v37, 4294901760
    %4862 = vmatpush1.msra.mxu0 %v4861
    %4863 = vmatprep.subr.mxu0 0.0
    %v4864 = vand.u32 %v38, 4294901760
    %4865 = vmatpush1.msra.mxu0 %v4864
    %4866 = vmatprep.subr.mxu0 0.0
    %v4867 = vand.u32 %v39, 4294901760
    %4868 = vmatpush1.msra.mxu0 %v4867
    %4869 = vmatprep.subr.mxu0 0.0
    %v4870 = vand.u32 %v40, 4294901760
    %4871 = vmatpush1.msra.mxu0 %v4870
    %4872 = vmatprep.subr.mxu0 0.0
    %v4873 = vand.u32 %v41, 4294901760
    %4874 = vmatpush1.msra.mxu0 %v4873
    %4875 = vmatprep.subr.mxu0 0.0
    %v4876 = vand.u32 %v42, 4294901760
    %4877 = vmatpush1.msra.mxu0 %v4876
    %4878 = vmatprep.subr.mxu0 0.0
    %v4879 = vand.u32 %v43, 4294901760
    %4880 = vmatpush1.msra.mxu0 %v4879
    %4881 = vmatprep.subr.mxu0 0.0
    %v4882 = vand.u32 %v44, 4294901760
    %4883 = vmatpush1.msra.mxu0 %v4882
    %4884 = vmatprep.subr.mxu0 0.0
    %v4885 = vand.u32 %v45, 4294901760
    %4886 = vmatpush1.msra.mxu0 %v4885
    %4887 = vmatprep.subr.mxu0 0.0
    %v4888 = vand.u32 %v46, 4294901760
    %4889 = vmatpush1.msra.mxu0 %v4888
    %4890 = vmatprep.subr.mxu0 0.0
    %4891 = vmatpush1.msra.mxu0 0.0
    %4892 = vmatprep.subr.mxu0 0.0
    %4893 = vmatpush1.msra.mxu0 0.0
    %4894 = vmatprep.subr.mxu0 0.0
    %4895 = vmatpush1.msra.mxu0 0.0
    %4896 = vmatprep.subr.mxu0 0.0
    %4897 = vmatpush1.msra.mxu0 0.0
    %4898 = vmatprep.subr.mxu0 0.0
    %4899 = vmatpush1.msra.mxu0 0.0
    %4900 = vmatprep.subr.mxu0 0.0
    %4901 = vmatpush1.msra.mxu0 0.0
    %4902 = vmatprep.subr.mxu0 0.0
    %4903 = vmatpush1.msra.mxu0 0.0
    %4904 = vmatprep.subr.mxu0 0.0
    %4905 = vmatpush1.msra.mxu0 0.0
    %4906 = vmatprep.subr.mxu0 0.0
    %4907 = vmatpush1.msra.mxu0 0.0
    %4908 = vmatprep.subr.mxu0 0.0
    %4909 = vmatpush1.msra.mxu0 0.0
    %4910 = vmatprep.subr.mxu0 0.0
    %4911 = vmatpush1.msra.mxu0 0.0
    %4912 = vmatprep.subr.mxu0 0.0
    %4913 = vmatpush1.msra.mxu0 0.0
    %4914 = vmatprep.subr.mxu0 0.0
    %4915 = vmatpush1.msra.mxu0 0.0
    %4916 = vmatprep.subr.mxu0 0.0
    %4917 = vmatpush1.msra.mxu0 0.0
    %4918 = vmatprep.subr.mxu0 0.0
    %4919 = vmatpush1.msra.mxu0 0.0
    %4920 = vmatprep.subr.mxu0 0.0
    %4921 = vmatpush1.msra.mxu0 0.0
    %4922 = vmatprep.mubr.f32.mxu0 0.0
    %v4923 = vand.u32 %v4249, 4294901760
    %4924 = vmatmul.mubr.f32.gmra.mrb[0].mxu0 %v4923
    %v4925 = vpop.f32.mrb[0].mxu0
    %v4926 = vadd.f32 %v4833, %v4925
    %v4927 = vpop.f32.mrb[0].mxu0
    %4928 = vmatprep.mubr.f32.mxu0 0.0
    %v4929 = vand.u32 %v4250, 4294901760
    %4930 = vmatmul.mubr.f32.gmra.mrb[0].mxu0 %v4929
    %v4931 = vpop.f32.mrb[0].mxu0
    %v4932 = vadd.f32 %v4839, %v4931
    %v4933 = vpop.f32.mrb[0].mxu0
    %4934 = vdwg.mxu0
    %4935 = vst [vmem:[#allocation5 + $0x30] sm:$0xff] %v4926
    %4936 = vst [vmem:[#allocation5 + $0x70] sm:$0xff] %v4932
    %4937 = vset.pattern.permute.xlu0 7
    %4938 = vperm.xlu0 %4937, %v29
    %v4939 = vpop.permute.xlu0 %4938
    %4940 = vset.pattern.permute.xlu0 7
    %4941 = vperm.xlu0 %4940, %v30
    %v4942 = vpop.permute.xlu0 %4941
    %vm4943 = vcmp.eq.s32.totalorder %v4939, %v50
    %vm4944 = vcmp.eq.s32.totalorder %v4942, %v50
    %v4945 = vsel %vm4943, 1, 0
    %v4946 = vsel %vm4944, 1, 0
    %v4947 = vcvt.s32.f32 %v4945
    %v4948 = vcvt.s32.f32 %v4946
    %4949 = vmatprep.subr.mxu0 0.0
    %v4950 = vand.u32 %v31, 4294901760
    %4951 = vmatpush1.msra.mxu0 %v4950
    %4952 = vmatprep.subr.mxu0 0.0
    %v4953 = vand.u32 %v32, 4294901760
    %4954 = vmatpush1.msra.mxu0 %v4953
    %4955 = vmatprep.subr.mxu0 0.0
    %v4956 = vand.u32 %v33, 4294901760
    %4957 = vmatpush1.msra.mxu0 %v4956
    %4958 = vmatprep.subr.mxu0 0.0
    %v4959 = vand.u32 %v34, 4294901760
    %4960 = vmatpush1.msra.mxu0 %v4959
    %4961 = vmatprep.subr.mxu0 0.0
    %v4962 = vand.u32 %v35, 4294901760
    %4963 = vmatpush1.msra.mxu0 %v4962
    %4964 = vmatprep.subr.mxu0 0.0
    %v4965 = vand.u32 %v36, 4294901760
    %4966 = vmatpush1.msra.mxu0 %v4965
    %4967 = vmatprep.subr.mxu0 0.0
    %v4968 = vand.u32 %v37, 4294901760
    %4969 = vmatpush1.msra.mxu0 %v4968
    %4970 = vmatprep.subr.mxu0 0.0
    %v4971 = vand.u32 %v38, 4294901760
    %4972 = vmatpush1.msra.mxu0 %v4971
    %4973 = vmatprep.subr.mxu0 0.0
    %v4974 = vand.u32 %v39, 4294901760
    %4975 = vmatpush1.msra.mxu0 %v4974
    %4976 = vmatprep.subr.mxu0 0.0
    %v4977 = vand.u32 %v40, 4294901760
    %4978 = vmatpush1.msra.mxu0 %v4977
    %4979 = vmatprep.subr.mxu0 0.0
    %v4980 = vand.u32 %v41, 4294901760
    %4981 = vmatpush1.msra.mxu0 %v4980
    %4982 = vmatprep.subr.mxu0 0.0
    %v4983 = vand.u32 %v42, 4294901760
    %4984 = vmatpush1.msra.mxu0 %v4983
    %4985 = vmatprep.subr.mxu0 0.0
    %v4986 = vand.u32 %v43, 4294901760
    %4987 = vmatpush1.msra.mxu0 %v4986
    %4988 = vmatprep.subr.mxu0 0.0
    %v4989 = vand.u32 %v44, 4294901760
    %4990 = vmatpush1.msra.mxu0 %v4989
    %4991 = vmatprep.subr.mxu0 0.0
    %v4992 = vand.u32 %v45, 4294901760
    %4993 = vmatpush1.msra.mxu0 %v4992
    %4994 = vmatprep.subr.mxu0 0.0
    %v4995 = vand.u32 %v46, 4294901760
    %4996 = vmatpush1.msra.mxu0 %v4995
    %4997 = vmatprep.subr.mxu0 0.0
    %4998 = vmatpush1.msra.mxu0 0.0
    %4999 = vmatprep.subr.mxu0 0.0
    %5000 = vmatpush1.msra.mxu0 0.0
    %5001 = vmatprep.subr.mxu0 0.0
    %5002 = vmatpush1.msra.mxu0 0.0
    %5003 = vmatprep.subr.mxu0 0.0
    %5004 = vmatpush1.msra.mxu0 0.0
    %5005 = vmatprep.subr.mxu0 0.0
    %5006 = vmatpush1.msra.mxu0 0.0
    %5007 = vmatprep.subr.mxu0 0.0
    %5008 = vmatpush1.msra.mxu0 0.0
    %5009 = vmatprep.subr.mxu0 0.0
    %5010 = vmatpush1.msra.mxu0 0.0
    %5011 = vmatprep.subr.mxu0 0.0
    %5012 = vmatpush1.msra.mxu0 0.0
    %5013 = vmatprep.subr.mxu0 0.0
    %5014 = vmatpush1.msra.mxu0 0.0
    %5015 = vmatprep.subr.mxu0 0.0
    %5016 = vmatpush1.msra.mxu0 0.0
    %5017 = vmatprep.subr.mxu0 0.0
    %5018 = vmatpush1.msra.mxu0 0.0
    %5019 = vmatprep.subr.mxu0 0.0
    %5020 = vmatpush1.msra.mxu0 0.0
    %5021 = vmatprep.subr.mxu0 0.0
    %5022 = vmatpush1.msra.mxu0 0.0
    %5023 = vmatprep.subr.mxu0 0.0
    %5024 = vmatpush1.msra.mxu0 0.0
    %5025 = vmatprep.subr.mxu0 0.0
    %5026 = vmatpush1.msra.mxu0 0.0
    %5027 = vmatprep.subr.mxu0 0.0
    %5028 = vmatpush1.msra.mxu0 0.0
    %5029 = vmatprep.mubr.f32.mxu0 0.0
    %v5030 = vand.u32 %v4947, 4294901760
    %v5031 = vsub.f32 %v4947, %v5030
    %v5032 = vand.u32 %v5031, 4294901760
    %v5033 = vsub.f32 %v5031, %v5032
    %v5034 = vand.u32 %v5033, 4294901760
    %5035 = vmatmul.mubr.f32.gmra.mrb[0].mxu0 %v5034
    %v5036 = vpop.f32.mrb[0].mxu0
    %v5037 = vadd.f32 %v47, %v5036
    %v5038 = vpop.f32.mrb[0].mxu0
    %5039 = vmatprep.mubr.f32.mxu0 0.0
    %v5040 = vand.u32 %v4948, 4294901760
    %v5041 = vsub.f32 %v4948, %v5040
    %v5042 = vand.u32 %v5041, 4294901760
    %v5043 = vsub.f32 %v5041, %v5042
    %v5044 = vand.u32 %v5043, 4294901760
    %5045 = vmatmul.mubr.f32.gmra.mrb[0].mxu0 %v5044
    %v5046 = vpop.f32.mrb[0].mxu0
    %v5047 = vadd.f32 %v48, %v5046
    %v5048 = vpop.f32.mrb[0].mxu0
    %5049 = vdwg.mxu0
    %5050 = vmatprep.subr.mxu0 0.0
    %v5051 = vand.u32 %v31, 4294901760
    %v5052 = vsub.f32 %v31, %v5051
    %v5053 = vand.u32 %v5052, 4294901760
    %v5054 = vsub.f32 %v5052, %v5053
    %v5055 = vand.u32 %v5054, 4294901760
    %5056 = vmatpush1.msra.mxu0 %v5055
    %5057 = vmatprep.subr.mxu0 0.0
    %v5058 = vand.u32 %v32, 4294901760
    %v5059 = vsub.f32 %v32, %v5058
    %v5060 = vand.u32 %v5059, 4294901760
    %v5061 = vsub.f32 %v5059, %v5060
    %v5062 = vand.u32 %v5061, 4294901760
    %5063 = vmatpush1.msra.mxu0 %v5062
    %5064 = vmatprep.subr.mxu0 0.0
    %v5065 = vand.u32 %v33, 4294901760
    %v5066 = vsub.f32 %v33, %v5065
    %v5067 = vand.u32 %v5066, 4294901760
    %v5068 = vsub.f32 %v5066, %v5067
    %v5069 = vand.u32 %v5068, 4294901760
    %5070 = vmatpush1.msra.mxu0 %v5069
    %5071 = vmatprep.subr.mxu0 0.0
    %v5072 = vand.u32 %v34, 4294901760
    %v5073 = vsub.f32 %v34, %v5072
    %v5074 = vand.u32 %v5073, 4294901760
    %v5075 = vsub.f32 %v5073, %v5074
    %v5076 = vand.u32 %v5075, 4294901760
    %5077 = vmatpush1.msra.mxu0 %v5076
    %5078 = vmatprep.subr.mxu0 0.0
    %v5079 = vand.u32 %v35, 4294901760
    %v5080 = vsub.f32 %v35, %v5079
    %v5081 = vand.u32 %v5080, 4294901760
    %v5082 = vsub.f32 %v5080, %v5081
    %v5083 = vand.u32 %v5082, 4294901760
    %5084 = vmatpush1.msra.mxu0 %v5083
    %5085 = vmatprep.subr.mxu0 0.0
    %v5086 = vand.u32 %v36, 4294901760
    %v5087 = vsub.f32 %v36, %v5086
    %v5088 = vand.u32 %v5087, 4294901760
    %v5089 = vsub.f32 %v5087, %v5088
    %v5090 = vand.u32 %v5089, 4294901760
    %5091 = vmatpush1.msra.mxu0 %v5090
    %5092 = vmatprep.subr.mxu0 0.0
    %v5093 = vand.u32 %v37, 4294901760
    %v5094 = vsub.f32 %v37, %v5093
    %v5095 = vand.u32 %v5094, 4294901760
    %v5096 = vsub.f32 %v5094, %v5095
    %v5097 = vand.u32 %v5096, 4294901760
    %5098 = vmatpush1.msra.mxu0 %v5097
    %5099 = vmatprep.subr.mxu0 0.0
    %v5100 = vand.u32 %v38, 4294901760
    %v5101 = vsub.f32 %v38, %v5100
    %v5102 = vand.u32 %v5101, 4294901760
    %v5103 = vsub.f32 %v5101, %v5102
    %v5104 = vand.u32 %v5103, 4294901760
    %5105 = vmatpush1.msra.mxu0 %v5104
    %5106 = vmatprep.subr.mxu0 0.0
    %v5107 = vand.u32 %v39, 4294901760
    %v5108 = vsub.f32 %v39, %v5107
    %v5109 = vand.u32 %v5108, 4294901760
    %v5110 = vsub.f32 %v5108, %v5109
    %v5111 = vand.u32 %v5110, 4294901760
    %5112 = vmatpush1.msra.mxu0 %v5111
    %5113 = vmatprep.subr.mxu0 0.0
    %v5114 = vand.u32 %v40, 4294901760
    %v5115 = vsub.f32 %v40, %v5114
    %v5116 = vand.u32 %v5115, 4294901760
    %v5117 = vsub.f32 %v5115, %v5116
    %v5118 = vand.u32 %v5117, 4294901760
    %5119 = vmatpush1.msra.mxu0 %v5118
    %5120 = vmatprep.subr.mxu0 0.0
    %v5121 = vand.u32 %v41, 4294901760
    %v5122 = vsub.f32 %v41, %v5121
    %v5123 = vand.u32 %v5122, 4294901760
    %v5124 = vsub.f32 %v5122, %v5123
    %v5125 = vand.u32 %v5124, 4294901760
    %5126 = vmatpush1.msra.mxu0 %v5125
    %5127 = vmatprep.subr.mxu0 0.0
    %v5128 = vand.u32 %v42, 4294901760
    %v5129 = vsub.f32 %v42, %v5128
    %v5130 = vand.u32 %v5129, 4294901760
    %v5131 = vsub.f32 %v5129, %v5130
    %v5132 = vand.u32 %v5131, 4294901760
    %5133 = vmatpush1.msra.mxu0 %v5132
    %5134 = vmatprep.subr.mxu0 0.0
    %v5135 = vand.u32 %v43, 4294901760
    %v5136 = vsub.f32 %v43, %v5135
    %v5137 = vand.u32 %v5136, 4294901760
    %v5138 = vsub.f32 %v5136, %v5137
    %v5139 = vand.u32 %v5138, 4294901760
    %5140 = vmatpush1.msra.mxu0 %v5139
    %5141 = vmatprep.subr.mxu0 0.0
    %v5142 = vand.u32 %v44, 4294901760
    %v5143 = vsub.f32 %v44, %v5142
    %v5144 = vand.u32 %v5143, 4294901760
    %v5145 = vsub.f32 %v5143, %v5144
    %v5146 = vand.u32 %v5145, 4294901760
    %5147 = vmatpush1.msra.mxu0 %v5146
    %5148 = vmatprep.subr.mxu0 0.0
    %v5149 = vand.u32 %v45, 4294901760
    %v5150 = vsub.f32 %v45, %v5149
    %v5151 = vand.u32 %v5150, 4294901760
    %v5152 = vsub.f32 %v5150, %v5151
    %v5153 = vand.u32 %v5152, 4294901760
    %5154 = vmatpush1.msra.mxu0 %v5153
    %5155 = vmatprep.subr.mxu0 0.0
    %v5156 = vand.u32 %v46, 4294901760
    %v5157 = vsub.f32 %v46, %v5156
    %v5158 = vand.u32 %v5157, 4294901760
    %v5159 = vsub.f32 %v5157, %v5158
    %v5160 = vand.u32 %v5159, 4294901760
    %5161 = vmatpush1.msra.mxu0 %v5160
    %5162 = vmatprep.subr.mxu0 0.0
    %5163 = vmatpush1.msra.mxu0 0.0
    %5164 = vmatprep.subr.mxu0 0.0
    %5165 = vmatpush1.msra.mxu0 0.0
    %5166 = vmatprep.subr.mxu0 0.0
    %5167 = vmatpush1.msra.mxu0 0.0
    %5168 = vmatprep.subr.mxu0 0.0
    %5169 = vmatpush1.msra.mxu0 0.0
    %5170 = vmatprep.subr.mxu0 0.0
    %5171 = vmatpush1.msra.mxu0 0.0
    %5172 = vmatprep.subr.mxu0 0.0
    %5173 = vmatpush1.msra.mxu0 0.0
    %5174 = vmatprep.subr.mxu0 0.0
    %5175 = vmatpush1.msra.mxu0 0.0
    %5176 = vmatprep.subr.mxu0 0.0
    %5177 = vmatpush1.msra.mxu0 0.0
    %5178 = vmatprep.subr.mxu0 0.0
    %5179 = vmatpush1.msra.mxu0 0.0
    %5180 = vmatprep.subr.mxu0 0.0
    %5181 = vmatpush1.msra.mxu0 0.0
    %5182 = vmatprep.subr.mxu0 0.0
    %5183 = vmatpush1.msra.mxu0 0.0
    %5184 = vmatprep.subr.mxu0 0.0
    %5185 = vmatpush1.msra.mxu0 0.0
    %5186 = vmatprep.subr.mxu0 0.0
    %5187 = vmatpush1.msra.mxu0 0.0
    %5188 = vmatprep.subr.mxu0 0.0
    %5189 = vmatpush1.msra.mxu0 0.0
    %5190 = vmatprep.subr.mxu0 0.0
    %5191 = vmatpush1.msra.mxu0 0.0
    %5192 = vmatprep.subr.mxu0 0.0
    %5193 = vmatpush1.msra.mxu0 0.0
    %5194 = vmatprep.mubr.f32.mxu0 0.0
    %v5195 = vand.u32 %v4947, 4294901760
    %5196 = vmatmul.mubr.f32.gmra.mrb[0].mxu0 %v5195
    %v5197 = vpop.f32.mrb[0].mxu0
    %v5198 = vadd.f32 %v5037, %v5197
    %v5199 = vpop.f32.mrb[0].mxu0
    %5200 = vmatprep.mubr.f32.mxu0 0.0
    %v5201 = vand.u32 %v4948, 4294901760
    %5202 = vmatmul.mubr.f32.gmra.mrb[0].mxu0 %v5201
    %v5203 = vpop.f32.mrb[0].mxu0
    %v5204 = vadd.f32 %v5047, %v5203
    %v5205 = vpop.f32.mrb[0].mxu0
    %5206 = vdwg.mxu0
    %5207 = vmatprep.subr.mxu0 0.0
    %v5208 = vand.u32 %v31, 4294901760
    %v5209 = vsub.f32 %v31, %v5208
    %5210 = vmatpush1.msra.mxu0 %v5209
    %5211 = vmatprep.subr.mxu0 0.0
    %v5212 = vand.u32 %v32, 4294901760
    %v5213 = vsub.f32 %v32, %v5212
    %5214 = vmatpush1.msra.mxu0 %v5213
    %5215 = vmatprep.subr.mxu0 0.0
    %v5216 = vand.u32 %v33, 4294901760
    %v5217 = vsub.f32 %v33, %v5216
    %5218 = vmatpush1.msra.mxu0 %v5217
    %5219 = vmatprep.subr.mxu0 0.0
    %v5220 = vand.u32 %v34, 4294901760
    %v5221 = vsub.f32 %v34, %v5220
    %5222 = vmatpush1.msra.mxu0 %v5221
    %5223 = vmatprep.subr.mxu0 0.0
    %v5224 = vand.u32 %v35, 4294901760
    %v5225 = vsub.f32 %v35, %v5224
    %5226 = vmatpush1.msra.mxu0 %v5225
    %5227 = vmatprep.subr.mxu0 0.0
    %v5228 = vand.u32 %v36, 4294901760
    %v5229 = vsub.f32 %v36, %v5228
    %5230 = vmatpush1.msra.mxu0 %v5229
    %5231 = vmatprep.subr.mxu0 0.0
    %v5232 = vand.u32 %v37, 4294901760
    %v5233 = vsub.f32 %v37, %v5232
    %5234 = vmatpush1.msra.mxu0 %v5233
    %5235 = vmatprep.subr.mxu0 0.0
    %v5236 = vand.u32 %v38, 4294901760
    %v5237 = vsub.f32 %v38, %v5236
    %5238 = vmatpush1.msra.mxu0 %v5237
    %5239 = vmatprep.subr.mxu0 0.0
    %v5240 = vand.u32 %v39, 4294901760
    %v5241 = vsub.f32 %v39, %v5240
    %5242 = vmatpush1.msra.mxu0 %v5241
    %5243 = vmatprep.subr.mxu0 0.0
    %v5244 = vand.u32 %v40, 4294901760
    %v5245 = vsub.f32 %v40, %v5244
    %5246 = vmatpush1.msra.mxu0 %v5245
    %5247 = vmatprep.subr.mxu0 0.0
    %v5248 = vand.u32 %v41, 4294901760
    %v5249 = vsub.f32 %v41, %v5248
    %5250 = vmatpush1.msra.mxu0 %v5249
    %5251 = vmatprep.subr.mxu0 0.0
    %v5252 = vand.u32 %v42, 4294901760
    %v5253 = vsub.f32 %v42, %v5252
    %5254 = vmatpush1.msra.mxu0 %v5253
    %5255 = vmatprep.subr.mxu0 0.0
    %v5256 = vand.u32 %v43, 4294901760
    %v5257 = vsub.f32 %v43, %v5256
    %5258 = vmatpush1.msra.mxu0 %v5257
    %5259 = vmatprep.subr.mxu0 0.0
    %v5260 = vand.u32 %v44, 4294901760
    %v5261 = vsub.f32 %v44, %v5260
    %5262 = vmatpush1.msra.mxu0 %v5261
    %5263 = vmatprep.subr.mxu0 0.0
    %v5264 = vand.u32 %v45, 4294901760
    %v5265 = vsub.f32 %v45, %v5264
    %5266 = vmatpush1.msra.mxu0 %v5265
    %5267 = vmatprep.subr.mxu0 0.0
    %v5268 = vand.u32 %v46, 4294901760
    %v5269 = vsub.f32 %v46, %v5268
    %5270 = vmatpush1.msra.mxu0 %v5269
    %5271 = vmatprep.subr.mxu0 0.0
    %5272 = vmatpush1.msra.mxu0 0.0
    %5273 = vmatprep.subr.mxu0 0.0
    %5274 = vmatpush1.msra.mxu0 0.0
    %5275 = vmatprep.subr.mxu0 0.0
    %5276 = vmatpush1.msra.mxu0 0.0
    %5277 = vmatprep.subr.mxu0 0.0
    %5278 = vmatpush1.msra.mxu0 0.0
    %5279 = vmatprep.subr.mxu0 0.0
    %5280 = vmatpush1.msra.mxu0 0.0
    %5281 = vmatprep.subr.mxu0 0.0
    %5282 = vmatpush1.msra.mxu0 0.0
    %5283 = vmatprep.subr.mxu0 0.0
    %5284 = vmatpush1.msra.mxu0 0.0
    %5285 = vmatprep.subr.mxu0 0.0
    %5286 = vmatpush1.msra.mxu0 0.0
    %5287 = vmatprep.subr.mxu0 0.0
    %5288 = vmatpush1.msra.mxu0 0.0
    %5289 = vmatprep.subr.mxu0 0.0
    %5290 = vmatpush1.msra.mxu0 0.0
    %5291 = vmatprep.subr.mxu0 0.0
    %5292 = vmatpush1.msra.mxu0 0.0
    %5293 = vmatprep.subr.mxu0 0.0
    %5294 = vmatpush1.msra.mxu0 0.0
    %5295 = vmatprep.subr.mxu0 0.0
    %5296 = vmatpush1.msra.mxu0 0.0
    %5297 = vmatprep.subr.mxu0 0.0
    %5298 = vmatpush1.msra.mxu0 0.0
    %5299 = vmatprep.subr.mxu0 0.0
    %5300 = vmatpush1.msra.mxu0 0.0
    %5301 = vmatprep.subr.mxu0 0.0
    %5302 = vmatpush1.msra.mxu0 0.0
    %5303 = vmatprep.mubr.f32.mxu0 0.0
    %v5304 = vand.u32 %v4947, 4294901760
    %v5305 = vsub.f32 %v4947, %v5304
    %5306 = vmatmul.mubr.f32.gmra.mrb[0].mxu0 %v5305
    %v5307 = vpop.f32.mrb[0].mxu0
    %v5308 = vadd.f32 %v5198, %v5307
    %v5309 = vpop.f32.mrb[0].mxu0
    %5310 = vmatprep.mubr.f32.mxu0 0.0
    %v5311 = vand.u32 %v4948, 4294901760
    %v5312 = vsub.f32 %v4948, %v5311
    %5313 = vmatmul.mubr.f32.gmra.mrb[0].mxu0 %v5312
    %v5314 = vpop.f32.mrb[0].mxu0
    %v5315 = vadd.f32 %v5204, %v5314
    %v5316 = vpop.f32.mrb[0].mxu0
    %5317 = vdwg.mxu0
    %5318 = vmatprep.subr.mxu0 0.0
    %v5319 = vand.u32 %v31, 4294901760
    %5320 = vmatpush1.msra.mxu0 %v5319
    %5321 = vmatprep.subr.mxu0 0.0
    %v5322 = vand.u32 %v32, 4294901760
    %5323 = vmatpush1.msra.mxu0 %v5322
    %5324 = vmatprep.subr.mxu0 0.0
    %v5325 = vand.u32 %v33, 4294901760
    %5326 = vmatpush1.msra.mxu0 %v5325
    %5327 = vmatprep.subr.mxu0 0.0
    %v5328 = vand.u32 %v34, 4294901760
    %5329 = vmatpush1.msra.mxu0 %v5328
    %5330 = vmatprep.subr.mxu0 0.0
    %v5331 = vand.u32 %v35, 4294901760
    %5332 = vmatpush1.msra.mxu0 %v5331
    %5333 = vmatprep.subr.mxu0 0.0
    %v5334 = vand.u32 %v36, 4294901760
    %5335 = vmatpush1.msra.mxu0 %v5334
    %5336 = vmatprep.subr.mxu0 0.0
    %v5337 = vand.u32 %v37, 4294901760
    %5338 = vmatpush1.msra.mxu0 %v5337
    %5339 = vmatprep.subr.mxu0 0.0
    %v5340 = vand.u32 %v38, 4294901760
    %5341 = vmatpush1.msra.mxu0 %v5340
    %5342 = vmatprep.subr.mxu0 0.0
    %v5343 = vand.u32 %v39, 4294901760
    %5344 = vmatpush1.msra.mxu0 %v5343
    %5345 = vmatprep.subr.mxu0 0.0
    %v5346 = vand.u32 %v40, 4294901760
    %5347 = vmatpush1.msra.mxu0 %v5346
    %5348 = vmatprep.subr.mxu0 0.0
    %v5349 = vand.u32 %v41, 4294901760
    %5350 = vmatpush1.msra.mxu0 %v5349
    %5351 = vmatprep.subr.mxu0 0.0
    %v5352 = vand.u32 %v42, 4294901760
    %5353 = vmatpush1.msra.mxu0 %v5352
    %5354 = vmatprep.subr.mxu0 0.0
    %v5355 = vand.u32 %v43, 4294901760
    %5356 = vmatpush1.msra.mxu0 %v5355
    %5357 = vmatprep.subr.mxu0 0.0
    %v5358 = vand.u32 %v44, 4294901760
    %5359 = vmatpush1.msra.mxu0 %v5358
    %5360 = vmatprep.subr.mxu0 0.0
    %v5361 = vand.u32 %v45, 4294901760
    %5362 = vmatpush1.msra.mxu0 %v5361
    %5363 = vmatprep.subr.mxu0 0.0
    %v5364 = vand.u32 %v46, 4294901760
    %5365 = vmatpush1.msra.mxu0 %v5364
    %5366 = vmatprep.subr.mxu0 0.0
    %5367 = vmatpush1.msra.mxu0 0.0
    %5368 = vmatprep.subr.mxu0 0.0
    %5369 = vmatpush1.msra.mxu0 0.0
    %5370 = vmatprep.subr.mxu0 0.0
    %5371 = vmatpush1.msra.mxu0 0.0
    %5372 = vmatprep.subr.mxu0 0.0
    %5373 = vmatpush1.msra.mxu0 0.0
    %5374 = vmatprep.subr.mxu0 0.0
    %5375 = vmatpush1.msra.mxu0 0.0
    %5376 = vmatprep.subr.mxu0 0.0
    %5377 = vmatpush1.msra.mxu0 0.0
    %5378 = vmatprep.subr.mxu0 0.0
    %5379 = vmatpush1.msra.mxu0 0.0
    %5380 = vmatprep.subr.mxu0 0.0
    %5381 = vmatpush1.msra.mxu0 0.0
    %5382 = vmatprep.subr.mxu0 0.0
    %5383 = vmatpush1.msra.mxu0 0.0
    %5384 = vmatprep.subr.mxu0 0.0
    %5385 = vmatpush1.msra.mxu0 0.0
    %5386 = vmatprep.subr.mxu0 0.0
    %5387 = vmatpush1.msra.mxu0 0.0
    %5388 = vmatprep.subr.mxu0 0.0
    %5389 = vmatpush1.msra.mxu0 0.0
    %5390 = vmatprep.subr.mxu0 0.0
    %5391 = vmatpush1.msra.mxu0 0.0
    %5392 = vmatprep.subr.mxu0 0.0
    %5393 = vmatpush1.msra.mxu0 0.0
    %5394 = vmatprep.subr.mxu0 0.0
    %5395 = vmatpush1.msra.mxu0 0.0
    %5396 = vmatprep.subr.mxu0 0.0
    %5397 = vmatpush1.msra.mxu0 0.0
    %5398 = vmatprep.mubr.f32.mxu0 0.0
    %v5399 = vand.u32 %v4947, 4294901760
    %v5400 = vsub.f32 %v4947, %v5399
    %v5401 = vand.u32 %v5400, 4294901760
    %5402 = vmatmul.mubr.f32.gmra.mrb[0].mxu0 %v5401
    %v5403 = vpop.f32.mrb[0].mxu0
    %v5404 = vadd.f32 %v5308, %v5403
    %v5405 = vpop.f32.mrb[0].mxu0
    %5406 = vmatprep.mubr.f32.mxu0 0.0
    %v5407 = vand.u32 %v4948, 4294901760
    %v5408 = vsub.f32 %v4948, %v5407
    %v5409 = vand.u32 %v5408, 4294901760
    %5410 = vmatmul.mubr.f32.gmra.mrb[0].mxu0 %v5409
    %v5411 = vpop.f32.mrb[0].mxu0
    %v5412 = vadd.f32 %v5315, %v5411
    %v5413 = vpop.f32.mrb[0].mxu0
    %5414 = vdwg.mxu0
    %5415 = vmatprep.subr.mxu0 0.0
    %v5416 = vand.u32 %v31, 4294901760
    %v5417 = vsub.f32 %v31, %v5416
    %v5418 = vand.u32 %v5417, 4294901760
    %5419 = vmatpush1.msra.mxu0 %v5418
    %5420 = vmatprep.subr.mxu0 0.0
    %v5421 = vand.u32 %v32, 4294901760
    %v5422 = vsub.f32 %v32, %v5421
    %v5423 = vand.u32 %v5422, 4294901760
    %5424 = vmatpush1.msra.mxu0 %v5423
    %5425 = vmatprep.subr.mxu0 0.0
    %v5426 = vand.u32 %v33, 4294901760
    %v5427 = vsub.f32 %v33, %v5426
    %v5428 = vand.u32 %v5427, 4294901760
    %5429 = vmatpush1.msra.mxu0 %v5428
    %5430 = vmatprep.subr.mxu0 0.0
    %v5431 = vand.u32 %v34, 4294901760
    %v5432 = vsub.f32 %v34, %v5431
    %v5433 = vand.u32 %v5432, 4294901760
    %5434 = vmatpush1.msra.mxu0 %v5433
    %5435 = vmatprep.subr.mxu0 0.0
    %v5436 = vand.u32 %v35, 4294901760
    %v5437 = vsub.f32 %v35, %v5436
    %v5438 = vand.u32 %v5437, 4294901760
    %5439 = vmatpush1.msra.mxu0 %v5438
    %5440 = vmatprep.subr.mxu0 0.0
    %v5441 = vand.u32 %v36, 4294901760
    %v5442 = vsub.f32 %v36, %v5441
    %v5443 = vand.u32 %v5442, 4294901760
    %5444 = vmatpush1.msra.mxu0 %v5443
    %5445 = vmatprep.subr.mxu0 0.0
    %v5446 = vand.u32 %v37, 4294901760
    %v5447 = vsub.f32 %v37, %v5446
    %v5448 = vand.u32 %v5447, 4294901760
    %5449 = vmatpush1.msra.mxu0 %v5448
    %5450 = vmatprep.subr.mxu0 0.0
    %v5451 = vand.u32 %v38, 4294901760
    %v5452 = vsub.f32 %v38, %v5451
    %v5453 = vand.u32 %v5452, 4294901760
    %5454 = vmatpush1.msra.mxu0 %v5453
    %5455 = vmatprep.subr.mxu0 0.0
    %v5456 = vand.u32 %v39, 4294901760
    %v5457 = vsub.f32 %v39, %v5456
    %v5458 = vand.u32 %v5457, 4294901760
    %5459 = vmatpush1.msra.mxu0 %v5458
    %5460 = vmatprep.subr.mxu0 0.0
    %v5461 = vand.u32 %v40, 4294901760
    %v5462 = vsub.f32 %v40, %v5461
    %v5463 = vand.u32 %v5462, 4294901760
    %5464 = vmatpush1.msra.mxu0 %v5463
    %5465 = vmatprep.subr.mxu0 0.0
    %v5466 = vand.u32 %v41, 4294901760
    %v5467 = vsub.f32 %v41, %v5466
    %v5468 = vand.u32 %v5467, 4294901760
    %5469 = vmatpush1.msra.mxu0 %v5468
    %5470 = vmatprep.subr.mxu0 0.0
    %v5471 = vand.u32 %v42, 4294901760
    %v5472 = vsub.f32 %v42, %v5471
    %v5473 = vand.u32 %v5472, 4294901760
    %5474 = vmatpush1.msra.mxu0 %v5473
    %5475 = vmatprep.subr.mxu0 0.0
    %v5476 = vand.u32 %v43, 4294901760
    %v5477 = vsub.f32 %v43, %v5476
    %v5478 = vand.u32 %v5477, 4294901760
    %5479 = vmatpush1.msra.mxu0 %v5478
    %5480 = vmatprep.subr.mxu0 0.0
    %v5481 = vand.u32 %v44, 4294901760
    %v5482 = vsub.f32 %v44, %v5481
    %v5483 = vand.u32 %v5482, 4294901760
    %5484 = vmatpush1.msra.mxu0 %v5483
    %5485 = vmatprep.subr.mxu0 0.0
    %v5486 = vand.u32 %v45, 4294901760
    %v5487 = vsub.f32 %v45, %v5486
    %v5488 = vand.u32 %v5487, 4294901760
    %5489 = vmatpush1.msra.mxu0 %v5488
    %5490 = vmatprep.subr.mxu0 0.0
    %v5491 = vand.u32 %v46, 4294901760
    %v5492 = vsub.f32 %v46, %v5491
    %v5493 = vand.u32 %v5492, 4294901760
    %5494 = vmatpush1.msra.mxu0 %v5493
    %5495 = vmatprep.subr.mxu0 0.0
    %5496 = vmatpush1.msra.mxu0 0.0
    %5497 = vmatprep.subr.mxu0 0.0
    %5498 = vmatpush1.msra.mxu0 0.0
    %5499 = vmatprep.subr.mxu0 0.0
    %5500 = vmatpush1.msra.mxu0 0.0
    %5501 = vmatprep.subr.mxu0 0.0
    %5502 = vmatpush1.msra.mxu0 0.0
    %5503 = vmatprep.subr.mxu0 0.0
    %5504 = vmatpush1.msra.mxu0 0.0
    %5505 = vmatprep.subr.mxu0 0.0
    %5506 = vmatpush1.msra.mxu0 0.0
    %5507 = vmatprep.subr.mxu0 0.0
    %5508 = vmatpush1.msra.mxu0 0.0
    %5509 = vmatprep.subr.mxu0 0.0
    %5510 = vmatpush1.msra.mxu0 0.0
    %5511 = vmatprep.subr.mxu0 0.0
    %5512 = vmatpush1.msra.mxu0 0.0
    %5513 = vmatprep.subr.mxu0 0.0
    %5514 = vmatpush1.msra.mxu0 0.0
    %5515 = vmatprep.subr.mxu0 0.0
    %5516 = vmatpush1.msra.mxu0 0.0
    %5517 = vmatprep.subr.mxu0 0.0
    %5518 = vmatpush1.msra.mxu0 0.0
    %5519 = vmatprep.subr.mxu0 0.0
    %5520 = vmatpush1.msra.mxu0 0.0
    %5521 = vmatprep.subr.mxu0 0.0
    %5522 = vmatpush1.msra.mxu0 0.0
    %5523 = vmatprep.subr.mxu0 0.0
    %5524 = vmatpush1.msra.mxu0 0.0
    %5525 = vmatprep.subr.mxu0 0.0
    %5526 = vmatpush1.msra.mxu0 0.0
    %5527 = vmatprep.mubr.f32.mxu0 0.0
    %v5528 = vand.u32 %v4947, 4294901760
    %5529 = vmatmul.mubr.f32.gmra.mrb[0].mxu0 %v5528
    %v5530 = vpop.f32.mrb[0].mxu0
    %v5531 = vadd.f32 %v5404, %v5530
    %v5532 = vpop.f32.mrb[0].mxu0
    %5533 = vmatprep.mubr.f32.mxu0 0.0
    %v5534 = vand.u32 %v4948, 4294901760
    %5535 = vmatmul.mubr.f32.gmra.mrb[0].mxu0 %v5534
    %v5536 = vpop.f32.mrb[0].mxu0
    %v5537 = vadd.f32 %v5412, %v5536
    %v5538 = vpop.f32.mrb[0].mxu0
    %5539 = vdwg.mxu0
    %5540 = vmatprep.subr.mxu0 0.0
    %v5541 = vand.u32 %v31, 4294901760
    %5542 = vmatpush1.msra.mxu0 %v5541
    %5543 = vmatprep.subr.mxu0 0.0
    %v5544 = vand.u32 %v32, 4294901760
    %5545 = vmatpush1.msra.mxu0 %v5544
    %5546 = vmatprep.subr.mxu0 0.0
    %v5547 = vand.u32 %v33, 4294901760
    %5548 = vmatpush1.msra.mxu0 %v5547
    %5549 = vmatprep.subr.mxu0 0.0
    %v5550 = vand.u32 %v34, 4294901760
    %5551 = vmatpush1.msra.mxu0 %v5550
    %5552 = vmatprep.subr.mxu0 0.0
    %v5553 = vand.u32 %v35, 4294901760
    %5554 = vmatpush1.msra.mxu0 %v5553
    %5555 = vmatprep.subr.mxu0 0.0
    %v5556 = vand.u32 %v36, 4294901760
    %5557 = vmatpush1.msra.mxu0 %v5556
    %5558 = vmatprep.subr.mxu0 0.0
    %v5559 = vand.u32 %v37, 4294901760
    %5560 = vmatpush1.msra.mxu0 %v5559
    %5561 = vmatprep.subr.mxu0 0.0
    %v5562 = vand.u32 %v38, 4294901760
    %5563 = vmatpush1.msra.mxu0 %v5562
    %5564 = vmatprep.subr.mxu0 0.0
    %v5565 = vand.u32 %v39, 4294901760
    %5566 = vmatpush1.msra.mxu0 %v5565
    %5567 = vmatprep.subr.mxu0 0.0
    %v5568 = vand.u32 %v40, 4294901760
    %5569 = vmatpush1.msra.mxu0 %v5568
    %5570 = vmatprep.subr.mxu0 0.0
    %v5571 = vand.u32 %v41, 4294901760
    %5572 = vmatpush1.msra.mxu0 %v5571
    %5573 = vmatprep.subr.mxu0 0.0
    %v5574 = vand.u32 %v42, 4294901760
    %5575 = vmatpush1.msra.mxu0 %v5574
    %5576 = vmatprep.subr.mxu0 0.0
    %v5577 = vand.u32 %v43, 4294901760
    %5578 = vmatpush1.msra.mxu0 %v5577
    %5579 = vmatprep.subr.mxu0 0.0
    %v5580 = vand.u32 %v44, 4294901760
    %5581 = vmatpush1.msra.mxu0 %v5580
    %5582 = vmatprep.subr.mxu0 0.0
    %v5583 = vand.u32 %v45, 4294901760
    %5584 = vmatpush1.msra.mxu0 %v5583
    %5585 = vmatprep.subr.mxu0 0.0
    %v5586 = vand.u32 %v46, 4294901760
    %5587 = vmatpush1.msra.mxu0 %v5586
    %5588 = vmatprep.subr.mxu0 0.0
    %5589 = vmatpush1.msra.mxu0 0.0
    %5590 = vmatprep.subr.mxu0 0.0
    %5591 = vmatpush1.msra.mxu0 0.0
    %5592 = vmatprep.subr.mxu0 0.0
    %5593 = vmatpush1.msra.mxu0 0.0
    %5594 = vmatprep.subr.mxu0 0.0
    %5595 = vmatpush1.msra.mxu0 0.0
    %5596 = vmatprep.subr.mxu0 0.0
    %5597 = vmatpush1.msra.mxu0 0.0
    %5598 = vmatprep.subr.mxu0 0.0
    %5599 = vmatpush1.msra.mxu0 0.0
    %5600 = vmatprep.subr.mxu0 0.0
    %5601 = vmatpush1.msra.mxu0 0.0
    %5602 = vmatprep.subr.mxu0 0.0
    %5603 = vmatpush1.msra.mxu0 0.0
    %5604 = vmatprep.subr.mxu0 0.0
    %5605 = vmatpush1.msra.mxu0 0.0
    %5606 = vmatprep.subr.mxu0 0.0
    %5607 = vmatpush1.msra.mxu0 0.0
    %5608 = vmatprep.subr.mxu0 0.0
    %5609 = vmatpush1.msra.mxu0 0.0
    %5610 = vmatprep.subr.mxu0 0.0
    %5611 = vmatpush1.msra.mxu0 0.0
    %5612 = vmatprep.subr.mxu0 0.0
    %5613 = vmatpush1.msra.mxu0 0.0
    %5614 = vmatprep.subr.mxu0 0.0
    %5615 = vmatpush1.msra.mxu0 0.0
    %5616 = vmatprep.subr.mxu0 0.0
    %5617 = vmatpush1.msra.mxu0 0.0
    %5618 = vmatprep.subr.mxu0 0.0
    %5619 = vmatpush1.msra.mxu0 0.0
    %5620 = vmatprep.mubr.f32.mxu0 0.0
    %v5621 = vand.u32 %v4947, 4294901760
    %5622 = vmatmul.mubr.f32.gmra.mrb[0].mxu0 %v5621
    %v5623 = vpop.f32.mrb[0].mxu0
    %v5624 = vadd.f32 %v5531, %v5623
    %v5625 = vpop.f32.mrb[0].mxu0
    %5626 = vmatprep.mubr.f32.mxu0 0.0
    %v5627 = vand.u32 %v4948, 4294901760
    %5628 = vmatmul.mubr.f32.gmra.mrb[0].mxu0 %v5627
    %v5629 = vpop.f32.mrb[0].mxu0
    %v5630 = vadd.f32 %v5537, %v5629
    %v5631 = vpop.f32.mrb[0].mxu0
    %5632 = vdwg.mxu0
    %5633 = vst [vmem:[#allocation5 + $0x38] sm:$0xff] %v5624
    %5634 = vst [vmem:[#allocation5 + $0x78] sm:$0xff] %v5630
    // Predicated region
    $region18: #{tpu_custom_call.1} parent=1 // pred_check
      _
    $region19: #{tpu_custom_call.1} parent=1 // pred_check_branch
      %5636 = sbr.rel (0) target = $region21
    $region20: #{tpu_custom_call.1} parent=1 // pred_region
      %s5638 = ssub.s32 2048, 2048
      %5639 = vsyncadd [#allocation4], %s5638
      %s5640 = sshll.u32 [#allocation5], 4
      %s5641 = int_to_ptr.vmem [resolvable:$true] %s5640
      %5646 = dma.vmem_to_hbm [thread:$0]  %s5641, 2048, %s3, [#allocation4], 1024, 1024, 64
    $region21: #{tpu_custom_call.1} parent=1 // pred_fallthru
      _
    // Predicated region
    $region22: #{tpu_custom_call.1} parent=1 // pred_check
      _
    $region23: #{tpu_custom_call.1} parent=1 // pred_check_branch
      %5648 = sbr.rel (0) target = $region25
    $region24: #{tpu_custom_call.1} parent=1 // pred_region
      %5649 = dma.done [#allocation4], 2048
    $region25: #{tpu_custom_call.1} parent=1 // pred_fallthru
      _
    %5650 = vsyncpa [#allocation3], 1
    %5651 = vsyncpa [#allocation4], 1

</llo_original>
